<compile_context>
chip_gen: v7x
topology: tpu7x:2x2x1
jax: 0.10.0
libtpu: 0.0.40
codegen_flags: <defaults>
</compile_context>

<pallas_src>
import functools
import math

import jax
import jax.numpy as jnp
from jax.experimental import pallas as pl
from jax.experimental.pallas import tpu as pltpu


def _layernorm(x, w, b, eps=1e-5):
    mu = jnp.mean(x, axis=-1, keepdims=True)
    var = jnp.mean((x - mu) ** 2, axis=-1, keepdims=True)
    return (x - mu) * jax.lax.rsqrt(var + eps) * w + b


def fused_vptd_kernel(x0_ref, ctx_ref,
                      ln1w_ref, ln1b_ref,
                      wqkv_ref, bqkv_ref, wo_ref, bo_ref,
                      ln2w_ref, ln2b_ref,
                      wfc_ref, bfc_ref, wproj_ref, bproj_ref,
                      out_x_ref, out_attn_ref,
                      x_res, h2_buf,
                      *, n_heads, n_tokens):
    layer = pl.program_id(1)
    chunk = pl.program_id(2)
    n_layers = pl.num_programs(1)
    n_chunks = pl.num_programs(2)

    Bt, S, D = x_res.shape
    H = n_heads
    hd = D // H
    n_ctx = S - n_tokens
    M = Bt * S

    # ---------------- first layer: load the visual tokens into the residual ----
    @pl.when(jnp.logical_and(chunk == 0, layer == 0))
    def _init_tokens():
        x_res[:, :n_tokens, :] = x0_ref[...].astype(jnp.float32)

    # ---------------- attention + prompt splice: once per (batch-block, layer) --
    @pl.when(chunk == 0)
    def _attention():
        # deep-prompt splice: keep first n_tokens rows, overwrite the last n_ctx
        # rows with ctx[layer] (broadcast over the batch tile).
        x_res[:, n_tokens:, :] = jnp.broadcast_to(
            ctx_ref[...].astype(jnp.float32), (Bt, n_ctx, D))

        xf = x_res[...].reshape(M, D)                                # f32 residual

        h = _layernorm(xf, ln1w_ref[0], ln1b_ref[0]).astype(jnp.bfloat16)
        # fused lane-dense QKV projection; 1/sqrt(hd) already folded into W_q/b_q
        qkv = jnp.dot(h, wqkv_ref[0],
                      preferred_element_type=jnp.float32) + bqkv_ref[0]   # (M, 3D)

        def to_heads(t):  # (M, D) -> (Bt*H, S, hd), batch-major over (b, h)
            return (t.reshape(Bt, S, H, hd)
                     .transpose(0, 2, 1, 3)
                     .reshape(Bt * H, S, hd)
                     .astype(jnp.bfloat16))

        q = to_heads(qkv[:, :D])
        k = to_heads(qkv[:, D:2 * D])
        v = to_heads(qkv[:, 2 * D:])

        s = jnp.einsum("bqe,bke->bqk", q, k,
                       preferred_element_type=jnp.float32)           # (Bt*H, S, S)
        s = s - jnp.max(s, axis=-1, keepdims=True)
        p = jnp.exp(s)
        inv = 1.0 / jnp.sum(p, axis=-1, keepdims=True)               # exact, tiny
        p = p * inv

        # head-averaged attention weights (nn.MultiheadAttention need_weights=True)
        p4 = p.reshape(Bt, H, S, S)
        attn = p4[:, 0]
        for hh in range(1, H):                                       # unrolled VPU adds
            attn = attn + p4[:, hh]
        out_attn_ref[0] = (attn * (1.0 / H)).astype(out_attn_ref.dtype)

        o = jnp.einsum("bqk,bke->bqe", p.astype(jnp.bfloat16), v,
                       preferred_element_type=jnp.float32)           # (Bt*H, S, hd)
        # concat heads back to (M, D) and do ONE full-K output projection
        o = (o.reshape(Bt, H, S, hd)
              .transpose(0, 2, 1, 3)
              .reshape(M, D)
              .astype(jnp.bfloat16))
        xf = xf + jnp.dot(o, wo_ref[0],
                          preferred_element_type=jnp.float32) + bo_ref[0]

        x_res[...] = xf.reshape(Bt, S, D)
        h2_buf[...] = _layernorm(xf, ln2w_ref[0], ln2b_ref[0]
                                 ).astype(jnp.bfloat16).reshape(Bt, S, D)

    # ---------------- MLP, tiled over the 4*D hidden dim (one chunk per step) ---
    h2 = h2_buf[...].reshape(M, D)
    m = jnp.dot(h2, wfc_ref[0], preferred_element_type=jnp.float32) + bfc_ref[0]
    m = m * jax.nn.sigmoid(1.702 * m)                                # QuickGELU, f32
    y = jnp.dot(m.astype(jnp.bfloat16), wproj_ref[0],
                preferred_element_type=jnp.float32)                  # (M, D) partial
    x_res[...] = x_res[...] + y.reshape(Bt, S, D)

    @pl.when(chunk == n_chunks - 1)
    def _finish_layer():
        x_res[...] = x_res[...] + bproj_ref[0]                       # bias once/layer

    @pl.when(jnp.logical_and(chunk == n_chunks - 1, layer == n_layers - 1))
    def _writeback():
        out_x_ref[...] = x_res[...].astype(out_x_ref.dtype)


_PARAM_ORDER = ("ln1_w", "ln1_b",
                "w_qkv", "b_qkv", "w_o", "b_o",
                "ln2_w", "ln2_b",
                "w_fc", "b_fc", "w_proj", "b_proj")


def fused_transformer_vptd(xb, ctx, kp, *, n_heads, n_ctx,
                           batch_tile=2, mlp_chunks=1):
    """xb: (B, L0, D) batch-major tokens; ctx: (layers, n_ctx, D); kp: stacked params."""
    B, L0, D = xb.shape
    layers = ctx.shape[0]
    S = L0 + n_ctx
    Bt = batch_tile
    assert B % Bt == 0, (B, Bt)
    F4 = 4 * D
    assert F4 % mlp_chunks == 0, (F4, mlp_chunks)
    Fc = F4 // mlp_chunks

    grid = (B // Bt, layers, mlp_chunks)

    in_specs = [
        pl.BlockSpec((Bt, L0, D), lambda b, l, c: (b, 0, 0)),      # x0 (visual tokens)
        pl.BlockSpec((1, n_ctx, D), lambda b, l, c: (l, 0, 0)),    # ctx[layer]
        pl.BlockSpec((1, 1, D), lambda b, l, c: (l, 0, 0)),        # ln1_w
        pl.BlockSpec((1, 1, D), lambda b, l, c: (l, 0, 0)),        # ln1_b
        pl.BlockSpec((1, D, 3 * D), lambda b, l, c: (l, 0, 0)),    # w_qkv (fused)
        pl.BlockSpec((1, 1, 3 * D), lambda b, l, c: (l, 0, 0)),    # b_qkv
        pl.BlockSpec((1, D, D), lambda b, l, c: (l, 0, 0)),        # w_o
        pl.BlockSpec((1, 1, D), lambda b, l, c: (l, 0, 0)),        # b_o
        pl.BlockSpec((1, 1, D), lambda b, l, c: (l, 0, 0)),        # ln2_w
        pl.BlockSpec((1, 1, D), lambda b, l, c: (l, 0, 0)),        # ln2_b
        pl.BlockSpec((1, D, Fc), lambda b, l, c: (l, 0, c)),       # w_fc chunk
        pl.BlockSpec((1, 1, Fc), lambda b, l, c: (l, 0, c)),       # b_fc chunk
        pl.BlockSpec((1, Fc, D), lambda b, l, c: (l, c, 0)),       # w_proj chunk
        pl.BlockSpec((1, 1, D), lambda b, l, c: (l, 0, 0)),        # b_proj
    ]
    out_specs = (
        pl.BlockSpec((Bt, S, D), lambda b, l, c: (b, 0, 0)),        # carried over l, c
        pl.BlockSpec((1, Bt, S, S), lambda b, l, c: (l, b, 0, 0)),  # per-layer attn
    )
    # TODO(synk): make the attention-weights output optional (need_weights=False)
    # and/or bf16 to cut the dominant HBM writeback at production shapes.
    out_shape = (jax.ShapeDtypeStruct((B, S, D), xb.dtype),
                 jax.ShapeDtypeStruct((layers, B, S, S), jnp.float32))

    fn = pl.pallas_call(
        functools.partial(fused_vptd_kernel, n_heads=n_heads, n_tokens=L0),
        grid=grid,
        in_specs=in_specs,
        out_specs=out_specs,
        out_shape=out_shape,
        scratch_shapes=[pltpu.VMEM((Bt, S, D), jnp.float32),    # f32 residual carry
                        pltpu.VMEM((Bt, S, D), jnp.bfloat16)],  # ln_2 activations
        compiler_params=pltpu.CompilerParams(
            dimension_semantics=("parallel", "arbitrary", "arbitrary")),
    )
    return fn(xb, ctx, *(kp[name] for name in _PARAM_ORDER))


def transformer_vptd_forward(x, ctx, kernel_params, n_ctx, n_heads,
                             batch_tile=2, mlp_chunks=1):
    """Matches Transformer_VPTD.forward.

    x   : (L0, B, D) in PyTorch LND layout
    ctx : (layers, n_ctx, D) deep prompts (VPTDeepPromptLearner.ctx)
    returns (x_out (S, B, D), joint_attn (layers*B, S, S)) with S = L0 + n_ctx.
    """
    L0, B, D = x.shape
    layers = ctx.shape[0]
    S = L0 + n_ctx
    xb = jnp.transpose(x, (1, 0, 2))                    # one transpose in
    out_x, attn = fused_transformer_vptd(xb, ctx, kernel_params,
                                         n_heads=n_heads, n_ctx=n_ctx,
                                         batch_tile=batch_tile,
                                         mlp_chunks=mlp_chunks)
    x_out = jnp.transpose(out_x, (1, 0, 2))             # one transpose out
    joint_attn = attn.reshape(layers * B, S, S)         # layer-major, like torch.cat
    return x_out, joint_attn


# ------------------------- parameter construction -------------------------

def init_params(key, layers, n_ctx, d_model):
    """Deterministic synthetic weights in PyTorch layout (CLIP ResidualAttentionBlock)."""
    kctx, kw = jax.random.split(key)
    ctx = 0.02 * jax.random.normal(kctx, (layers, n_ctx, d_model), jnp.float32)

    def q_bf16(a):  # make matmul weights exactly representable in bf16
        return a.astype(jnp.bfloat16).astype(jnp.float32)

    params = []
    for lk in jax.random.split(kw, layers):
        ks = jax.random.split(lk, 12)
        D = d_model
        params.append(dict(
            ln1_w=1.0 + 0.02 * jax.random.normal(ks[0], (D,), jnp.float32),
            ln1_b=0.02 * jax.random.normal(ks[1], (D,), jnp.float32),
            in_w=q_bf16(0.02 * jax.random.normal(ks[2], (3 * D, D), jnp.float32)),
            in_b=0.02 * jax.random.normal(ks[3], (3 * D,), jnp.float32),
            out_w=q_bf16(0.02 * jax.random.normal(ks[4], (D, D), jnp.float32)),
            out_b=0.02 * jax.random.normal(ks[5], (D,), jnp.float32),
            ln2_w=1.0 + 0.02 * jax.random.normal(ks[6], (D,), jnp.float32),
            ln2_b=0.02 * jax.random.normal(ks[7], (D,), jnp.float32),
            fc_w=q_bf16(0.02 * jax.random.normal(ks[8], (4 * D, D), jnp.float32)),
            fc_b=0.02 * jax.random.normal(ks[9], (4 * D,), jnp.float32),
            proj_w=q_bf16(0.02 * jax.random.normal(ks[10], (D, 4 * D), jnp.float32)),
            proj_b=0.02 * jax.random.normal(ks[11], (D,), jnp.float32),
        ))
    return ctx, params


def prepare_params(torch_params, n_heads):
    """Stack per-layer PyTorch-layout weights into the kernel layout.

    Matmul weights -> bf16, pre-transposed (x @ W.T form) with QKV fused into one
    (D, 3D) matrix and the 1/sqrt(hd) attention scale folded into W_q / b_q
    (done offline, once).  LN params and biases stay f32.
    """
    L = len(torch_params)
    stack = lambda k: jnp.stack([p[k] for p in torch_params])
    in_w, in_b = stack("in_w"), stack("in_b")          # (L, 3D, D), (L, 3D)
    D = in_w.shape[-1]
    hd = D // n_heads
    scale = 1.0 / math.sqrt(hd)

    row_scale = jnp.concatenate([jnp.full((D,), scale, jnp.float32),
                                 jnp.ones((2 * D,), jnp.float32)])
    w_qkv = (in_w * row_scale[:, None]).transpose(0, 2, 1)          # (L, D, 3D)
    b_qkv = in_b * row_scale                                        # (L, 3D)

    return dict(
        ln1_w=stack("ln1_w").reshape(L, 1, D),
        ln1_b=stack("ln1_b").reshape(L, 1, D),
        w_qkv=w_qkv.astype(jnp.bfloat16),
        b_qkv=b_qkv.reshape(L, 1, 3 * D).astype(jnp.float32),
        w_o=stack("out_w").transpose(0, 2, 1).astype(jnp.bfloat16),      # (L, D, D)
        b_o=stack("out_b").reshape(L, 1, D),
        ln2_w=stack("ln2_w").reshape(L, 1, D),
        ln2_b=stack("ln2_b").reshape(L, 1, D),
        w_fc=stack("fc_w").transpose(0, 2, 1).astype(jnp.bfloat16),      # (L, D, 4D)
        b_fc=stack("fc_b").reshape(L, 1, 4 * D),
        w_proj=stack("proj_w").transpose(0, 2, 1).astype(jnp.bfloat16),  # (L, 4D, D)
        b_proj=stack("proj_b").reshape(L, 1, D),
    )


# ------------------------- pure-JAX f32 reference -------------------------

def reference_forward(x, ctx, torch_params, n_ctx, n_heads):
    """Pure-JAX reference mirroring the PyTorch Transformer_VPTD loop (f32)."""
    layers = ctx.shape[0]
    attns = []
    for i in range(layers):
        if i != 0:
            x = x[:-n_ctx]
        L, B, D = x.shape
        ctx_i = jnp.broadcast_to(ctx[i][:, None, :], (n_ctx, B, D)).astype(x.dtype)
        x = jnp.concatenate([x, ctx_i], axis=0)
        S = x.shape[0]
        p = torch_params[i]
        H, hd = n_heads, D // n_heads
        scale = 1.0 / math.sqrt(hd)

        h = _layernorm(x, p["ln1_w"], p["ln1_b"])
        qkv = jnp.einsum("sbd,ed->sbe", h, p["in_w"]) + p["in_b"]
        q, k, v = jnp.split(qkv, 3, axis=-1)
        to_heads = lambda t: t.reshape(S, B, H, hd).transpose(1, 2, 0, 3)   # (B,H,S,hd)
        qh, kh, vh = to_heads(q) * scale, to_heads(k), to_heads(v)
        s = jnp.einsum("bhqe,bhke->bhqk", qh, kh)
        pw = jax.nn.softmax(s, axis=-1)
        attns.append(jnp.mean(pw, axis=1))                                  # (B,S,S)
        o = jnp.einsum("bhqk,bhke->bhqe", pw, vh)
        o = o.transpose(2, 0, 1, 3).reshape(S, B, D)
        x = x + jnp.einsum("sbd,ed->sbe", o, p["out_w"]) + p["out_b"]

        h2 = _layernorm(x, p["ln2_w"], p["ln2_b"])
        m = jnp.einsum("sbd,fd->sbf", h2, p["fc_w"]) + p["fc_b"]
        m = m * jax.nn.sigmoid(1.702 * m)
        x = x + jnp.einsum("sbf,df->sbd", m, p["proj_w"]) + p["proj_b"]
    return x, jnp.concatenate(attns, axis=0)


if __name__ == "__main__":
    # Small shapes consistent with the module: layers=3 blocks, n_ctx=4 deep
    # prompts, ctx_dim=64, 4 heads, batch=4, L0=12 visual tokens -> S = 16.
    # Batch tile 2 (grid axis 0 has 2 steps -> feeds both TCs on megacore parts),
    # MLP hidden dim 4*D=256 tiled into 2 chunks of 128 (exercises the v7x path).
    LAYERS, N_CTX, D_MODEL, N_HEADS = 3, 4, 64, 4
    L0, BATCH = 12, 4
    BATCH_TILE, MLP_CHUNKS = 2, 2

    key = jax.random.PRNGKey(0)
    k_x, k_p = jax.random.split(key)
    x = jax.random.normal(k_x, (L0, BATCH, D_MODEL), jnp.float32)   # PyTorch LND layout
    ctx, torch_params = init_params(k_p, LAYERS, N_CTX, D_MODEL)
    kernel_params = prepare_params(torch_params, N_HEADS)

    x_out, joint_attn = transformer_vptd_forward(
        x, ctx, kernel_params, N_CTX, N_HEADS,
        batch_tile=BATCH_TILE, mlp_chunks=MLP_CHUNKS)
    x_out = jax.block_until_ready(x_out)
    joint_attn = jax.block_until_ready(joint_attn)

    S = L0 + N_CTX
    assert x_out.shape == (S, BATCH, D_MODEL), x_out.shape
    assert joint_attn.shape == (LAYERS * BATCH, S, S), joint_attn.shape
    assert bool(jnp.all(jnp.isfinite(x_out)))
    # exact softmax normalisation for the returned attention weights
    assert bool(jnp.allclose(joint_attn.sum(-1), 1.0, atol=1e-3))

    # parity with the pure-JAX f32 reference (bf16 matmul operands -> loose tol)
    x_ref, attn_ref = reference_forward(x, ctx, torch_params, N_CTX, N_HEADS)
    assert bool(jnp.allclose(x_out, x_ref, atol=5e-2, rtol=5e-2)), \
        float(jnp.max(jnp.abs(x_out - x_ref)))
    assert bool(jnp.allclose(joint_attn, attn_ref, atol=5e-2, rtol=5e-2)), \
        float(jnp.max(jnp.abs(joint_attn - attn_ref)))

    print("KERNEL_OK")
</pallas_src>

<mosaic_0001>
module attributes {stable_mosaic.version = 11 : i64} {
  func.func @fused_vptd_kernel(%arg0: i32, %arg1: i32, %arg2: i32, %arg3: memref<2x12x64xf32, #tpu.memory_space<vmem>>, %arg4: memref<1x4x64xf32, #tpu.memory_space<vmem>>, %arg5: memref<1x1x64xf32, #tpu.memory_space<vmem>>, %arg6: memref<1x1x64xf32, #tpu.memory_space<vmem>>, %arg7: memref<1x64x192xbf16, #tpu.memory_space<vmem>>, %arg8: memref<1x1x192xf32, #tpu.memory_space<vmem>>, %arg9: memref<1x64x64xbf16, #tpu.memory_space<vmem>>, %arg10: memref<1x1x64xf32, #tpu.memory_space<vmem>>, %arg11: memref<1x1x64xf32, #tpu.memory_space<vmem>>, %arg12: memref<1x1x64xf32, #tpu.memory_space<vmem>>, %arg13: memref<1x64x128xbf16, #tpu.memory_space<vmem>>, %arg14: memref<1x1x128xf32, #tpu.memory_space<vmem>>, %arg15: memref<1x128x64xbf16, #tpu.memory_space<vmem>>, %arg16: memref<1x1x64xf32, #tpu.memory_space<vmem>>, %arg17: memref<2x16x64xf32, #tpu.memory_space<vmem>>, %arg18: memref<1x2x16x16xf32, #tpu.memory_space<vmem>>, %arg19: memref<2x16x64xf32, #tpu.memory_space<vmem>>, %arg20: memref<2x16x64xbf16, #tpu.memory_space<vmem>>) attributes {dimension_semantics = [#tpu.dimension_semantics<parallel>, #tpu.dimension_semantics<arbitrary>, #tpu.dimension_semantics<arbitrary>], iteration_bounds = array<i64: 2, 3, 2>, scalar_prefetch = 0 : i64, scratch_operands = 2 : i64, tpu.core_type = #tpu.core_type<tc>, window_params = [{transform_indices = @transform_0, window_bounds = array<i64: 2, 12, 64>}, {transform_indices = @transform_1, window_bounds = array<i64: 1, 4, 64>}, {transform_indices = @transform_2, window_bounds = array<i64: 1, 1, 64>}, {transform_indices = @transform_3, window_bounds = array<i64: 1, 1, 64>}, {transform_indices = @transform_4, window_bounds = array<i64: 1, 64, 192>}, {transform_indices = @transform_5, window_bounds = array<i64: 1, 1, 192>}, {transform_indices = @transform_6, window_bounds = array<i64: 1, 64, 64>}, {transform_indices = @transform_7, window_bounds = array<i64: 1, 1, 64>}, {transform_indices = @transform_8, window_bounds = array<i64: 1, 1, 64>}, {transform_indices = @transform_9, window_bounds = array<i64: 1, 1, 64>}, {transform_indices = @transform_10, window_bounds = array<i64: 1, 64, 128>}, {transform_indices = @transform_11, window_bounds = array<i64: 1, 1, 128>}, {transform_indices = @transform_12, window_bounds = array<i64: 1, 128, 64>}, {transform_indices = @transform_13, window_bounds = array<i64: 1, 1, 64>}, {transform_indices = @transform_14, window_bounds = array<i64: 2, 16, 64>}, {transform_indices = @transform_15, window_bounds = array<i64: 1, 2, 16, 16>}]} {
    %c0_i32 = arith.constant 0 : i32
    %0 = arith.cmpi eq, %arg2, %c0_i32 : i32
    %c0_i32_0 = arith.constant 0 : i32
    %1 = arith.cmpi eq, %arg1, %c0_i32_0 : i32
    %2 = arith.andi %0, %1 : i1
    %3 = arith.extui %2 : i1 to i32
    %c0_i32_1 = arith.constant 0 : i32
    %4 = arith.cmpi ne, %3, %c0_i32_1 : i32
    scf.if %4 {
      %c0_27 = arith.constant 0 : index
      %c0_28 = arith.constant 0 : index
      %c0_29 = arith.constant 0 : index
      %41 = vector.load %arg3[%c0_27, %c0_28, %c0_29] : memref<2x12x64xf32, #tpu.memory_space<vmem>>, vector<2x12x64xf32>
      %c0_30 = arith.constant 0 : index
      %c0_31 = arith.constant 0 : index
      %c0_32 = arith.constant 0 : index
      %42 = vector.load %arg19[%c0_30, %c0_31, %c0_32] : memref<2x16x64xf32, #tpu.memory_space<vmem>>, vector<2x12x64xf32>
      tpu.vector_store %arg19[%c0_30, %c0_31, %c0_32], %41 {strides = array<i32>} : memref<2x16x64xf32, #tpu.memory_space<vmem>>, vector<2x12x64xf32>,
    } else {
    }
    %c0_i32_2 = arith.constant 0 : i32
    %5 = arith.cmpi eq, %arg2, %c0_i32_2 : i32
    %6 = arith.extui %5 : i1 to i32
    %c0_i32_3 = arith.constant 0 : i32
    %7 = arith.cmpi ne, %6, %c0_i32_3 : i32
    scf.if %7 {
      %c0_27 = arith.constant 0 : index
      %c0_28 = arith.constant 0 : index
      %c0_29 = arith.constant 0 : index
      %41 = vector.load %arg4[%c0_27, %c0_28, %c0_29] : memref<1x4x64xf32, #tpu.memory_space<vmem>>, vector<1x4x64xf32>
      %42 = vector.shape_cast %41 : vector<1x4x64xf32> to vector<1x4x64xf32>
      %43 = vector.broadcast %42 : vector<1x4x64xf32> to vector<2x4x64xf32>
      %c0_30 = arith.constant 0 : index
      %c12 = arith.constant 12 : index
      %c0_31 = arith.constant 0 : index
      %44 = vector.load %arg19[%c0_30, %c12, %c0_31] : memref<2x16x64xf32, #tpu.memory_space<vmem>>, vector<2x4x64xf32>
      tpu.vector_store %arg19[%c0_30, %c12, %c0_31], %43 {strides = array<i32>} : memref<2x16x64xf32, #tpu.memory_space<vmem>>, vector<2x4x64xf32>,
      %c0_32 = arith.constant 0 : index
      %c0_33 = arith.constant 0 : index
      %c0_34 = arith.constant 0 : index
      %45 = vector.load %arg19[%c0_32, %c0_33, %c0_34] : memref<2x16x64xf32, #tpu.memory_space<vmem>>, vector<2x16x64xf32>
      %46 = vector.shape_cast %45 : vector<2x16x64xf32> to vector<32x64xf32>
      %c0_35 = arith.constant 0 : index
      %c0_36 = arith.constant 0 : index
      %c0_37 = arith.constant 0 : index
      %47 = vector.load %arg5[%c0_35, %c0_36, %c0_37] : memref<1x1x64xf32, #tpu.memory_space<vmem>>, vector<1x1x64xf32>
      %48 = vector.shape_cast %47 : vector<1x1x64xf32> to vector<1x64xf32>
      %c0_38 = arith.constant 0 : index
      %c0_39 = arith.constant 0 : index
      %c0_40 = arith.constant 0 : index
      %49 = vector.load %arg6[%c0_38, %c0_39, %c0_40] : memref<1x1x64xf32, #tpu.memory_space<vmem>>, vector<1x1x64xf32>
      %50 = vector.shape_cast %49 : vector<1x1x64xf32> to vector<1x64xf32>
      %cst_41 = arith.constant dense<0.000000e+00> : vector<32xf32>
      %51 = vector.multi_reduction <add>, %46, %cst_41 [1] : vector<32x64xf32> to vector<32xf32>
      %52 = vector.shape_cast %51 : vector<32xf32> to vector<32x1xf32>
      %cst_42 = arith.constant 6.400000e+01 : f32
      %53 = vector.broadcast %cst_42 : f32 to vector<32x1xf32>
      %54 = arith.divf %52, %53 : vector<32x1xf32>
      %55 = vector.broadcast %54 : vector<32x1xf32> to vector<32x64xf32>
      %56 = arith.subf %46, %55 : vector<32x64xf32>
      %57 = arith.mulf %56, %56 : vector<32x64xf32>
      %cst_43 = arith.constant dense<0.000000e+00> : vector<32xf32>
      %58 = vector.multi_reduction <add>, %57, %cst_43 [1] : vector<32x64xf32> to vector<32xf32>
      %59 = vector.shape_cast %58 : vector<32xf32> to vector<32x1xf32>
      %cst_44 = arith.constant 6.400000e+01 : f32
      %60 = vector.broadcast %cst_44 : f32 to vector<32x1xf32>
      %61 = arith.divf %59, %60 : vector<32x1xf32>
      %62 = vector.broadcast %54 : vector<32x1xf32> to vector<32x64xf32>
      %63 = arith.subf %46, %62 : vector<32x64xf32>
      %cst_45 = arith.constant 9.99999974E-6 : f32
      %64 = vector.broadcast %cst_45 : f32 to vector<32x1xf32>
      %65 = arith.addf %61, %64 : vector<32x1xf32>
      %66 = math.rsqrt %65 : vector<32x1xf32>
      %67 = vector.broadcast %66 : vector<32x1xf32> to vector<32x64xf32>
      %68 = arith.mulf %63, %67 : vector<32x64xf32>
      %69 = vector.broadcast %48 : vector<1x64xf32> to vector<32x64xf32>
      %70 = arith.mulf %68, %69 : vector<32x64xf32>
      %71 = vector.broadcast %50 : vector<1x64xf32> to vector<32x64xf32>
      %72 = arith.addf %70, %71 : vector<32x64xf32>
      %73 = arith.truncf %72 : vector<32x64xf32> to vector<32x64xbf16>
      %c0_46 = arith.constant 0 : index
      %c0_47 = arith.constant 0 : index
      %c0_48 = arith.constant 0 : index
      %74 = vector.load %arg7[%c0_46, %c0_47, %c0_48] : memref<1x64x192xbf16, #tpu.memory_space<vmem>>, vector<1x64x192xbf16>
      %75 = vector.shape_cast %74 : vector<1x64x192xbf16> to vector<64x192xbf16>
      %cst_49 = arith.constant dense<0.000000e+00> : vector<32x192xf32>
      %76 = tpu.matmul %73, %75, %cst_49 {dimension_numbers = #tpu.dot_dimension_numbers<[1], [0], [0], [1], [0, 0, 1, 1], [], []>} : vector<32x64xbf16>, vector<64x192xbf16>, vector<32x192xf32> -> vector<32x192xf32>
      %c0_50 = arith.constant 0 : index
      %c0_51 = arith.constant 0 : index
      %c0_52 = arith.constant 0 : index
      %77 = vector.load %arg8[%c0_50, %c0_51, %c0_52] : memref<1x1x192xf32, #tpu.memory_space<vmem>>, vector<1x1x192xf32>
      %78 = vector.shape_cast %77 : vector<1x1x192xf32> to vector<1x192xf32>
      %79 = vector.broadcast %78 : vector<1x192xf32> to vector<32x192xf32>
      %80 = arith.addf %76, %79 : vector<32x192xf32>
      %81 = vector.extract_strided_slice %80 {offsets = [0, 0], sizes = [32, 64], strides = [1, 1]} : vector<32x192xf32> to vector<32x64xf32>
      %82 = vector.shape_cast %81 : vector<32x64xf32> to vector<2x16x4x16xf32>
      %83 = tpu.transpose %82, [0, 2, 1, 3] : vector<2x16x4x16xf32> -> vector<2x4x16x16xf32>
      %84 = vector.shape_cast %83 : vector<2x4x16x16xf32> to vector<8x16x16xf32>
      %85 = arith.truncf %84 : vector<8x16x16xf32> to vector<8x16x16xbf16>
      %86 = vector.extract_strided_slice %80 {offsets = [0, 64], sizes = [32, 64], strides = [1, 1]} : vector<32x192xf32> to vector<32x64xf32>
      %87 = vector.shape_cast %86 : vector<32x64xf32> to vector<2x16x4x16xf32>
      %88 = tpu.transpose %87, [0, 2, 1, 3] : vector<2x16x4x16xf32> -> vector<2x4x16x16xf32>
      %89 = vector.shape_cast %88 : vector<2x4x16x16xf32> to vector<8x16x16xf32>
      %90 = arith.truncf %89 : vector<8x16x16xf32> to vector<8x16x16xbf16>
      %91 = vector.extract_strided_slice %80 {offsets = [0, 128], sizes = [32, 64], strides = [1, 1]} : vector<32x192xf32> to vector<32x64xf32>
      %92 = vector.shape_cast %91 : vector<32x64xf32> to vector<2x16x4x16xf32>
      %93 = tpu.transpose %92, [0, 2, 1, 3] : vector<2x16x4x16xf32> -> vector<2x4x16x16xf32>
      %94 = vector.shape_cast %93 : vector<2x4x16x16xf32> to vector<8x16x16xf32>
      %95 = arith.truncf %94 : vector<8x16x16xf32> to vector<8x16x16xbf16>
      "tpu.trace_start"() <{level = 10 : i32, message = "bqe,bke->bqk"}> : () -> ()
      %cst_53 = arith.constant dense<0.000000e+00> : vector<8x16x16xf32>
      %96 = tpu.matmul %85, %90, %cst_53 {dimension_numbers = #tpu.dot_dimension_numbers<[2], [2], [1], [1], [0, 0, 0, 1, 1, 1], [0], [0]>} : vector<8x16x16xbf16>, vector<8x16x16xbf16>, vector<8x16x16xf32> -> vector<8x16x16xf32>
      "tpu.trace_stop"() : () -> ()
      %cst_54 = arith.constant dense<0xFF800000> : vector<8x16xf32>
      %97 = vector.multi_reduction <maximumf>, %96, %cst_54 [2] : vector<8x16x16xf32> to vector<8x16xf32>
      %98 = vector.shape_cast %97 : vector<8x16xf32> to vector<8x16x1xf32>
      %99 = vector.broadcast %98 : vector<8x16x1xf32> to vector<8x16x16xf32>
      %100 = arith.subf %96, %99 : vector<8x16x16xf32>
      %101 = math.exp %100 : vector<8x16x16xf32>
      %cst_55 = arith.constant dense<0.000000e+00> : vector<8x16xf32>
      %102 = vector.multi_reduction <add>, %101, %cst_55 [2] : vector<8x16x16xf32> to vector<8x16xf32>
      %103 = vector.shape_cast %102 : vector<8x16xf32> to vector<8x16x1xf32>
      %cst_56 = arith.constant 1.000000e+00 : f32
      %104 = vector.broadcast %cst_56 : f32 to vector<8x16x1xf32>
      %105 = arith.divf %104, %103 : vector<8x16x1xf32>
      %106 = vector.broadcast %105 : vector<8x16x1xf32> to vector<8x16x16xf32>
      %107 = arith.mulf %101, %106 : vector<8x16x16xf32>
      %108 = vector.shape_cast %107 : vector<8x16x16xf32> to vector<2x4x16x16xf32>
      %109 = vector.extract_strided_slice %108 {offsets = [0, 0, 0, 0], sizes = [2, 1, 16, 16], strides = [1, 1, 1, 1]} : vector<2x4x16x16xf32> to vector<2x1x16x16xf32>
      %110 = vector.shape_cast %109 : vector<2x1x16x16xf32> to vector<2x16x16xf32>
      %111 = vector.extract_strided_slice %108 {offsets = [0, 1, 0, 0], sizes = [2, 1, 16, 16], strides = [1, 1, 1, 1]} : vector<2x4x16x16xf32> to vector<2x1x16x16xf32>
      %112 = vector.shape_cast %111 : vector<2x1x16x16xf32> to vector<2x16x16xf32>
      %113 = arith.addf %110, %112 : vector<2x16x16xf32>
      %114 = vector.extract_strided_slice %108 {offsets = [0, 2, 0, 0], sizes = [2, 1, 16, 16], strides = [1, 1, 1, 1]} : vector<2x4x16x16xf32> to vector<2x1x16x16xf32>
      %115 = vector.shape_cast %114 : vector<2x1x16x16xf32> to vector<2x16x16xf32>
      %116 = arith.addf %113, %115 : vector<2x16x16xf32>
      %117 = vector.extract_strided_slice %108 {offsets = [0, 3, 0, 0], sizes = [2, 1, 16, 16], strides = [1, 1, 1, 1]} : vector<2x4x16x16xf32> to vector<2x1x16x16xf32>
      %118 = vector.shape_cast %117 : vector<2x1x16x16xf32> to vector<2x16x16xf32>
      %119 = arith.addf %116, %118 : vector<2x16x16xf32>
      %cst_57 = arith.constant 2.500000e-01 : f32
      %120 = vector.broadcast %cst_57 : f32 to vector<2x16x16xf32>
      %121 = arith.mulf %119, %120 : vector<2x16x16xf32>
      %c0_58 = arith.constant 0 : index
      %c0_59 = arith.constant 0 : index
      %c0_60 = arith.constant 0 : index
      %c0_61 = arith.constant 0 : index
      %122 = vector.load %arg18[%c0_58, %c0_59, %c0_60, %c0_61] : memref<1x2x16x16xf32, #tpu.memory_space<vmem>>, vector<1x2x16x16xf32>
      %123 = vector.shape_cast %122 : vector<1x2x16x16xf32> to vector<2x16x16xf32>
      %124 = vector.shape_cast %121 : vector<2x16x16xf32> to vector<1x2x16x16xf32>
      tpu.vector_store %arg18[%c0_58, %c0_59, %c0_60, %c0_61], %124 {strides = array<i32>} : memref<1x2x16x16xf32, #tpu.memory_space<vmem>>, vector<1x2x16x16xf32>,
      %125 = arith.truncf %107 : vector<8x16x16xf32> to vector<8x16x16xbf16>
      "tpu.trace_start"() <{level = 10 : i32, message = "bqk,bke->bqe"}> : () -> ()
      %cst_62 = arith.constant dense<0.000000e+00> : vector<8x16x16xf32>
      %126 = tpu.matmul %125, %95, %cst_62 {dimension_numbers = #tpu.dot_dimension_numbers<[2], [1], [1], [2], [0, 0, 0, 1, 1, 2], [0], [0]>} : vector<8x16x16xbf16>, vector<8x16x16xbf16>, vector<8x16x16xf32> -> vector<8x16x16xf32>
      "tpu.trace_stop"() : () -> ()
      %127 = vector.shape_cast %126 : vector<8x16x16xf32> to vector<2x4x16x16xf32>
      %128 = tpu.transpose %127, [0, 2, 1, 3] : vector<2x4x16x16xf32> -> vector<2x16x4x16xf32>
      %129 = vector.shape_cast %128 : vector<2x16x4x16xf32> to vector<32x64xf32>
      %130 = arith.truncf %129 : vector<32x64xf32> to vector<32x64xbf16>
      %c0_63 = arith.constant 0 : index
      %c0_64 = arith.constant 0 : index
      %c0_65 = arith.constant 0 : index
      %131 = vector.load %arg9[%c0_63, %c0_64, %c0_65] : memref<1x64x64xbf16, #tpu.memory_space<vmem>>, vector<1x64x64xbf16>
      %132 = vector.shape_cast %131 : vector<1x64x64xbf16> to vector<64x64xbf16>
      %cst_66 = arith.constant dense<0.000000e+00> : vector<32x64xf32>
      %133 = tpu.matmul %130, %132, %cst_66 {dimension_numbers = #tpu.dot_dimension_numbers<[1], [0], [0], [1], [0, 0, 1, 1], [], []>} : vector<32x64xbf16>, vector<64x64xbf16>, vector<32x64xf32> -> vector<32x64xf32>
      %134 = arith.addf %46, %133 : vector<32x64xf32>
      %c0_67 = arith.constant 0 : index
      %c0_68 = arith.constant 0 : index
      %c0_69 = arith.constant 0 : index
      %135 = vector.load %arg10[%c0_67, %c0_68, %c0_69] : memref<1x1x64xf32, #tpu.memory_space<vmem>>, vector<1x1x64xf32>
      %136 = vector.shape_cast %135 : vector<1x1x64xf32> to vector<1x64xf32>
      %137 = vector.broadcast %136 : vector<1x64xf32> to vector<32x64xf32>
      %138 = arith.addf %134, %137 : vector<32x64xf32>
      %139 = vector.shape_cast %138 : vector<32x64xf32> to vector<2x16x64xf32>
      %c0_70 = arith.constant 0 : index
      %c0_71 = arith.constant 0 : index
      %c0_72 = arith.constant 0 : index
      %140 = vector.load %arg19[%c0_70, %c0_71, %c0_72] : memref<2x16x64xf32, #tpu.memory_space<vmem>>, vector<2x16x64xf32>
      tpu.vector_store %arg19[%c0_70, %c0_71, %c0_72], %139 {strides = array<i32>} : memref<2x16x64xf32, #tpu.memory_space<vmem>>, vector<2x16x64xf32>,
      %c0_73 = arith.constant 0 : index
      %c0_74 = arith.constant 0 : index
      %c0_75 = arith.constant 0 : index
      %141 = vector.load %arg11[%c0_73, %c0_74, %c0_75] : memref<1x1x64xf32, #tpu.memory_space<vmem>>, vector<1x1x64xf32>
      %142 = vector.shape_cast %141 : vector<1x1x64xf32> to vector<1x64xf32>
      %c0_76 = arith.constant 0 : index
      %c0_77 = arith.constant 0 : index
      %c0_78 = arith.constant 0 : index
      %143 = vector.load %arg12[%c0_76, %c0_77, %c0_78] : memref<1x1x64xf32, #tpu.memory_space<vmem>>, vector<1x1x64xf32>
      %144 = vector.shape_cast %143 : vector<1x1x64xf32> to vector<1x64xf32>
      %cst_79 = arith.constant dense<0.000000e+00> : vector<32xf32>
      %145 = vector.multi_reduction <add>, %138, %cst_79 [1] : vector<32x64xf32> to vector<32xf32>
      %146 = vector.shape_cast %145 : vector<32xf32> to vector<32x1xf32>
      %cst_80 = arith.constant 6.400000e+01 : f32
      %147 = vector.broadcast %cst_80 : f32 to vector<32x1xf32>
      %148 = arith.divf %146, %147 : vector<32x1xf32>
      %149 = vector.broadcast %148 : vector<32x1xf32> to vector<32x64xf32>
      %150 = arith.subf %138, %149 : vector<32x64xf32>
      %151 = arith.mulf %150, %150 : vector<32x64xf32>
      %cst_81 = arith.constant dense<0.000000e+00> : vector<32xf32>
      %152 = vector.multi_reduction <add>, %151, %cst_81 [1] : vector<32x64xf32> to vector<32xf32>
      %153 = vector.shape_cast %152 : vector<32xf32> to vector<32x1xf32>
      %cst_82 = arith.constant 6.400000e+01 : f32
      %154 = vector.broadcast %cst_82 : f32 to vector<32x1xf32>
      %155 = arith.divf %153, %154 : vector<32x1xf32>
      %156 = vector.broadcast %148 : vector<32x1xf32> to vector<32x64xf32>
      %157 = arith.subf %138, %156 : vector<32x64xf32>
      %cst_83 = arith.constant 9.99999974E-6 : f32
      %158 = vector.broadcast %cst_83 : f32 to vector<32x1xf32>
      %159 = arith.addf %155, %158 : vector<32x1xf32>
      %160 = math.rsqrt %159 : vector<32x1xf32>
      %161 = vector.broadcast %160 : vector<32x1xf32> to vector<32x64xf32>
      %162 = arith.mulf %157, %161 : vector<32x64xf32>
      %163 = vector.broadcast %142 : vector<1x64xf32> to vector<32x64xf32>
      %164 = arith.mulf %162, %163 : vector<32x64xf32>
      %165 = vector.broadcast %144 : vector<1x64xf32> to vector<32x64xf32>
      %166 = arith.addf %164, %165 : vector<32x64xf32>
      %167 = arith.truncf %166 : vector<32x64xf32> to vector<32x64xbf16>
      %168 = vector.shape_cast %167 : vector<32x64xbf16> to vector<2x16x64xbf16>
      %c0_84 = arith.constant 0 : index
      %c0_85 = arith.constant 0 : index
      %c0_86 = arith.constant 0 : index
      %169 = vector.load %arg20[%c0_84, %c0_85, %c0_86] : memref<2x16x64xbf16, #tpu.memory_space<vmem>>, vector<2x16x64xbf16>
      tpu.vector_store %arg20[%c0_84, %c0_85, %c0_86], %168 {strides = array<i32>} : memref<2x16x64xbf16, #tpu.memory_space<vmem>>, vector<2x16x64xbf16>,
    } else {
    }
    %c0 = arith.constant 0 : index
    %c0_4 = arith.constant 0 : index
    %c0_5 = arith.constant 0 : index
    %8 = vector.load %arg20[%c0, %c0_4, %c0_5] : memref<2x16x64xbf16, #tpu.memory_space<vmem>>, vector<2x16x64xbf16>
    %9 = vector.shape_cast %8 : vector<2x16x64xbf16> to vector<32x64xbf16>
    %c0_6 = arith.constant 0 : index
    %c0_7 = arith.constant 0 : index
    %c0_8 = arith.constant 0 : index
    %10 = vector.load %arg13[%c0_6, %c0_7, %c0_8] : memref<1x64x128xbf16, #tpu.memory_space<vmem>>, vector<1x64x128xbf16>
    %11 = vector.shape_cast %10 : vector<1x64x128xbf16> to vector<64x128xbf16>
    %cst = arith.constant dense<0.000000e+00> : vector<32x128xf32>
    %12 = tpu.matmul %9, %11, %cst {dimension_numbers = #tpu.dot_dimension_numbers<[1], [0], [0], [1], [0, 0, 1, 1], [], []>} : vector<32x64xbf16>, vector<64x128xbf16>, vector<32x128xf32> -> vector<32x128xf32>
    %c0_9 = arith.constant 0 : index
    %c0_10 = arith.constant 0 : index
    %c0_11 = arith.constant 0 : index
    %13 = vector.load %arg14[%c0_9, %c0_10, %c0_11] : memref<1x1x128xf32, #tpu.memory_space<vmem>>, vector<1x1x128xf32>
    %14 = vector.shape_cast %13 : vector<1x1x128xf32> to vector<1x128xf32>
    %15 = vector.broadcast %14 : vector<1x128xf32> to vector<32x128xf32>
    %16 = arith.addf %12, %15 : vector<32x128xf32>
    %cst_12 = arith.constant 1.702000e+00 : f32
    %17 = vector.broadcast %cst_12 : f32 to vector<32x128xf32>
    %18 = arith.mulf %17, %16 : vector<32x128xf32>
    %19 = arith.negf %18 : vector<32x128xf32>
    %20 = math.exp %19 : vector<32x128xf32>
    %cst_13 = arith.constant 1.000000e+00 : f32
    %21 = vector.broadcast %cst_13 : f32 to vector<32x128xf32>
    %22 = arith.addf %21, %20 : vector<32x128xf32>
    %23 = arith.divf %21, %22 : vector<32x128xf32>
    %24 = arith.mulf %16, %23 : vector<32x128xf32>
    %25 = arith.truncf %24 : vector<32x128xf32> to vector<32x128xbf16>
    %c0_14 = arith.constant 0 : index
    %c0_15 = arith.constant 0 : index
    %c0_16 = arith.constant 0 : index
    %26 = vector.load %arg15[%c0_14, %c0_15, %c0_16] : memref<1x128x64xbf16, #tpu.memory_space<vmem>>, vector<1x128x64xbf16>
    %27 = vector.shape_cast %26 : vector<1x128x64xbf16> to vector<128x64xbf16>
    %cst_17 = arith.constant dense<0.000000e+00> : vector<32x64xf32>
    %28 = tpu.matmul %25, %27, %cst_17 {dimension_numbers = #tpu.dot_dimension_numbers<[1], [0], [0], [1], [0, 0, 1, 1], [], []>} : vector<32x128xbf16>, vector<128x64xbf16>, vector<32x64xf32> -> vector<32x64xf32>
    %c0_18 = arith.constant 0 : index
    %c0_19 = arith.constant 0 : index
    %c0_20 = arith.constant 0 : index
    %29 = vector.load %arg19[%c0_18, %c0_19, %c0_20] : memref<2x16x64xf32, #tpu.memory_space<vmem>>, vector<2x16x64xf32>
    %30 = vector.shape_cast %28 : vector<32x64xf32> to vector<2x16x64xf32>
    %31 = arith.addf %29, %30 : vector<2x16x64xf32>
    %c0_21 = arith.constant 0 : index
    %c0_22 = arith.constant 0 : index
    %c0_23 = arith.constant 0 : index
    %32 = vector.load %arg19[%c0_21, %c0_22, %c0_23] : memref<2x16x64xf32, #tpu.memory_space<vmem>>, vector<2x16x64xf32>
    tpu.vector_store %arg19[%c0_21, %c0_22, %c0_23], %31 {strides = array<i32>} : memref<2x16x64xf32, #tpu.memory_space<vmem>>, vector<2x16x64xf32>,
    %c1_i32 = arith.constant 1 : i32
    %33 = arith.cmpi eq, %arg2, %c1_i32 : i32
    %34 = arith.extui %33 : i1 to i32
    %c0_i32_24 = arith.constant 0 : i32
    %35 = arith.cmpi ne, %34, %c0_i32_24 : i32
    scf.if %35 {
      %c0_27 = arith.constant 0 : index
      %c0_28 = arith.constant 0 : index
      %c0_29 = arith.constant 0 : index
      %41 = vector.load %arg19[%c0_27, %c0_28, %c0_29] : memref<2x16x64xf32, #tpu.memory_space<vmem>>, vector<2x16x64xf32>
      %c0_30 = arith.constant 0 : index
      %c0_31 = arith.constant 0 : index
      %c0_32 = arith.constant 0 : index
      %42 = vector.load %arg16[%c0_30, %c0_31, %c0_32] : memref<1x1x64xf32, #tpu.memory_space<vmem>>, vector<1x1x64xf32>
      %43 = vector.shape_cast %42 : vector<1x1x64xf32> to vector<1x64xf32>
      %44 = vector.shape_cast %43 : vector<1x64xf32> to vector<1x1x64xf32>
      %45 = vector.broadcast %44 : vector<1x1x64xf32> to vector<2x16x64xf32>
      %46 = arith.addf %41, %45 : vector<2x16x64xf32>
      %c0_33 = arith.constant 0 : index
      %c0_34 = arith.constant 0 : index
      %c0_35 = arith.constant 0 : index
      %47 = vector.load %arg19[%c0_33, %c0_34, %c0_35] : memref<2x16x64xf32, #tpu.memory_space<vmem>>, vector<2x16x64xf32>
      tpu.vector_store %arg19[%c0_33, %c0_34, %c0_35], %46 {strides = array<i32>} : memref<2x16x64xf32, #tpu.memory_space<vmem>>, vector<2x16x64xf32>,
    } else {
    }
    %c1_i32_25 = arith.constant 1 : i32
    %36 = arith.cmpi eq, %arg2, %c1_i32_25 : i32
    %c2_i32 = arith.constant 2 : i32
    %37 = arith.cmpi eq, %arg1, %c2_i32 : i32
    %38 = arith.andi %36, %37 : i1
    %39 = arith.extui %38 : i1 to i32
    %c0_i32_26 = arith.constant 0 : i32
    %40 = arith.cmpi ne, %39, %c0_i32_26 : i32
    scf.if %40 {
      %c0_27 = arith.constant 0 : index
      %c0_28 = arith.constant 0 : index
      %c0_29 = arith.constant 0 : index
      %41 = vector.load %arg19[%c0_27, %c0_28, %c0_29] : memref<2x16x64xf32, #tpu.memory_space<vmem>>, vector<2x16x64xf32>
      %c0_30 = arith.constant 0 : index
      %c0_31 = arith.constant 0 : index
      %c0_32 = arith.constant 0 : index
      %42 = vector.load %arg17[%c0_30, %c0_31, %c0_32] : memref<2x16x64xf32, #tpu.memory_space<vmem>>, vector<2x16x64xf32>
      tpu.vector_store %arg17[%c0_30, %c0_31, %c0_32], %41 {strides = array<i32>} : memref<2x16x64xf32, #tpu.memory_space<vmem>>, vector<2x16x64xf32>,
    } else {
    }
    return
  }
  func.func @transform_0(%arg0: i32, %arg1: i32, %arg2: i32) -> (i32, i32, i32) {
    %c0_i32 = arith.constant 0 : i32
    %c0_i32_0 = arith.constant 0 : i32
    %c0_i32_1 = arith.constant 0 : i32
    return %arg0, %c0_i32, %c0_i32_0 : i32, i32, i32
  }
  func.func @transform_1(%arg0: i32, %arg1: i32, %arg2: i32) -> (i32, i32, i32) {
    %c0_i32 = arith.constant 0 : i32
    %c0_i32_0 = arith.constant 0 : i32
    %c0_i32_1 = arith.constant 0 : i32
    return %arg1, %c0_i32, %c0_i32_0 : i32, i32, i32
  }
  func.func @transform_2(%arg0: i32, %arg1: i32, %arg2: i32) -> (i32, i32, i32) {
    %c0_i32 = arith.constant 0 : i32
    %c0_i32_0 = arith.constant 0 : i32
    %c0_i32_1 = arith.constant 0 : i32
    return %arg1, %c0_i32, %c0_i32_0 : i32, i32, i32
  }
  func.func @transform_3(%arg0: i32, %arg1: i32, %arg2: i32) -> (i32, i32, i32) {
    %c0_i32 = arith.constant 0 : i32
    %c0_i32_0 = arith.constant 0 : i32
    %c0_i32_1 = arith.constant 0 : i32
    return %arg1, %c0_i32, %c0_i32_0 : i32, i32, i32
  }
  func.func @transform_4(%arg0: i32, %arg1: i32, %arg2: i32) -> (i32, i32, i32) {
    %c0_i32 = arith.constant 0 : i32
    %c0_i32_0 = arith.constant 0 : i32
    %c0_i32_1 = arith.constant 0 : i32
    return %arg1, %c0_i32, %c0_i32_0 : i32, i32, i32
  }
  func.func @transform_5(%arg0: i32, %arg1: i32, %arg2: i32) -> (i32, i32, i32) {
    %c0_i32 = arith.constant 0 : i32
    %c0_i32_0 = arith.constant 0 : i32
    %c0_i32_1 = arith.constant 0 : i32
    return %arg1, %c0_i32, %c0_i32_0 : i32, i32, i32
  }
  func.func @transform_6(%arg0: i32, %arg1: i32, %arg2: i32) -> (i32, i32, i32) {
    %c0_i32 = arith.constant 0 : i32
    %c0_i32_0 = arith.constant 0 : i32
    %c0_i32_1 = arith.constant 0 : i32
    return %arg1, %c0_i32, %c0_i32_0 : i32, i32, i32
  }
  func.func @transform_7(%arg0: i32, %arg1: i32, %arg2: i32) -> (i32, i32, i32) {
    %c0_i32 = arith.constant 0 : i32
    %c0_i32_0 = arith.constant 0 : i32
    %c0_i32_1 = arith.constant 0 : i32
    return %arg1, %c0_i32, %c0_i32_0 : i32, i32, i32
  }
  func.func @transform_8(%arg0: i32, %arg1: i32, %arg2: i32) -> (i32, i32, i32) {
    %c0_i32 = arith.constant 0 : i32
    %c0_i32_0 = arith.constant 0 : i32
    %c0_i32_1 = arith.constant 0 : i32
    return %arg1, %c0_i32, %c0_i32_0 : i32, i32, i32
  }
  func.func @transform_9(%arg0: i32, %arg1: i32, %arg2: i32) -> (i32, i32, i32) {
    %c0_i32 = arith.constant 0 : i32
    %c0_i32_0 = arith.constant 0 : i32
    %c0_i32_1 = arith.constant 0 : i32
    return %arg1, %c0_i32, %c0_i32_0 : i32, i32, i32
  }
  func.func @transform_10(%arg0: i32, %arg1: i32, %arg2: i32) -> (i32, i32, i32) {
    %c0_i32 = arith.constant 0 : i32
    %c0_i32_0 = arith.constant 0 : i32
    return %arg1, %c0_i32, %arg2 : i32, i32, i32
  }
  func.func @transform_11(%arg0: i32, %arg1: i32, %arg2: i32) -> (i32, i32, i32) {
    %c0_i32 = arith.constant 0 : i32
    %c0_i32_0 = arith.constant 0 : i32
    return %arg1, %c0_i32, %arg2 : i32, i32, i32
  }
  func.func @transform_12(%arg0: i32, %arg1: i32, %arg2: i32) -> (i32, i32, i32) {
    %c0_i32 = arith.constant 0 : i32
    %c0_i32_0 = arith.constant 0 : i32
    return %arg1, %arg2, %c0_i32 : i32, i32, i32
  }
  func.func @transform_13(%arg0: i32, %arg1: i32, %arg2: i32) -> (i32, i32, i32) {
    %c0_i32 = arith.constant 0 : i32
    %c0_i32_0 = arith.constant 0 : i32
    %c0_i32_1 = arith.constant 0 : i32
    return %arg1, %c0_i32, %c0_i32_0 : i32, i32, i32
  }
  func.func @transform_14(%arg0: i32, %arg1: i32, %arg2: i32) -> (i32, i32, i32) {
    %c0_i32 = arith.constant 0 : i32
    %c0_i32_0 = arith.constant 0 : i32
    %c0_i32_1 = arith.constant 0 : i32
    return %arg0, %c0_i32, %c0_i32_0 : i32, i32, i32
  }
  func.func @transform_15(%arg0: i32, %arg1: i32, %arg2: i32) -> (i32, i32, i32, i32) {
    %c0_i32 = arith.constant 0 : i32
    %c0_i32_0 = arith.constant 0 : i32
    %c0_i32_1 = arith.constant 0 : i32
    return %arg1, %arg0, %c0_i32, %c0_i32_0 : i32, i32, i32, i32
  }
}

</mosaic_0001>

<llo_original>
// kernel: tpu_custom_call.1
$region0: #{tpu_custom_call.1}
  #allocation0 [shape = 'u32[]', space=smem, size = 0x4, offset = 0x4, fixed_abs, tag = 'smem constant byte address 0x4 - core index']
  #allocation1 [shape = 'u32[144,128]{1,0:T(1,128)}', space=vmem, size = 0x12000, scoped, tag = 'internal scratch']
  #allocation2 [shape = 'f32[2,16,64]{2,1,0:T(8,128)}', space=vmem, size = 0x4000, scoped, tag = 'scratch operand']
  #allocation3 [shape = 'bf16[2,16,64]{2,1,0:T(16,128)(2,1)}', space=vmem, size = 0x2000, scoped, tag = 'scratch operand']
  %s0 = inlined_call_operand.vmem [shape: f32[4,12,64], index: 0, kind: input, shape index: {}]
  %s1 = inlined_call_operand.vmem [shape: f32[3,4,64], index: 1, kind: input, shape index: {}]
  %s2 = inlined_call_operand.vmem [shape: f32[3,1,64], index: 2, kind: input, shape index: {}]
  %s3 = inlined_call_operand.vmem [shape: f32[3,1,64], index: 3, kind: input, shape index: {}]
  %s4 = inlined_call_operand.vmem [shape: bf16[3,64,192], index: 4, kind: input, shape index: {}]
  %s5 = inlined_call_operand.vmem [shape: f32[3,1,192], index: 5, kind: input, shape index: {}]
  %s6 = inlined_call_operand.vmem [shape: bf16[3,64,64], index: 6, kind: input, shape index: {}]
  %s7 = inlined_call_operand.vmem [shape: f32[3,1,64], index: 7, kind: input, shape index: {}]
  %s8 = inlined_call_operand.vmem [shape: f32[3,1,64], index: 8, kind: input, shape index: {}]
  %s9 = inlined_call_operand.vmem [shape: f32[3,1,64], index: 9, kind: input, shape index: {}]
  %s10 = inlined_call_operand.vmem [shape: bf16[3,64,256], index: 10, kind: input, shape index: {}]
  %s11 = inlined_call_operand.vmem [shape: f32[3,1,256], index: 11, kind: input, shape index: {}]
  %s12 = inlined_call_operand.vmem [shape: bf16[3,256,64], index: 12, kind: input, shape index: {}]
  %s13 = inlined_call_operand.vmem [shape: f32[3,1,64], index: 13, kind: input, shape index: {}]
  %s14 = inlined_call_operand.hbm [shape: f32[4,16,64], index: 14, kind: output, shape index: {0}]
  %s15 = inlined_call_operand.hbm [shape: f32[3,4,16,16], index: 15, kind: output, shape index: {1}]
  %16 = xla_tuple %s14, %s15
  %s17 = sld [smem:[#allocation0]]
  $region154: #{tpu_custom_call.1} parent=0
    _
  %s19 = ssub.s32 1, %s17
  %s20 = scalar_select 0, %s19, %s17
  $region1: #{tpu_custom_call.1} parent=0
    #allocation4 [shape = 'u8[32768]{0}', space=vmem, size = 0x8000, scoped, tag = 'input window, operand 10']
    #allocation5 [shape = 'u8[32768]{0}', space=vmem, size = 0x8000, scoped, tag = 'output window, operand 0']
    #allocation6 [shape = 's32[2]{0}', space=sflag, size = 0x8, scoped, tag = 'scoped memory for tpu_custom_call.1']
    #allocation7 [shape = 'u8[32768]{0}', space=vmem, size = 0x8000, scoped, tag = 'output window, operand 1']
    #allocation8 [shape = 's32[2]{0}', space=sflag, size = 0x8, scoped, tag = 'scoped memory for tpu_custom_call.1']
    %21 = vsyncpa [#allocation6], 0
    %s22 = scalar_lea.sflag [#allocation6], 1
    %23 = vsyncpa %s22, 0
    %24 = vsyncpa [#allocation8], 0
    %s25 = scalar_lea.sflag [#allocation8], 1
    %26 = vsyncpa %s25, 0
    loop: start=0, step=1, limit=14
    $region2: #{tpu_custom_call.1} parent=1 // loop_pre_header
      _
    $region3: #{tpu_custom_call.1} parent=1 // loop_header
      %s28 = sphi 0, %s32
      %p29 = scmp.ge.s32.totalorder %s28, 14
      %s35 = sphi 0, %s54
      %s36 = sphi 0, %s50
      %s37 = sphi 0, %s46
      %s38 = sphi 0, %s35
      %s39 = sphi 0, %s36
      %s40 = sphi 0, %s37
      %s41 = sphi 0, %s38
      %s42 = sphi 0, %s39
      %s43 = sphi 0, %s40
      %s57 = sphi 0, %s59
      %s60 = sphi 0, %s57
      %s61 = sphi 0, %s60
      %s77 = sphi 0, %s61
      %s83 = sphi 0, %s85
      %s86 = sphi 0, %s83
      %s87 = sphi 0, %s86
      %s103 = sphi 0, %s87
      %s109 = sphi 0, %s111
      %s112 = sphi 0, %s109
      %s113 = sphi 0, %s112
      %s129 = sphi 0, %s113
      %s135 = sphi 0, %s137
      %s138 = sphi 0, %s135
      %s139 = sphi 0, %s138
      %s155 = sphi 0, %s139
      %s161 = sphi 0, %s163
      %s164 = sphi 0, %s161
      %s165 = sphi 0, %s164
      %s181 = sphi 0, %s165
      %s187 = sphi 0, %s189
      %s190 = sphi 0, %s187
      %s191 = sphi 0, %s190
      %s207 = sphi 0, %s191
      %s213 = sphi 0, %s215
      %s216 = sphi 0, %s213
      %s217 = sphi 0, %s216
      %s233 = sphi 0, %s217
      %s239 = sphi 0, %s241
      %s242 = sphi 0, %s239
      %s243 = sphi 0, %s242
      %s259 = sphi 0, %s243
      %s265 = sphi 0, %s267
      %s268 = sphi 0, %s265
      %s269 = sphi 0, %s268
      %s285 = sphi 0, %s269
      %s291 = sphi 0, %s293
      %s294 = sphi 0, %s291
      %s295 = sphi 0, %s294
      %s311 = sphi 0, %s295
      %s319 = sphi 0, %s321
      %s322 = sphi 0, %s319
      %s323 = sphi 0, %s322
      %s339 = sphi 0, %s323
      %s347 = sphi 0, %s349
      %s350 = sphi 0, %s347
      %s351 = sphi 0, %s350
      %s367 = sphi 0, %s351
      %s375 = sphi 0, %s377
      %s378 = sphi 0, %s375
      %s379 = sphi 0, %s378
      %s395 = sphi 0, %s379
      %s401 = sphi 0, %s403
      %s404 = sphi 0, %s401
      %s405 = sphi 0, %s404
      %s421 = sphi 0, %s405
      %s427 = sphi 0, %s429
      %s430 = sphi 0, %s427
      %s431 = sphi 0, %s430
      %s447 = sphi 0, %s431
      %s455 = sphi 0, %s457
      %s458 = sphi 0, %s455
      %s459 = sphi 0, %s458
      %s475 = sphi 0, %s459
    $region4: #{tpu_custom_call.1} parent=1 // loop_header_branch
      %31 = sbr.rel (%p29) target = $region8
    $region5: #{tpu_custom_call.1} parent=1 // loop_body
      %s33 = ssub.s32 %s28, 1
      %s34 = ssub.s32 %s28, 2
      %s44 = sadd.s32 1, %s37
      %p45 = scmp.ge.s32.totalorder %s44, 2
      %s46 = scalar_select %p45, 0, %s44
      %s47 = sadd.s32 1, %s36
      %s48 = scalar_select %p45, %s47, %s36
      %p49 = scmp.ge.s32.totalorder %s48, 3
      %s50 = scalar_select %p49, 0, %s48
      %s51 = sadd.s32 1, %s35
      %s52 = scalar_select %p49, %s51, %s35
      %p53 = scmp.ge.s32.totalorder %s52, 2
      %s54 = scalar_select %p53, 0, %s52
      %s55 = ssub.s32 %s35, %s54
      %p56 = scmp.eq.s32.totalorder %s55, 0
      %s58 = sadd.s32 %s57, 1
      %s59 = scalar_select %p56, %s57, %s58
      %p62 = pneg %p56
      %p63 = scmp.eq.s32.totalorder %s28, 11
      %p64 = por %p62, %p63
      %p65 = scmp.ne.s32.totalorder %s57, %s60
      %p66 = scmp.eq.s32.totalorder %s28, 0
      %p67 = por %p65, %p66
      %p68 = scmp.ne.s32.totalorder %s57, %s60
      %p69 = scmp.eq.s32.totalorder %s33, 11
      %p70 = por %p68, %p69
      %p71 = scmp.ne.s32.totalorder %s60, %s61
      %p72 = scmp.eq.s32.totalorder %s33, 0
      %p73 = por %p71, %p72
      %p74 = scmp.ne.s32.totalorder %s60, %s61
      %p75 = scmp.eq.s32.totalorder %s34, 11
      %p76 = por %p74, %p75
      %p78 = scmp.ne.s32.totalorder %s61, %s77
      %p79 = scmp.eq.s32.totalorder %s34, 0
      %p80 = por %p78, %p79
      %s81 = ssub.s32 %s36, %s50
      %p82 = scmp.eq.s32.totalorder %s81, 0
      %s84 = sadd.s32 %s83, 1
      %s85 = scalar_select %p82, %s83, %s84
      %p88 = pneg %p82
      %p89 = scmp.eq.s32.totalorder %s28, 11
      %p90 = por %p88, %p89
      %p91 = scmp.ne.s32.totalorder %s83, %s86
      %p92 = scmp.eq.s32.totalorder %s28, 0
      %p93 = por %p91, %p92
      %p94 = scmp.ne.s32.totalorder %s83, %s86
      %p95 = scmp.eq.s32.totalorder %s33, 11
      %p96 = por %p94, %p95
      %p97 = scmp.ne.s32.totalorder %s86, %s87
      %p98 = scmp.eq.s32.totalorder %s33, 0
      %p99 = por %p97, %p98
      %p100 = scmp.ne.s32.totalorder %s86, %s87
      %p101 = scmp.eq.s32.totalorder %s34, 11
      %p102 = por %p100, %p101
      %p104 = scmp.ne.s32.totalorder %s87, %s103
      %p105 = scmp.eq.s32.totalorder %s34, 0
      %p106 = por %p104, %p105
      %s107 = ssub.s32 %s36, %s50
      %p108 = scmp.eq.s32.totalorder %s107, 0
      %s110 = sadd.s32 %s109, 1
      %s111 = scalar_select %p108, %s109, %s110
      %p114 = pneg %p108
      %p115 = scmp.eq.s32.totalorder %s28, 11
      %p116 = por %p114, %p115
      %p117 = scmp.ne.s32.totalorder %s109, %s112
      %p118 = scmp.eq.s32.totalorder %s28, 0
      %p119 = por %p117, %p118
      %p120 = scmp.ne.s32.totalorder %s109, %s112
      %p121 = scmp.eq.s32.totalorder %s33, 11
      %p122 = por %p120, %p121
      %p123 = scmp.ne.s32.totalorder %s112, %s113
      %p124 = scmp.eq.s32.totalorder %s33, 0
      %p125 = por %p123, %p124
      %p126 = scmp.ne.s32.totalorder %s112, %s113
      %p127 = scmp.eq.s32.totalorder %s34, 11
      %p128 = por %p126, %p127
      %p130 = scmp.ne.s32.totalorder %s113, %s129
      %p131 = scmp.eq.s32.totalorder %s34, 0
      %p132 = por %p130, %p131
      %s133 = ssub.s32 %s36, %s50
      %p134 = scmp.eq.s32.totalorder %s133, 0
      %s136 = sadd.s32 %s135, 1
      %s137 = scalar_select %p134, %s135, %s136
      %p140 = pneg %p134
      %p141 = scmp.eq.s32.totalorder %s28, 11
      %p142 = por %p140, %p141
      %p143 = scmp.ne.s32.totalorder %s135, %s138
      %p144 = scmp.eq.s32.totalorder %s28, 0
      %p145 = por %p143, %p144
      %p146 = scmp.ne.s32.totalorder %s135, %s138
      %p147 = scmp.eq.s32.totalorder %s33, 11
      %p148 = por %p146, %p147
      %p149 = scmp.ne.s32.totalorder %s138, %s139
      %p150 = scmp.eq.s32.totalorder %s33, 0
      %p151 = por %p149, %p150
      %p152 = scmp.ne.s32.totalorder %s138, %s139
      %p153 = scmp.eq.s32.totalorder %s34, 11
      %p154 = por %p152, %p153
      %p156 = scmp.ne.s32.totalorder %s139, %s155
      %p157 = scmp.eq.s32.totalorder %s34, 0
      %p158 = por %p156, %p157
      %s159 = ssub.s32 %s36, %s50
      %p160 = scmp.eq.s32.totalorder %s159, 0
      %s162 = sadd.s32 %s161, 1
      %s163 = scalar_select %p160, %s161, %s162
      %p166 = pneg %p160
      %p167 = scmp.eq.s32.totalorder %s28, 11
      %p168 = por %p166, %p167
      %p169 = scmp.ne.s32.totalorder %s161, %s164
      %p170 = scmp.eq.s32.totalorder %s28, 0
      %p171 = por %p169, %p170
      %p172 = scmp.ne.s32.totalorder %s161, %s164
      %p173 = scmp.eq.s32.totalorder %s33, 11
      %p174 = por %p172, %p173
      %p175 = scmp.ne.s32.totalorder %s164, %s165
      %p176 = scmp.eq.s32.totalorder %s33, 0
      %p177 = por %p175, %p176
      %p178 = scmp.ne.s32.totalorder %s164, %s165
      %p179 = scmp.eq.s32.totalorder %s34, 11
      %p180 = por %p178, %p179
      %p182 = scmp.ne.s32.totalorder %s165, %s181
      %p183 = scmp.eq.s32.totalorder %s34, 0
      %p184 = por %p182, %p183
      %s185 = ssub.s32 %s36, %s50
      %p186 = scmp.eq.s32.totalorder %s185, 0
      %s188 = sadd.s32 %s187, 1
      %s189 = scalar_select %p186, %s187, %s188
      %p192 = pneg %p186
      %p193 = scmp.eq.s32.totalorder %s28, 11
      %p194 = por %p192, %p193
      %p195 = scmp.ne.s32.totalorder %s187, %s190
      %p196 = scmp.eq.s32.totalorder %s28, 0
      %p197 = por %p195, %p196
      %p198 = scmp.ne.s32.totalorder %s187, %s190
      %p199 = scmp.eq.s32.totalorder %s33, 11
      %p200 = por %p198, %p199
      %p201 = scmp.ne.s32.totalorder %s190, %s191
      %p202 = scmp.eq.s32.totalorder %s33, 0
      %p203 = por %p201, %p202
      %p204 = scmp.ne.s32.totalorder %s190, %s191
      %p205 = scmp.eq.s32.totalorder %s34, 11
      %p206 = por %p204, %p205
      %p208 = scmp.ne.s32.totalorder %s191, %s207
      %p209 = scmp.eq.s32.totalorder %s34, 0
      %p210 = por %p208, %p209
      %s211 = ssub.s32 %s36, %s50
      %p212 = scmp.eq.s32.totalorder %s211, 0
      %s214 = sadd.s32 %s213, 1
      %s215 = scalar_select %p212, %s213, %s214
      %p218 = pneg %p212
      %p219 = scmp.eq.s32.totalorder %s28, 11
      %p220 = por %p218, %p219
      %p221 = scmp.ne.s32.totalorder %s213, %s216
      %p222 = scmp.eq.s32.totalorder %s28, 0
      %p223 = por %p221, %p222
      %p224 = scmp.ne.s32.totalorder %s213, %s216
      %p225 = scmp.eq.s32.totalorder %s33, 11
      %p226 = por %p224, %p225
      %p227 = scmp.ne.s32.totalorder %s216, %s217
      %p228 = scmp.eq.s32.totalorder %s33, 0
      %p229 = por %p227, %p228
      %p230 = scmp.ne.s32.totalorder %s216, %s217
      %p231 = scmp.eq.s32.totalorder %s34, 11
      %p232 = por %p230, %p231
      %p234 = scmp.ne.s32.totalorder %s217, %s233
      %p235 = scmp.eq.s32.totalorder %s34, 0
      %p236 = por %p234, %p235
      %s237 = ssub.s32 %s36, %s50
      %p238 = scmp.eq.s32.totalorder %s237, 0
      %s240 = sadd.s32 %s239, 1
      %s241 = scalar_select %p238, %s239, %s240
      %p244 = pneg %p238
      %p245 = scmp.eq.s32.totalorder %s28, 11
      %p246 = por %p244, %p245
      %p247 = scmp.ne.s32.totalorder %s239, %s242
      %p248 = scmp.eq.s32.totalorder %s28, 0
      %p249 = por %p247, %p248
      %p250 = scmp.ne.s32.totalorder %s239, %s242
      %p251 = scmp.eq.s32.totalorder %s33, 11
      %p252 = por %p250, %p251
      %p253 = scmp.ne.s32.totalorder %s242, %s243
      %p254 = scmp.eq.s32.totalorder %s33, 0
      %p255 = por %p253, %p254
      %p256 = scmp.ne.s32.totalorder %s242, %s243
      %p257 = scmp.eq.s32.totalorder %s34, 11
      %p258 = por %p256, %p257
      %p260 = scmp.ne.s32.totalorder %s243, %s259
      %p261 = scmp.eq.s32.totalorder %s34, 0
      %p262 = por %p260, %p261
      %s263 = ssub.s32 %s36, %s50
      %p264 = scmp.eq.s32.totalorder %s263, 0
      %s266 = sadd.s32 %s265, 1
      %s267 = scalar_select %p264, %s265, %s266
      %p270 = pneg %p264
      %p271 = scmp.eq.s32.totalorder %s28, 11
      %p272 = por %p270, %p271
      %p273 = scmp.ne.s32.totalorder %s265, %s268
      %p274 = scmp.eq.s32.totalorder %s28, 0
      %p275 = por %p273, %p274
      %p276 = scmp.ne.s32.totalorder %s265, %s268
      %p277 = scmp.eq.s32.totalorder %s33, 11
      %p278 = por %p276, %p277
      %p279 = scmp.ne.s32.totalorder %s268, %s269
      %p280 = scmp.eq.s32.totalorder %s33, 0
      %p281 = por %p279, %p280
      %p282 = scmp.ne.s32.totalorder %s268, %s269
      %p283 = scmp.eq.s32.totalorder %s34, 11
      %p284 = por %p282, %p283
      %p286 = scmp.ne.s32.totalorder %s269, %s285
      %p287 = scmp.eq.s32.totalorder %s34, 0
      %p288 = por %p286, %p287
      %s289 = ssub.s32 %s36, %s50
      %p290 = scmp.eq.s32.totalorder %s289, 0
      %s292 = sadd.s32 %s291, 1
      %s293 = scalar_select %p290, %s291, %s292
      %p296 = pneg %p290
      %p297 = scmp.eq.s32.totalorder %s28, 11
      %p298 = por %p296, %p297
      %p299 = scmp.ne.s32.totalorder %s291, %s294
      %p300 = scmp.eq.s32.totalorder %s28, 0
      %p301 = por %p299, %p300
      %p302 = scmp.ne.s32.totalorder %s291, %s294
      %p303 = scmp.eq.s32.totalorder %s33, 11
      %p304 = por %p302, %p303
      %p305 = scmp.ne.s32.totalorder %s294, %s295
      %p306 = scmp.eq.s32.totalorder %s33, 0
      %p307 = por %p305, %p306
      %p308 = scmp.ne.s32.totalorder %s294, %s295
      %p309 = scmp.eq.s32.totalorder %s34, 11
      %p310 = por %p308, %p309
      %p312 = scmp.ne.s32.totalorder %s295, %s311
      %p313 = scmp.eq.s32.totalorder %s34, 0
      %p314 = por %p312, %p313
      %s315 = ssub.s32 %s36, %s50
      %s316 = ssub.s32 %s37, %s46
      %s317 = sor.u32 %s315, %s316
      %p318 = scmp.eq.s32.totalorder %s317, 0
      %s320 = sadd.s32 %s319, 1
      %s321 = scalar_select %p318, %s319, %s320
      %p324 = pneg %p318
      %p325 = scmp.eq.s32.totalorder %s28, 11
      %p326 = por %p324, %p325
      %p327 = scmp.ne.s32.totalorder %s319, %s322
      %p328 = scmp.eq.s32.totalorder %s28, 0
      %p329 = por %p327, %p328
      %p330 = scmp.ne.s32.totalorder %s319, %s322
      %p331 = scmp.eq.s32.totalorder %s33, 11
      %p332 = por %p330, %p331
      %p333 = scmp.ne.s32.totalorder %s322, %s323
      %p334 = scmp.eq.s32.totalorder %s33, 0
      %p335 = por %p333, %p334
      %p336 = scmp.ne.s32.totalorder %s322, %s323
      %p337 = scmp.eq.s32.totalorder %s34, 11
      %p338 = por %p336, %p337
      %p340 = scmp.ne.s32.totalorder %s323, %s339
      %p341 = scmp.eq.s32.totalorder %s34, 0
      %p342 = por %p340, %p341
      %s343 = ssub.s32 %s36, %s50
      %s344 = ssub.s32 %s37, %s46
      %s345 = sor.u32 %s343, %s344
      %p346 = scmp.eq.s32.totalorder %s345, 0
      %s348 = sadd.s32 %s347, 1
      %s349 = scalar_select %p346, %s347, %s348
      %p352 = pneg %p346
      %p353 = scmp.eq.s32.totalorder %s28, 11
      %p354 = por %p352, %p353
      %p355 = scmp.ne.s32.totalorder %s347, %s350
      %p356 = scmp.eq.s32.totalorder %s28, 0
      %p357 = por %p355, %p356
      %p358 = scmp.ne.s32.totalorder %s347, %s350
      %p359 = scmp.eq.s32.totalorder %s33, 11
      %p360 = por %p358, %p359
      %p361 = scmp.ne.s32.totalorder %s350, %s351
      %p362 = scmp.eq.s32.totalorder %s33, 0
      %p363 = por %p361, %p362
      %p364 = scmp.ne.s32.totalorder %s350, %s351
      %p365 = scmp.eq.s32.totalorder %s34, 11
      %p366 = por %p364, %p365
      %p368 = scmp.ne.s32.totalorder %s351, %s367
      %p369 = scmp.eq.s32.totalorder %s34, 0
      %p370 = por %p368, %p369
      %s371 = ssub.s32 %s36, %s50
      %s372 = ssub.s32 %s37, %s46
      %s373 = sor.u32 %s371, %s372
      %p374 = scmp.eq.s32.totalorder %s373, 0
      %s376 = sadd.s32 %s375, 1
      %s377 = scalar_select %p374, %s375, %s376
      %p380 = pneg %p374
      %p381 = scmp.eq.s32.totalorder %s28, 11
      %p382 = por %p380, %p381
      %p383 = scmp.ne.s32.totalorder %s375, %s378
      %p384 = scmp.eq.s32.totalorder %s28, 0
      %p385 = por %p383, %p384
      %p386 = scmp.ne.s32.totalorder %s375, %s378
      %p387 = scmp.eq.s32.totalorder %s33, 11
      %p388 = por %p386, %p387
      %p389 = scmp.ne.s32.totalorder %s378, %s379
      %p390 = scmp.eq.s32.totalorder %s33, 0
      %p391 = por %p389, %p390
      %p392 = scmp.ne.s32.totalorder %s378, %s379
      %p393 = scmp.eq.s32.totalorder %s34, 11
      %p394 = por %p392, %p393
      %p396 = scmp.ne.s32.totalorder %s379, %s395
      %p397 = scmp.eq.s32.totalorder %s34, 0
      %p398 = por %p396, %p397
      %s399 = ssub.s32 %s36, %s50
      %p400 = scmp.eq.s32.totalorder %s399, 0
      %s402 = sadd.s32 %s401, 1
      %s403 = scalar_select %p400, %s401, %s402
      %p406 = pneg %p400
      %p407 = scmp.eq.s32.totalorder %s28, 11
      %p408 = por %p406, %p407
      %p409 = scmp.ne.s32.totalorder %s401, %s404
      %p410 = scmp.eq.s32.totalorder %s28, 0
      %p411 = por %p409, %p410
      %p412 = scmp.ne.s32.totalorder %s401, %s404
      %p413 = scmp.eq.s32.totalorder %s33, 11
      %p414 = por %p412, %p413
      %p415 = scmp.ne.s32.totalorder %s404, %s405
      %p416 = scmp.eq.s32.totalorder %s33, 0
      %p417 = por %p415, %p416
      %p418 = scmp.ne.s32.totalorder %s404, %s405
      %p419 = scmp.eq.s32.totalorder %s34, 11
      %p420 = por %p418, %p419
      %p422 = scmp.ne.s32.totalorder %s405, %s421
      %p423 = scmp.eq.s32.totalorder %s34, 0
      %p424 = por %p422, %p423
      %s425 = ssub.s32 %s35, %s54
      %p426 = scmp.eq.s32.totalorder %s425, 0
      %s428 = sadd.s32 %s427, 1
      %s429 = scalar_select %p426, %s427, %s428
      %p432 = pneg %p426
      %p433 = scmp.eq.s32.totalorder %s28, 11
      %p434 = por %p432, %p433
      %p435 = scmp.ne.s32.totalorder %s427, %s430
      %p436 = scmp.eq.s32.totalorder %s28, 0
      %p437 = por %p435, %p436
      %p438 = scmp.ne.s32.totalorder %s427, %s430
      %p439 = scmp.eq.s32.totalorder %s33, 11
      %p440 = por %p438, %p439
      %p441 = scmp.ne.s32.totalorder %s430, %s431
      %p442 = scmp.eq.s32.totalorder %s33, 0
      %p443 = por %p441, %p442
      %p444 = scmp.ne.s32.totalorder %s430, %s431
      %p445 = scmp.eq.s32.totalorder %s34, 11
      %p446 = por %p444, %p445
      %p448 = scmp.ne.s32.totalorder %s431, %s447
      %p449 = scmp.eq.s32.totalorder %s34, 0
      %p450 = por %p448, %p449
      %s451 = ssub.s32 %s36, %s50
      %s452 = ssub.s32 %s35, %s54
      %s453 = sor.u32 %s451, %s452
      %p454 = scmp.eq.s32.totalorder %s453, 0
      %s456 = sadd.s32 %s455, 1
      %s457 = scalar_select %p454, %s455, %s456
      %p460 = pneg %p454
      %p461 = scmp.eq.s32.totalorder %s28, 11
      %p462 = por %p460, %p461
      %p463 = scmp.ne.s32.totalorder %s455, %s458
      %p464 = scmp.eq.s32.totalorder %s28, 0
      %p465 = por %p463, %p464
      %p466 = scmp.ne.s32.totalorder %s455, %s458
      %p467 = scmp.eq.s32.totalorder %s33, 11
      %p468 = por %p466, %p467
      %p469 = scmp.ne.s32.totalorder %s458, %s459
      %p470 = scmp.eq.s32.totalorder %s33, 0
      %p471 = por %p469, %p470
      %p472 = scmp.ne.s32.totalorder %s458, %s459
      %p473 = scmp.eq.s32.totalorder %s34, 11
      %p474 = por %p472, %p473
      %p476 = scmp.ne.s32.totalorder %s459, %s475
      %p477 = scmp.eq.s32.totalorder %s34, 0
      %p478 = por %p476, %p477
      %p479 = scmp.le.s32.totalorder 1, %s28
      %p480 = scmp.lt.s32.totalorder %s28, 13
      %p481 = pnand %p479, %p480
      %p482 = pneg %p481
      // Predicated region
      $region9: #{tpu_custom_call.1} parent=5 // pred_check
        _
      $region10: #{tpu_custom_call.1} parent=5 // pred_check_branch
        %484 = sbr.rel (%p481) target = $region12
      $region11: #{tpu_custom_call.1} parent=5 // pred_region
        %s485 = ssub.s32 %s28, 1
      $region12: #{tpu_custom_call.1} parent=5 // pred_fallthru
        _
      %p486 = scmp.lt.s32.totalorder %s28, 12
      // Predicated region
      $region13: #{tpu_custom_call.1} parent=5 // pred_check
        %p487 = pneg %p486
      $region14: #{tpu_custom_call.1} parent=5 // pred_check_branch
        %489 = sbr.rel (%p487) target = $region16
      $region15: #{tpu_custom_call.1} parent=5 // pred_region
        // Predicated region
        $region17: #{tpu_custom_call.1} parent=15 // pred_check
          %p490 = pneg %p67
        $region18: #{tpu_custom_call.1} parent=15 // pred_check_branch
          %492 = sbr.rel (%p490) target = $region20
        $region19: #{tpu_custom_call.1} parent=15 // pred_region
          %s493 = smul.u32 2, %s35
          %p494 = scmp.lt.s32.totalorder %s493, 3
          %s495 = scalar_select %p494, %s493, 3
          %s496 = smul.addr %s495, 2
          %s497 = smul.addr %s496, 8
          %s498 = scalar_lea.vmem %s0, %s497
          %s499 = smul.u32 2, %s35
        $region20: #{tpu_custom_call.1} parent=15 // pred_fallthru
          _
        // Predicated region
        $region21: #{tpu_custom_call.1} parent=15 // pred_check
          %p500 = pneg %p93
        $region22: #{tpu_custom_call.1} parent=15 // pred_check_branch
          %502 = sbr.rel (%p500) target = $region24
        $region23: #{tpu_custom_call.1} parent=15 // pred_region
          %p503 = scmp.lt.s32.totalorder %s36, 2
          %s504 = scalar_select %p503, %s36, 2
          %s505 = smul.addr %s504, 4
          %s506 = scalar_lea.vmem %s1, %s505
        $region24: #{tpu_custom_call.1} parent=15 // pred_fallthru
          _
        // Predicated region
        $region25: #{tpu_custom_call.1} parent=15 // pred_check
          %p507 = pneg %p119
        $region26: #{tpu_custom_call.1} parent=15 // pred_check_branch
          %509 = sbr.rel (%p507) target = $region28
        $region27: #{tpu_custom_call.1} parent=15 // pred_region
          %p510 = scmp.lt.s32.totalorder %s36, 2
          %s511 = scalar_select %p510, %s36, 2
          %s512 = scalar_lea.vmem %s2, %s511
        $region28: #{tpu_custom_call.1} parent=15 // pred_fallthru
          _
        // Predicated region
        $region29: #{tpu_custom_call.1} parent=15 // pred_check
          %p513 = pneg %p145
        $region30: #{tpu_custom_call.1} parent=15 // pred_check_branch
          %515 = sbr.rel (%p513) target = $region32
        $region31: #{tpu_custom_call.1} parent=15 // pred_region
          %p516 = scmp.lt.s32.totalorder %s36, 2
          %s517 = scalar_select %p516, %s36, 2
          %s518 = scalar_lea.vmem %s3, %s517
        $region32: #{tpu_custom_call.1} parent=15 // pred_fallthru
          _
        // Predicated region
        $region33: #{tpu_custom_call.1} parent=15 // pred_check
          %p519 = pneg %p171
        $region34: #{tpu_custom_call.1} parent=15 // pred_check_branch
          %521 = sbr.rel (%p519) target = $region36
        $region35: #{tpu_custom_call.1} parent=15 // pred_region
          %p522 = scmp.lt.s32.totalorder %s36, 2
          %s523 = scalar_select %p522, %s36, 2
          %s524 = smul.addr %s523, 16
          %s525 = smul.addr %s524, 4
          %s526 = scalar_lea.vmem %s4, %s525
        $region36: #{tpu_custom_call.1} parent=15 // pred_fallthru
          _
        // Predicated region
        $region37: #{tpu_custom_call.1} parent=15 // pred_check
          %p527 = pneg %p197
        $region38: #{tpu_custom_call.1} parent=15 // pred_check_branch
          %529 = sbr.rel (%p527) target = $region40
        $region39: #{tpu_custom_call.1} parent=15 // pred_region
          %p530 = scmp.lt.s32.totalorder %s36, 2
          %s531 = scalar_select %p530, %s36, 2
          %s532 = smul.addr %s531, 2
          %s533 = scalar_lea.vmem %s5, %s532
        $region40: #{tpu_custom_call.1} parent=15 // pred_fallthru
          _
        // Predicated region
        $region41: #{tpu_custom_call.1} parent=15 // pred_check
          %p534 = pneg %p223
        $region42: #{tpu_custom_call.1} parent=15 // pred_check_branch
          %536 = sbr.rel (%p534) target = $region44
        $region43: #{tpu_custom_call.1} parent=15 // pred_region
          %p537 = scmp.lt.s32.totalorder %s36, 2
          %s538 = scalar_select %p537, %s36, 2
          %s539 = smul.addr %s538, 8
          %s540 = smul.addr %s539, 4
          %s541 = scalar_lea.vmem %s6, %s540
        $region44: #{tpu_custom_call.1} parent=15 // pred_fallthru
          _
        // Predicated region
        $region45: #{tpu_custom_call.1} parent=15 // pred_check
          %p542 = pneg %p249
        $region46: #{tpu_custom_call.1} parent=15 // pred_check_branch
          %544 = sbr.rel (%p542) target = $region48
        $region47: #{tpu_custom_call.1} parent=15 // pred_region
          %p545 = scmp.lt.s32.totalorder %s36, 2
          %s546 = scalar_select %p545, %s36, 2
          %s547 = scalar_lea.vmem %s7, %s546
        $region48: #{tpu_custom_call.1} parent=15 // pred_fallthru
          _
        // Predicated region
        $region49: #{tpu_custom_call.1} parent=15 // pred_check
          %p548 = pneg %p275
        $region50: #{tpu_custom_call.1} parent=15 // pred_check_branch
          %550 = sbr.rel (%p548) target = $region52
        $region51: #{tpu_custom_call.1} parent=15 // pred_region
          %p551 = scmp.lt.s32.totalorder %s36, 2
          %s552 = scalar_select %p551, %s36, 2
          %s553 = scalar_lea.vmem %s8, %s552
        $region52: #{tpu_custom_call.1} parent=15 // pred_fallthru
          _
        // Predicated region
        $region53: #{tpu_custom_call.1} parent=15 // pred_check
          %p554 = pneg %p301
        $region54: #{tpu_custom_call.1} parent=15 // pred_check_branch
          %556 = sbr.rel (%p554) target = $region56
        $region55: #{tpu_custom_call.1} parent=15 // pred_region
          %p557 = scmp.lt.s32.totalorder %s36, 2
          %s558 = scalar_select %p557, %s36, 2
          %s559 = scalar_lea.vmem %s9, %s558
        $region56: #{tpu_custom_call.1} parent=15 // pred_fallthru
          _
        // Predicated region
        $region57: #{tpu_custom_call.1} parent=15 // pred_check
          %p560 = pneg %p329
        $region58: #{tpu_custom_call.1} parent=15 // pred_check_branch
          %562 = sbr.rel (%p560) target = $region60
        $region59: #{tpu_custom_call.1} parent=15 // pred_region
          %s563 = sand.u32 %s319, 1
          %s564 = sand.u32 %s319, 1
          %s565 = smul.addr %s564, 32
          %s566 = scalar_lea.vmem [#allocation4], %s565
          %s567 = smul.addr %s36, 16
          %s568 = sadd.s32 %s37, %s567
          %s569 = smul.addr %s568, 4
          %s570 = scalar_lea.vmem %s10, %s569
          // Predicated region
          $region61: #{tpu_custom_call.1} parent=59 // pred_check
            _
          $region62: #{tpu_custom_call.1} parent=59 // pred_check_branch
            %572 = sbr.rel (0) target = $region64
          $region63: #{tpu_custom_call.1} parent=59 // pred_region
            // Predicated region
            $region65: #{tpu_custom_call.1} parent=63 // pred_check
              _
            $region66: #{tpu_custom_call.1} parent=63 // pred_check_branch
              %574 = sbr.rel target = $region68
            $region67: #{tpu_custom_call.1} parent=63 // pred_region
              // Predicated region
              $region80: #{tpu_custom_call.1} parent=67 // pred_check
                _
              $region81: #{tpu_custom_call.1} parent=67 // pred_check_branch
                %603 = sbr.rel (0) target = $region83
              $region82: #{tpu_custom_call.1} parent=67 // pred_region
                loop: start=0, step=1, limit=1
                $region84: #{tpu_custom_call.1} parent=82 // loop_pre_header
                  _
                $region85: #{tpu_custom_call.1} parent=82 // loop_header
                  %s605 = sphi 0, %s609
                  %p606 = scmp.ge.s32.totalorder %s605, 1
                  %s610 = sphi %s570, %s570
                  %s611 = sphi %s566, %s566
                $region86: #{tpu_custom_call.1} parent=82 // loop_header_branch
                  %608 = sbr.rel (%p606) target = $region90
                $region87: #{tpu_custom_call.1} parent=82 // loop_body
                  _
                $region88: #{tpu_custom_call.1} parent=82 // loop_footer
                  %s609 = sadd.s32 1, %s605
                $region89: #{tpu_custom_call.1} parent=82 // loop_footer_branch
                  %604 = sbr.rel target = $region85
                $region90: #{tpu_custom_call.1} parent=82 // loop_exit
                  _
                loop: start=0, step=1, limit=1
                $region91: #{tpu_custom_call.1} parent=82 // loop_pre_header
                  _
                $region92: #{tpu_custom_call.1} parent=82 // loop_header
                  %s614 = sphi 0, %s618
                  %p615 = scmp.ge.s32.totalorder %s614, 1
                  %s619 = sphi %s570, %s570
                  %s620 = sphi %s566, %s566
                $region93: #{tpu_custom_call.1} parent=82 // loop_header_branch
                  %617 = sbr.rel (%p615) target = $region97
                $region94: #{tpu_custom_call.1} parent=82 // loop_body
                  %v621 = vld [vmem:[%s619] sm:$0xf]
                  %622 = vst [vmem:[%s620] sm:$0xf] %v621
                  %v623 = vld [vmem:[%s619 + $0x8] sm:$0xf]
                  %624 = vst [vmem:[%s620 + $0x4] sm:$0xf] %v623
                  %v625 = vld [vmem:[%s619 + $0x10] sm:$0xf]
                  %626 = vst [vmem:[%s620 + $0x8] sm:$0xf] %v625
                  %v627 = vld [vmem:[%s619 + $0x18] sm:$0xf]
                  %628 = vst [vmem:[%s620 + $0xc] sm:$0xf] %v627
                  %v629 = vld [vmem:[%s619 + $0x20] sm:$0xf]
                  %630 = vst [vmem:[%s620 + $0x10] sm:$0xf] %v629
                  %v631 = vld [vmem:[%s619 + $0x28] sm:$0xf]
                  %632 = vst [vmem:[%s620 + $0x14] sm:$0xf] %v631
                  %v633 = vld [vmem:[%s619 + $0x30] sm:$0xf]
                  %634 = vst [vmem:[%s620 + $0x18] sm:$0xf] %v633
                  %v635 = vld [vmem:[%s619 + $0x38] sm:$0xf]
                  %636 = vst [vmem:[%s620 + $0x1c] sm:$0xf] %v635
                $region95: #{tpu_custom_call.1} parent=82 // loop_footer
                  %s618 = sadd.s32 1, %s614
                $region96: #{tpu_custom_call.1} parent=82 // loop_footer_branch
                  %613 = sbr.rel target = $region92
                $region97: #{tpu_custom_call.1} parent=82 // loop_exit
                  _
              $region83: #{tpu_custom_call.1} parent=67 // pred_fallthru
                _
            $region68: #{tpu_custom_call.1} parent=63 // pred_fallthru
              _
            // Predicated region
            $region69: #{tpu_custom_call.1} parent=63 // pred_check
              _
            $region70: #{tpu_custom_call.1} parent=63 // pred_check_branch
              %576 = sbr.rel (0) target = $region72
            $region71: #{tpu_custom_call.1} parent=63 // pred_region
              loop: start=0, step=1, limit=1
              $region73: #{tpu_custom_call.1} parent=71 // loop_pre_header
                _
              $region74: #{tpu_custom_call.1} parent=71 // loop_header
                %s579 = sphi 0, %s583
                %p580 = scmp.ge.s32.totalorder %s579, 1
                %s584 = sphi %s570, %s570
                %s585 = sphi %s566, %s566
              $region75: #{tpu_custom_call.1} parent=71 // loop_header_branch
                %582 = sbr.rel (%p580) target = $region79
              $region76: #{tpu_custom_call.1} parent=71 // loop_body
                %v586 = vld [vmem:[%s584] sm:$0xf]
                %587 = vst [vmem:[%s585] sm:$0xf] %v586
                %v588 = vld [vmem:[%s584 + $0x8] sm:$0xf]
                %589 = vst [vmem:[%s585 + $0x4] sm:$0xf] %v588
                %v590 = vld [vmem:[%s584 + $0x10] sm:$0xf]
                %591 = vst [vmem:[%s585 + $0x8] sm:$0xf] %v590
                %v592 = vld [vmem:[%s584 + $0x18] sm:$0xf]
                %593 = vst [vmem:[%s585 + $0xc] sm:$0xf] %v592
                %v594 = vld [vmem:[%s584 + $0x20] sm:$0xf]
                %595 = vst [vmem:[%s585 + $0x10] sm:$0xf] %v594
                %v596 = vld [vmem:[%s584 + $0x28] sm:$0xf]
                %597 = vst [vmem:[%s585 + $0x14] sm:$0xf] %v596
                %v598 = vld [vmem:[%s584 + $0x30] sm:$0xf]
                %599 = vst [vmem:[%s585 + $0x18] sm:$0xf] %v598
                %v600 = vld [vmem:[%s584 + $0x38] sm:$0xf]
                %601 = vst [vmem:[%s585 + $0x1c] sm:$0xf] %v600
              $region77: #{tpu_custom_call.1} parent=71 // loop_footer
                %s583 = sadd.s32 1, %s579
              $region78: #{tpu_custom_call.1} parent=71 // loop_footer_branch
                %578 = sbr.rel target = $region74
              $region79: #{tpu_custom_call.1} parent=71 // loop_exit
                _
            $region72: #{tpu_custom_call.1} parent=63 // pred_fallthru
              _
          $region64: #{tpu_custom_call.1} parent=59 // pred_fallthru
            _
          %637 = vnop
        $region60: #{tpu_custom_call.1} parent=15 // pred_fallthru
          _
        // Predicated region
        $region98: #{tpu_custom_call.1} parent=15 // pred_check
          %p638 = pneg %p357
        $region99: #{tpu_custom_call.1} parent=15 // pred_check_branch
          %640 = sbr.rel (%p638) target = $region101
        $region100: #{tpu_custom_call.1} parent=15 // pred_region
          %p641 = scmp.lt.s32.totalorder %s36, 2
          %s642 = scalar_select %p641, %s36, 2
          %p643 = scmp.lt.s32.totalorder %s37, 1
          %s644 = scalar_select %p643, %s37, 1
          %s645 = smul.addr %s642, 2
          %s646 = sadd.s32 %s644, %s645
          %s647 = scalar_lea.vmem %s11, %s646
        $region101: #{tpu_custom_call.1} parent=15 // pred_fallthru
          _
        // Predicated region
        $region102: #{tpu_custom_call.1} parent=15 // pred_check
          %p648 = pneg %p385
        $region103: #{tpu_custom_call.1} parent=15 // pred_check_branch
          %650 = sbr.rel (%p648) target = $region105
        $region104: #{tpu_custom_call.1} parent=15 // pred_region
          %s651 = smul.u32 16, %s37
          %p652 = scmp.lt.s32.totalorder %s36, 2
          %s653 = scalar_select %p652, %s36, 2
          %p654 = scmp.lt.s32.totalorder %s651, 31
          %s655 = scalar_select %p654, %s651, 31
          %s656 = smul.addr %s653, 32
          %s657 = sadd.s32 %s655, %s656
          %s658 = smul.addr %s657, 4
          %s659 = scalar_lea.vmem %s12, %s658
          %s660 = smul.u32 16, %s37
        $region105: #{tpu_custom_call.1} parent=15 // pred_fallthru
          _
        // Predicated region
        $region106: #{tpu_custom_call.1} parent=15 // pred_check
          %p661 = pneg %p411
        $region107: #{tpu_custom_call.1} parent=15 // pred_check_branch
          %663 = sbr.rel (%p661) target = $region109
        $region108: #{tpu_custom_call.1} parent=15 // pred_region
          %p664 = scmp.lt.s32.totalorder %s36, 2
          %s665 = scalar_select %p664, %s36, 2
          %s666 = scalar_lea.vmem %s13, %s665
        $region109: #{tpu_custom_call.1} parent=15 // pred_fallthru
          _
      $region16: #{tpu_custom_call.1} parent=5 // pred_fallthru
        _
      %p667 = scmp.le.s32.totalorder 1, %s28
      %p668 = scmp.lt.s32.totalorder %s28, 13
      %p669 = pnand %p667, %p668
      %p670 = pneg %p669
      // Predicated region
      $region110: #{tpu_custom_call.1} parent=5 // pred_check
        _
      $region111: #{tpu_custom_call.1} parent=5 // pred_check_branch
        %672 = sbr.rel (%p669) target = $region113
      $region112: #{tpu_custom_call.1} parent=5 // pred_region
        %s673 = ssub.s32 %s28, 1
        %s674 = sand.u32 %s322, 1
        %s675 = sand.u32 %s322, 1
        %s676 = smul.addr %s675, 32
        %s677 = scalar_lea.vmem [#allocation4], %s676
        // Predicated region
        $region114: #{tpu_custom_call.1} parent=112 // pred_check
          %p678 = pneg %p335
        $region115: #{tpu_custom_call.1} parent=112 // pred_check_branch
          %680 = sbr.rel (%p678) target = $region117
        $region116: #{tpu_custom_call.1} parent=112 // pred_region
          _
        $region117: #{tpu_custom_call.1} parent=112 // pred_fallthru
          _
        %s681 = smul.u32 2, %s38
        %p682 = scmp.lt.s32.totalorder %s681, 3
        %s683 = scalar_select %p682, %s681, 3
        %s684 = smul.addr %s683, 2
        %s685 = smul.addr %s684, 8
        %s686 = scalar_lea.vmem %s0, %s685
        %p687 = pneg %p73
        %p688 = pneg %p70
        %p689 = scmp.lt.s32.totalorder %s39, 2
        %s690 = scalar_select %p689, %s39, 2
        %s691 = smul.addr %s690, 4
        %s692 = scalar_lea.vmem %s1, %s691
        %p693 = pneg %p99
        %p694 = pneg %p96
        %p695 = scmp.lt.s32.totalorder %s39, 2
        %s696 = scalar_select %p695, %s39, 2
        %s697 = scalar_lea.vmem %s2, %s696
        %p698 = pneg %p125
        %p699 = pneg %p122
        %p700 = scmp.lt.s32.totalorder %s39, 2
        %s701 = scalar_select %p700, %s39, 2
        %s702 = scalar_lea.vmem %s3, %s701
        %p703 = pneg %p151
        %p704 = pneg %p148
        %p705 = scmp.lt.s32.totalorder %s39, 2
        %s706 = scalar_select %p705, %s39, 2
        %s707 = smul.addr %s706, 16
        %s708 = smul.addr %s707, 4
        %s709 = scalar_lea.vmem %s4, %s708
        %p710 = pneg %p177
        %p711 = pneg %p174
        %p712 = scmp.lt.s32.totalorder %s39, 2
        %s713 = scalar_select %p712, %s39, 2
        %s714 = smul.addr %s713, 2
        %s715 = scalar_lea.vmem %s5, %s714
        %p716 = pneg %p203
        %p717 = pneg %p200
        %p718 = scmp.lt.s32.totalorder %s39, 2
        %s719 = scalar_select %p718, %s39, 2
        %s720 = smul.addr %s719, 8
        %s721 = smul.addr %s720, 4
        %s722 = scalar_lea.vmem %s6, %s721
        %p723 = pneg %p229
        %p724 = pneg %p226
        %p725 = scmp.lt.s32.totalorder %s39, 2
        %s726 = scalar_select %p725, %s39, 2
        %s727 = scalar_lea.vmem %s7, %s726
        %p728 = pneg %p255
        %p729 = pneg %p252
        %p730 = scmp.lt.s32.totalorder %s39, 2
        %s731 = scalar_select %p730, %s39, 2
        %s732 = scalar_lea.vmem %s8, %s731
        %p733 = pneg %p281
        %p734 = pneg %p278
        %p735 = scmp.lt.s32.totalorder %s39, 2
        %s736 = scalar_select %p735, %s39, 2
        %s737 = scalar_lea.vmem %s9, %s736
        %p738 = pneg %p307
        %p739 = pneg %p304
        %s740 = sand.u32 %s322, 1
        %s741 = sand.u32 %s322, 1
        %s742 = smul.addr %s741, 32
        %s743 = scalar_lea.vmem [#allocation4], %s742
        %p744 = pneg %p335
        %p745 = pneg %p332
        %p746 = scmp.lt.s32.totalorder %s39, 2
        %s747 = scalar_select %p746, %s39, 2
        %p748 = scmp.lt.s32.totalorder %s40, 1
        %s749 = scalar_select %p748, %s40, 1
        %s750 = smul.addr %s747, 2
        %s751 = sadd.s32 %s749, %s750
        %s752 = scalar_lea.vmem %s11, %s751
        %p753 = pneg %p363
        %p754 = pneg %p360
        %s755 = smul.u32 16, %s40
        %p756 = scmp.lt.s32.totalorder %s39, 2
        %s757 = scalar_select %p756, %s39, 2
        %p758 = scmp.lt.s32.totalorder %s755, 31
        %s759 = scalar_select %p758, %s755, 31
        %s760 = smul.addr %s757, 32
        %s761 = sadd.s32 %s759, %s760
        %s762 = smul.addr %s761, 4
        %s763 = scalar_lea.vmem %s12, %s762
        %p764 = pneg %p391
        %p765 = pneg %p388
        %p766 = scmp.lt.s32.totalorder %s39, 2
        %s767 = scalar_select %p766, %s39, 2
        %s768 = scalar_lea.vmem %s13, %s767
        %p769 = pneg %p417
        %p770 = pneg %p414
        %p771 = pneg %p443
        %p772 = pneg %p440
        %s773 = sand.u32 %s430, 1
        %s774 = scalar_lea.sflag [#allocation6], %s773
        %s775 = sand.u32 %s430, 1
        %s776 = smul.addr %s775, 32
        %s777 = scalar_lea.vmem [#allocation5], %s776
        %p778 = pneg %p471
        %p779 = pneg %p468
        %s780 = sand.u32 %s458, 1
        %s781 = scalar_lea.sflag [#allocation8], %s780
        %s782 = sand.u32 %s458, 1
        %s783 = smul.addr %s782, 32
        %s784 = scalar_lea.vmem [#allocation7], %s783
        %s785 = smul.u32 2, %s38
        %p786 = scmp.lt.s32.totalorder %s785, 3
        %s787 = scalar_select %p786, %s785, 3
        %s788 = smul.addr %s787, 2
        %s789 = smul.addr %s788, 8
        %s790 = scalar_lea.vmem %s0, %s789
        %s791 = smul.u32 2, %s38
        %p792 = scmp.lt.s32.totalorder %s39, 2
        %s793 = scalar_select %p792, %s39, 2
        %s794 = smul.addr %s793, 4
        %s795 = scalar_lea.vmem %s1, %s794
        %p796 = scmp.lt.s32.totalorder %s39, 2
        %s797 = scalar_select %p796, %s39, 2
        %s798 = scalar_lea.vmem %s2, %s797
        %p799 = scmp.lt.s32.totalorder %s39, 2
        %s800 = scalar_select %p799, %s39, 2
        %s801 = scalar_lea.vmem %s3, %s800
        %p802 = scmp.lt.s32.totalorder %s39, 2
        %s803 = scalar_select %p802, %s39, 2
        %s804 = smul.addr %s803, 16
        %s805 = smul.addr %s804, 4
        %s806 = scalar_lea.vmem %s4, %s805
        %p807 = scmp.lt.s32.totalorder %s39, 2
        %s808 = scalar_select %p807, %s39, 2
        %s809 = smul.addr %s808, 2
        %s810 = scalar_lea.vmem %s5, %s809
        %p811 = scmp.lt.s32.totalorder %s39, 2
        %s812 = scalar_select %p811, %s39, 2
        %s813 = smul.addr %s812, 8
        %s814 = smul.addr %s813, 4
        %s815 = scalar_lea.vmem %s6, %s814
        %p816 = scmp.lt.s32.totalorder %s39, 2
        %s817 = scalar_select %p816, %s39, 2
        %s818 = scalar_lea.vmem %s7, %s817
        %p819 = scmp.lt.s32.totalorder %s39, 2
        %s820 = scalar_select %p819, %s39, 2
        %s821 = scalar_lea.vmem %s8, %s820
        %p822 = scmp.lt.s32.totalorder %s39, 2
        %s823 = scalar_select %p822, %s39, 2
        %s824 = scalar_lea.vmem %s9, %s823
        %p825 = scmp.lt.s32.totalorder %s39, 2
        %s826 = scalar_select %p825, %s39, 2
        %p827 = scmp.lt.s32.totalorder %s40, 1
        %s828 = scalar_select %p827, %s40, 1
        %s829 = smul.addr %s826, 2
        %s830 = sadd.s32 %s828, %s829
        %s831 = scalar_lea.vmem %s11, %s830
        %s832 = smul.u32 16, %s40
        %p833 = scmp.lt.s32.totalorder %s39, 2
        %s834 = scalar_select %p833, %s39, 2
        %p835 = scmp.lt.s32.totalorder %s832, 31
        %s836 = scalar_select %p835, %s832, 31
        %s837 = smul.addr %s834, 32
        %s838 = sadd.s32 %s836, %s837
        %s839 = smul.addr %s838, 4
        %s840 = scalar_lea.vmem %s12, %s839
        %s841 = smul.u32 16, %s40
        %p842 = scmp.lt.s32.totalorder %s39, 2
        %s843 = scalar_select %p842, %s39, 2
        %s844 = scalar_lea.vmem %s13, %s843
        %s845 = smul.u32 2, %s38
        %s846 = smul.u32 2, %s38
        %p848 = scmp.eq.s32.totalorder %s40, 0
        %p849 = scmp.eq.s32.totalorder %s39, 0
        %p850 = pnand %p848, %p849
        %p851 = pneg %p850
        // Predicated region
        $region118: #{tpu_custom_call.1} parent=112 // pred_check
          _
        $region119: #{tpu_custom_call.1} parent=112 // pred_check_branch
          %853 = sbr.rel (%p850) target = $region121
        $region120: #{tpu_custom_call.1} parent=112 // pred_region
          %v854 = vld [vmem:[%s790] sm:$0xff]
          %v855 = vld [vmem:[%s790 + $0x8] sm:$0xf]
          %v856 = vld [vmem:[%s790 + $0x10] sm:$0xff]
          %v857 = vld [vmem:[%s790 + $0x18] sm:$0xf]
          %vm858 = vcmask 523264
          %859 = vst.msk [vmem:[#allocation2] sm:$0xff] %vm858, %v854
          %vm860 = vcmask 519168
          %861 = vst.msk [vmem:[#allocation2 + $0x8] sm:$0xf] %vm860, %v855
          %862 = vst.msk [vmem:[#allocation2 + $0x10] sm:$0xff] %vm858, %v856
          %863 = vst.msk [vmem:[#allocation2 + $0x18] sm:$0xf] %vm860, %v857
        $region121: #{tpu_custom_call.1} parent=112 // pred_fallthru
          _
        // Predicated region
        $region122: #{tpu_custom_call.1} parent=112 // pred_check
          %p864 = pneg %p848
        $region123: #{tpu_custom_call.1} parent=112 // pred_check_branch
          %866 = sbr.rel (%p864) target = $region125
        $region124: #{tpu_custom_call.1} parent=112 // pred_region
          %v867 = vld [vmem:[%s795] sm:$0xf]
          %vm868 = vcmask 519168
          %869 = vst.msk [vmem:[#allocation2 + $0xc] sm:$0xf] %vm868, %v867
          %870 = vst.msk [vmem:[#allocation2 + $0x1c] sm:$0xf] %vm868, %v867
          %v871 = vld [vmem:[#allocation2] sm:$0xff]
          %v872 = vld [vmem:[#allocation2 + $0x8] sm:$0xff]
          %v873 = vld [vmem:[#allocation2 + $0x10] sm:$0xff]
          %v874 = vld [vmem:[#allocation2 + $0x18] sm:$0xff]
          %v875 = vld [vmem:[%s798] sm:$0x1]
          %v876 = vld [vmem:[%s801] sm:$0x1]
          %vm877 = vcmask 523264
          %v878 = vsel %vm877, %v871, 0.0
          %879 = vadd.xlane.f32.xlu0 %v878
          %v880 = vpop.xlane.xlu0 %879
          %v881 = vsel %vm877, %v872, 0.0
          %882 = vadd.xlane.f32.xlu0 %v881
          %v883 = vpop.xlane.xlu0 %882
          %v884 = vsel %vm877, %v873, 0.0
          %885 = vadd.xlane.f32.xlu0 %v884
          %v886 = vpop.xlane.xlu0 %885
          %v887 = vsel %vm877, %v874, 0.0
          %888 = vadd.xlane.f32.xlu0 %v887
          %v889 = vpop.xlane.xlu0 %888
          %v890 = vrcp.pop 64.0
          %v891 = vmul.f32 %v880, %v890
          %v892 = vmul.f32 %v883, %v890
          %v893 = vmul.f32 %v886, %v890
          %v894 = vmul.f32 %v889, %v890
          %v895 = vsub.f32 %v871, %v891
          %v896 = vsub.f32 %v872, %v892
          %v897 = vsub.f32 %v873, %v893
          %v898 = vsub.f32 %v874, %v894
          %v899 = vmul.f32 %v895, %v895
          %v900 = vmul.f32 %v896, %v896
          %v901 = vmul.f32 %v897, %v897
          %v902 = vmul.f32 %v898, %v898
          %v903 = vsel %vm877, %v899, 0.0
          %904 = vadd.xlane.f32.xlu0 %v903
          %v905 = vpop.xlane.xlu0 %904
          %v906 = vsel %vm877, %v900, 0.0
          %907 = vadd.xlane.f32.xlu0 %v906
          %v908 = vpop.xlane.xlu0 %907
          %v909 = vsel %vm877, %v901, 0.0
          %910 = vadd.xlane.f32.xlu0 %v909
          %v911 = vpop.xlane.xlu0 %910
          %v912 = vsel %vm877, %v902, 0.0
          %913 = vadd.xlane.f32.xlu0 %v912
          %v914 = vpop.xlane.xlu0 %913
          %v915 = vmul.f32 %v905, %v890
          %v916 = vmul.f32 %v908, %v890
          %v917 = vmul.f32 %v911, %v890
          %v918 = vmul.f32 %v914, %v890
          %v919 = vadd.f32 %v915, 1e-05
          %v920 = vadd.f32 %v916, 1e-05
          %v921 = vadd.f32 %v917, 1e-05
          %v922 = vadd.f32 %v918, 1e-05
          %v923 = vrsqrt.pop %v919
          %v924 = vrsqrt.pop %v920
          %v925 = vrsqrt.pop %v921
          %v926 = vrsqrt.pop %v922
          %v927 = vmul.f32 %v895, %v923
          %v928 = vmul.f32 %v896, %v924
          %v929 = vmul.f32 %v897, %v925
          %v930 = vmul.f32 %v898, %v926
          %v932 = vlaneseq
          %v933 = vshrl.u32 %v932, 7
          %v934 = vsub.s32 0, %v933
          %v935 = vrot.slane %v875, %v934
          %v937 = vmul.f32 %v927, %v935
          %v938 = vmul.f32 %v928, %v935
          %v939 = vmul.f32 %v929, %v935
          %v940 = vmul.f32 %v930, %v935
          %v942 = vlaneseq
          %v943 = vshrl.u32 %v942, 7
          %v944 = vsub.s32 0, %v943
          %v945 = vrot.slane %v876, %v944
          %v947 = vadd.f32 %v937, %v945
          %v948 = vadd.f32 %v938, %v945
          %v949 = vadd.f32 %v939, %v945
          %v950 = vadd.f32 %v940, %v945
          %v951 = vpack.c.bf16 %v948, %v947
          %v952 = vpack.c.bf16 %v950, %v949
          %v953 = vld [vmem:[%s806] sm:$0xff]
          %v954 = vld [vmem:[%s806 + $0x8] sm:$0xff]
          %v955 = vld [vmem:[%s806 + $0x10] sm:$0xff]
          %v956 = vld [vmem:[%s806 + $0x18] sm:$0xff]
          %v957 = vld [vmem:[%s806 + $0x20] sm:$0xff]
          %v958 = vld [vmem:[%s806 + $0x28] sm:$0xff]
          %v959 = vld [vmem:[%s806 + $0x30] sm:$0xff]
          %v960 = vld [vmem:[%s806 + $0x38] sm:$0xff]
          %v961 = vld [vmem:[%s810] sm:$0x3]
          %v963 = vlaneseq
          %v964 = vshrl.u32 %v963, 7
          %v965 = vsub.s32 0, %v964
          %v966 = vrot.slane %v961, %v965
          %v967 = vlaneseq
          %v968 = vshrl.u32 %v967, 7
          %v969 = vsub.s32 1, %v968
          %v970 = vrot.slane %v961, %v969
          %v981 = vunpack.c.l.b16 %v953
          %v982 = vunpack.c.h.b16 %v953
          %v983 = vunpack.c.l.b16 %v954
          %v984 = vunpack.c.h.b16 %v954
          %v985 = vunpack.c.l.b16 %v955
          %v986 = vunpack.c.h.b16 %v955
          %v987 = vunpack.c.l.b16 %v956
          %v988 = vunpack.c.h.b16 %v956
          %v989 = vunpack.c.l.b16 %v957
          %v990 = vunpack.c.h.b16 %v957
          %v991 = vunpack.c.l.b16 %v958
          %v992 = vunpack.c.h.b16 %v958
          %v993 = vunpack.c.l.b16 %v959
          %v994 = vunpack.c.h.b16 %v959
          %v995 = vunpack.c.l.b16 %v960
          %v996 = vunpack.c.h.b16 %v960
          %v997 = vpack.c.b16 %v983, %v981
          %v998 = vpack.c.b16 %v984, %v982
          %v999 = vpack.c.b16 %v987, %v985
          %v1000 = vpack.c.b16 %v988, %v986
          %v1001 = vpack.c.b16 %v991, %v989
          %v1002 = vpack.c.b16 %v992, %v990
          %v1003 = vpack.c.b16 %v995, %v993
          %v1004 = vpack.c.b16 %v996, %v994
          %v1014 = vsel %vm877, %v951, 0
          %v1017 = vsel %vm877, %v952, 0
          %1019 = vmatprep.subr.bf16.mxu0 %v998
          %1020 = vmatpush1.bf16.msra.mxu0 %v997
          %1021 = vmatprep.subr.bf16.mxu0 %v1000
          %1022 = vmatpush1.bf16.msra.mxu0 %v999
          %1023 = vmatprep.subr.bf16.mxu0 %v1002
          %1024 = vmatpush1.bf16.msra.mxu0 %v1001
          %1025 = vmatprep.subr.bf16.mxu0 %v1004
          %1026 = vmatpush1.bf16.msra.mxu0 %v1003
          %1027 = vmatprep.subr.bf16.mxu0 0
          %1028 = vmatpush1.bf16.msra.mxu0 0
          %1029 = vmatprep.subr.bf16.mxu0 0
          %1030 = vmatpush1.bf16.msra.mxu0 0
          %1031 = vmatprep.subr.bf16.mxu0 0
          %1032 = vmatpush1.bf16.msra.mxu0 0
          %1033 = vmatprep.subr.bf16.mxu0 0
          %1034 = vmatpush1.bf16.msra.mxu0 0
          %1035 = vmatprep.subr.bf16.mxu0 0
          %1036 = vmatpush1.bf16.msra.mxu0 0
          %1037 = vmatprep.subr.bf16.mxu0 0
          %1038 = vmatpush1.bf16.msra.mxu0 0
          %1039 = vmatprep.subr.bf16.mxu0 0
          %1040 = vmatpush1.bf16.msra.mxu0 0
          %1041 = vmatprep.subr.bf16.mxu0 0
          %1042 = vmatpush1.bf16.msra.mxu0 0
          %1043 = vmatprep.subr.bf16.mxu0 0
          %1044 = vmatpush1.bf16.msra.mxu0 0
          %1045 = vmatprep.subr.bf16.mxu0 0
          %1046 = vmatpush1.bf16.msra.mxu0 0
          %1047 = vmatprep.subr.bf16.mxu0 0
          %1048 = vmatpush1.bf16.msra.mxu0 0
          %1049 = vmatprep.subr.bf16.mxu0 0
          %1050 = vmatpush1.bf16.msra.mxu0 0
          %1051 = vmatprep.mubr.bf16.mxu0 0
          %1052 = vmatmul.mubr.bf16.gmra.mrb[0].mxu0 %v1014
          %v1053 = vpop.f32.mrb[0].mxu0
          %v1054 = vadd.f32 %v966, %v1053
          %v1055 = vpop.f32.mrb[0].mxu0
          %v1056 = vadd.f32 %v970, %v1055
          %v1057 = vpop.f32.mrb[0].mxu0
          %v1058 = vadd.f32 %v966, %v1057
          %v1059 = vpop.f32.mrb[0].mxu0
          %v1060 = vadd.f32 %v970, %v1059
          %1061 = vmatprep.mubr.bf16.mxu0 0
          %1062 = vmatmul.mubr.bf16.gmra.mrb[0].mxu0 %v1017
          %v1063 = vpop.f32.mrb[0].mxu0
          %v1064 = vadd.f32 %v966, %v1063
          %v1065 = vpop.f32.mrb[0].mxu0
          %v1066 = vadd.f32 %v970, %v1065
          %v1067 = vpop.f32.mrb[0].mxu0
          %v1068 = vadd.f32 %v966, %v1067
          %v1069 = vpop.f32.mrb[0].mxu0
          %v1070 = vadd.f32 %v970, %v1069
          %1071 = vdwg.mxu0
          %1076 = vrot.lane.b32.xlu0 %v1054, 112
          %v1077 = vpop.permute.xlu0 %1076
          %1078 = vrot.lane.b32.xlu0 %v1058, 112
          %v1079 = vpop.permute.xlu0 %1078
          %1080 = vrot.lane.b32.xlu0 %v1064, 112
          %v1081 = vpop.permute.xlu0 %1080
          %1082 = vrot.lane.b32.xlu0 %v1068, 112
          %v1083 = vpop.permute.xlu0 %1082
          %1088 = vrot.lane.b32.xlu0 %v1054, 96
          %v1089 = vpop.permute.xlu0 %1088
          %1090 = vrot.lane.b32.xlu0 %v1058, 96
          %v1091 = vpop.permute.xlu0 %1090
          %1092 = vrot.lane.b32.xlu0 %v1064, 96
          %v1093 = vpop.permute.xlu0 %1092
          %1094 = vrot.lane.b32.xlu0 %v1068, 96
          %v1095 = vpop.permute.xlu0 %1094
          %1100 = vrot.lane.b32.xlu0 %v1054, 80
          %v1101 = vpop.permute.xlu0 %1100
          %1102 = vrot.lane.b32.xlu0 %v1058, 80
          %v1103 = vpop.permute.xlu0 %1102
          %1104 = vrot.lane.b32.xlu0 %v1064, 80
          %v1105 = vpop.permute.xlu0 %1104
          %1106 = vrot.lane.b32.xlu0 %v1068, 80
          %v1107 = vpop.permute.xlu0 %1106
          %v1112 = vcombine.low %v1054, %v1089
          %v1113 = vcombine.high %v1054, %v1089
          %v1115 = vunpack.c.l.s4 1983009808
          %v1116 = vunpack.c.0.s8 %v1115
          %v1117 = vlaneseq
          %v1118 = vshrl.u32 %v1117, 7
          %v1119 = vsub.s32 %v1116, %v1118
          %v1120 = vrot.slane %v1112, %v1119
          %v1122 = vunpack.c.l.s4 1983009808
          %v1123 = vunpack.c.0.s8 %v1122
          %v1124 = vlaneseq
          %v1125 = vshrl.u32 %v1124, 7
          %v1126 = vsub.s32 %v1123, %v1125
          %v1127 = vrot.slane %v1113, %v1126
          %v1128 = vcombine.low %v1077, %v1101
          %v1129 = vcombine.high %v1077, %v1101
          %v1131 = vunpack.c.l.s4 1983009808
          %v1132 = vunpack.c.0.s8 %v1131
          %v1133 = vlaneseq
          %v1134 = vshrl.u32 %v1133, 7
          %v1135 = vsub.s32 %v1132, %v1134
          %v1136 = vrot.slane %v1128, %v1135
          %v1138 = vunpack.c.l.s4 1983009808
          %v1139 = vunpack.c.0.s8 %v1138
          %v1140 = vlaneseq
          %v1141 = vshrl.u32 %v1140, 7
          %v1142 = vsub.s32 %v1139, %v1141
          %v1143 = vrot.slane %v1129, %v1142
          %v1144 = vcombine.low %v1120, %v1136
          %v1145 = vcombine.high %v1120, %v1136
          %v1147 = vunpack.c.l.s4 1934713408
          %v1148 = vunpack.c.0.s8 %v1147
          %v1149 = vlaneseq
          %v1150 = vshrl.u32 %v1149, 7
          %v1151 = vsub.s32 %v1148, %v1150
          %v1152 = vrot.slane %v1144, %v1151
          %v1154 = vunpack.c.l.s4 1934713408
          %v1155 = vunpack.c.0.s8 %v1154
          %v1156 = vlaneseq
          %v1157 = vshrl.u32 %v1156, 7
          %v1158 = vsub.s32 %v1155, %v1157
          %v1159 = vrot.slane %v1145, %v1158
          %v1160 = vcombine.low %v1127, %v1143
          %v1161 = vcombine.high %v1127, %v1143
          %v1163 = vunpack.c.l.s4 1934713408
          %v1164 = vunpack.c.0.s8 %v1163
          %v1165 = vlaneseq
          %v1166 = vshrl.u32 %v1165, 7
          %v1167 = vsub.s32 %v1164, %v1166
          %v1168 = vrot.slane %v1160, %v1167
          %v1170 = vunpack.c.l.s4 1934713408
          %v1171 = vunpack.c.0.s8 %v1170
          %v1172 = vlaneseq
          %v1173 = vshrl.u32 %v1172, 7
          %v1174 = vsub.s32 %v1171, %v1173
          %v1175 = vrot.slane %v1161, %v1174
          %v1176 = vcombine.high %v1152, 0.0
          %v1177 = vcombine.high %v1159, 0.0
          %v1178 = vcombine.high %v1168, 0.0
          %v1179 = vcombine.high %v1175, 0.0
          %v1180 = vcombine.low %v1058, %v1091
          %v1181 = vcombine.high %v1058, %v1091
          %v1183 = vunpack.c.l.s4 1983009808
          %v1184 = vunpack.c.0.s8 %v1183
          %v1185 = vlaneseq
          %v1186 = vshrl.u32 %v1185, 7
          %v1187 = vsub.s32 %v1184, %v1186
          %v1188 = vrot.slane %v1180, %v1187
          %v1190 = vunpack.c.l.s4 1983009808
          %v1191 = vunpack.c.0.s8 %v1190
          %v1192 = vlaneseq
          %v1193 = vshrl.u32 %v1192, 7
          %v1194 = vsub.s32 %v1191, %v1193
          %v1195 = vrot.slane %v1181, %v1194
          %v1196 = vcombine.low %v1079, %v1103
          %v1197 = vcombine.high %v1079, %v1103
          %v1199 = vunpack.c.l.s4 1983009808
          %v1200 = vunpack.c.0.s8 %v1199
          %v1201 = vlaneseq
          %v1202 = vshrl.u32 %v1201, 7
          %v1203 = vsub.s32 %v1200, %v1202
          %v1204 = vrot.slane %v1196, %v1203
          %v1206 = vunpack.c.l.s4 1983009808
          %v1207 = vunpack.c.0.s8 %v1206
          %v1208 = vlaneseq
          %v1209 = vshrl.u32 %v1208, 7
          %v1210 = vsub.s32 %v1207, %v1209
          %v1211 = vrot.slane %v1197, %v1210
          %v1212 = vcombine.low %v1188, %v1204
          %v1213 = vcombine.high %v1188, %v1204
          %v1215 = vunpack.c.l.s4 1934713408
          %v1216 = vunpack.c.0.s8 %v1215
          %v1217 = vlaneseq
          %v1218 = vshrl.u32 %v1217, 7
          %v1219 = vsub.s32 %v1216, %v1218
          %v1220 = vrot.slane %v1212, %v1219
          %v1222 = vunpack.c.l.s4 1934713408
          %v1223 = vunpack.c.0.s8 %v1222
          %v1224 = vlaneseq
          %v1225 = vshrl.u32 %v1224, 7
          %v1226 = vsub.s32 %v1223, %v1225
          %v1227 = vrot.slane %v1213, %v1226
          %v1228 = vcombine.low %v1195, %v1211
          %v1229 = vcombine.high %v1195, %v1211
          %v1231 = vunpack.c.l.s4 1934713408
          %v1232 = vunpack.c.0.s8 %v1231
          %v1233 = vlaneseq
          %v1234 = vshrl.u32 %v1233, 7
          %v1235 = vsub.s32 %v1232, %v1234
          %v1236 = vrot.slane %v1228, %v1235
          %v1238 = vunpack.c.l.s4 1934713408
          %v1239 = vunpack.c.0.s8 %v1238
          %v1240 = vlaneseq
          %v1241 = vshrl.u32 %v1240, 7
          %v1242 = vsub.s32 %v1239, %v1241
          %v1243 = vrot.slane %v1229, %v1242
          %v1244 = vcombine.high %v1220, 0.0
          %v1245 = vcombine.high %v1227, 0.0
          %v1246 = vcombine.high %v1236, 0.0
          %v1247 = vcombine.high %v1243, 0.0
          %v1248 = vcombine.low %v1064, %v1093
          %v1249 = vcombine.high %v1064, %v1093
          %v1251 = vunpack.c.l.s4 1983009808
          %v1252 = vunpack.c.0.s8 %v1251
          %v1253 = vlaneseq
          %v1254 = vshrl.u32 %v1253, 7
          %v1255 = vsub.s32 %v1252, %v1254
          %v1256 = vrot.slane %v1248, %v1255
          %v1258 = vunpack.c.l.s4 1983009808
          %v1259 = vunpack.c.0.s8 %v1258
          %v1260 = vlaneseq
          %v1261 = vshrl.u32 %v1260, 7
          %v1262 = vsub.s32 %v1259, %v1261
          %v1263 = vrot.slane %v1249, %v1262
          %v1264 = vcombine.low %v1081, %v1105
          %v1265 = vcombine.high %v1081, %v1105
          %v1267 = vunpack.c.l.s4 1983009808
          %v1268 = vunpack.c.0.s8 %v1267
          %v1269 = vlaneseq
          %v1270 = vshrl.u32 %v1269, 7
          %v1271 = vsub.s32 %v1268, %v1270
          %v1272 = vrot.slane %v1264, %v1271
          %v1274 = vunpack.c.l.s4 1983009808
          %v1275 = vunpack.c.0.s8 %v1274
          %v1276 = vlaneseq
          %v1277 = vshrl.u32 %v1276, 7
          %v1278 = vsub.s32 %v1275, %v1277
          %v1279 = vrot.slane %v1265, %v1278
          %v1280 = vcombine.low %v1256, %v1272
          %v1281 = vcombine.high %v1256, %v1272
          %v1283 = vunpack.c.l.s4 1934713408
          %v1284 = vunpack.c.0.s8 %v1283
          %v1285 = vlaneseq
          %v1286 = vshrl.u32 %v1285, 7
          %v1287 = vsub.s32 %v1284, %v1286
          %v1288 = vrot.slane %v1280, %v1287
          %v1290 = vunpack.c.l.s4 1934713408
          %v1291 = vunpack.c.0.s8 %v1290
          %v1292 = vlaneseq
          %v1293 = vshrl.u32 %v1292, 7
          %v1294 = vsub.s32 %v1291, %v1293
          %v1295 = vrot.slane %v1281, %v1294
          %v1296 = vcombine.low %v1263, %v1279
          %v1297 = vcombine.high %v1263, %v1279
          %v1299 = vunpack.c.l.s4 1934713408
          %v1300 = vunpack.c.0.s8 %v1299
          %v1301 = vlaneseq
          %v1302 = vshrl.u32 %v1301, 7
          %v1303 = vsub.s32 %v1300, %v1302
          %v1304 = vrot.slane %v1296, %v1303
          %v1306 = vunpack.c.l.s4 1934713408
          %v1307 = vunpack.c.0.s8 %v1306
          %v1308 = vlaneseq
          %v1309 = vshrl.u32 %v1308, 7
          %v1310 = vsub.s32 %v1307, %v1309
          %v1311 = vrot.slane %v1297, %v1310
          %v1312 = vcombine.high %v1288, 0.0
          %v1313 = vcombine.high %v1295, 0.0
          %v1314 = vcombine.high %v1304, 0.0
          %v1315 = vcombine.high %v1311, 0.0
          %v1316 = vcombine.low %v1068, %v1095
          %v1317 = vcombine.high %v1068, %v1095
          %v1319 = vunpack.c.l.s4 1983009808
          %v1320 = vunpack.c.0.s8 %v1319
          %v1321 = vlaneseq
          %v1322 = vshrl.u32 %v1321, 7
          %v1323 = vsub.s32 %v1320, %v1322
          %v1324 = vrot.slane %v1316, %v1323
          %v1326 = vunpack.c.l.s4 1983009808
          %v1327 = vunpack.c.0.s8 %v1326
          %v1328 = vlaneseq
          %v1329 = vshrl.u32 %v1328, 7
          %v1330 = vsub.s32 %v1327, %v1329
          %v1331 = vrot.slane %v1317, %v1330
          %v1332 = vcombine.low %v1083, %v1107
          %v1333 = vcombine.high %v1083, %v1107
          %v1335 = vunpack.c.l.s4 1983009808
          %v1336 = vunpack.c.0.s8 %v1335
          %v1337 = vlaneseq
          %v1338 = vshrl.u32 %v1337, 7
          %v1339 = vsub.s32 %v1336, %v1338
          %v1340 = vrot.slane %v1332, %v1339
          %v1342 = vunpack.c.l.s4 1983009808
          %v1343 = vunpack.c.0.s8 %v1342
          %v1344 = vlaneseq
          %v1345 = vshrl.u32 %v1344, 7
          %v1346 = vsub.s32 %v1343, %v1345
          %v1347 = vrot.slane %v1333, %v1346
          %v1348 = vcombine.low %v1324, %v1340
          %v1349 = vcombine.high %v1324, %v1340
          %v1351 = vunpack.c.l.s4 1934713408
          %v1352 = vunpack.c.0.s8 %v1351
          %v1353 = vlaneseq
          %v1354 = vshrl.u32 %v1353, 7
          %v1355 = vsub.s32 %v1352, %v1354
          %v1356 = vrot.slane %v1348, %v1355
          %v1358 = vunpack.c.l.s4 1934713408
          %v1359 = vunpack.c.0.s8 %v1358
          %v1360 = vlaneseq
          %v1361 = vshrl.u32 %v1360, 7
          %v1362 = vsub.s32 %v1359, %v1361
          %v1363 = vrot.slane %v1349, %v1362
          %v1364 = vcombine.low %v1331, %v1347
          %v1365 = vcombine.high %v1331, %v1347
          %v1367 = vunpack.c.l.s4 1934713408
          %v1368 = vunpack.c.0.s8 %v1367
          %v1369 = vlaneseq
          %v1370 = vshrl.u32 %v1369, 7
          %v1371 = vsub.s32 %v1368, %v1370
          %v1372 = vrot.slane %v1364, %v1371
          %v1374 = vunpack.c.l.s4 1934713408
          %v1375 = vunpack.c.0.s8 %v1374
          %v1376 = vlaneseq
          %v1377 = vshrl.u32 %v1376, 7
          %v1378 = vsub.s32 %v1375, %v1377
          %v1379 = vrot.slane %v1365, %v1378
          %v1380 = vcombine.high %v1356, 0.0
          %v1381 = vcombine.high %v1363, 0.0
          %v1382 = vcombine.high %v1372, 0.0
          %v1383 = vcombine.high %v1379, 0.0
          %v1384 = vcombine.low %v1152, %v1159
          %v1386 = vunpack.c.l.s4 1983009808
          %v1387 = vunpack.c.0.s8 %v1386
          %v1388 = vlaneseq
          %v1389 = vshrl.u32 %v1388, 7
          %v1390 = vsub.s32 %v1387, %v1389
          %v1391 = vrot.slane %v1384, %v1390
          %v1392 = vcombine.low %v1176, %v1177
          %v1394 = vunpack.c.l.s4 1983009808
          %v1395 = vunpack.c.0.s8 %v1394
          %v1396 = vlaneseq
          %v1397 = vshrl.u32 %v1396, 7
          %v1398 = vsub.s32 %v1395, %v1397
          %v1399 = vrot.slane %v1392, %v1398
          %v1400 = vcombine.low %v1168, %v1175
          %v1402 = vunpack.c.l.s4 1983009808
          %v1403 = vunpack.c.0.s8 %v1402
          %v1404 = vlaneseq
          %v1405 = vshrl.u32 %v1404, 7
          %v1406 = vsub.s32 %v1403, %v1405
          %v1407 = vrot.slane %v1400, %v1406
          %v1408 = vcombine.low %v1178, %v1179
          %v1410 = vunpack.c.l.s4 1983009808
          %v1411 = vunpack.c.0.s8 %v1410
          %v1412 = vlaneseq
          %v1413 = vshrl.u32 %v1412, 7
          %v1414 = vsub.s32 %v1411, %v1413
          %v1415 = vrot.slane %v1408, %v1414
          %v1416 = vcombine.low %v1391, %v1399
          %v1417 = vcombine.high %v1391, %v1399
          %v1419 = vunpack.c.l.s4 1934713408
          %v1420 = vunpack.c.0.s8 %v1419
          %v1421 = vlaneseq
          %v1422 = vshrl.u32 %v1421, 7
          %v1423 = vsub.s32 %v1420, %v1422
          %v1424 = vrot.slane %v1416, %v1423
          %v1426 = vunpack.c.l.s4 1934713408
          %v1427 = vunpack.c.0.s8 %v1426
          %v1428 = vlaneseq
          %v1429 = vshrl.u32 %v1428, 7
          %v1430 = vsub.s32 %v1427, %v1429
          %v1431 = vrot.slane %v1417, %v1430
          %v1432 = vcombine.low %v1407, %v1415
          %v1433 = vcombine.high %v1407, %v1415
          %v1435 = vunpack.c.l.s4 1934713408
          %v1436 = vunpack.c.0.s8 %v1435
          %v1437 = vlaneseq
          %v1438 = vshrl.u32 %v1437, 7
          %v1439 = vsub.s32 %v1436, %v1438
          %v1440 = vrot.slane %v1432, %v1439
          %v1442 = vunpack.c.l.s4 1934713408
          %v1443 = vunpack.c.0.s8 %v1442
          %v1444 = vlaneseq
          %v1445 = vshrl.u32 %v1444, 7
          %v1446 = vsub.s32 %v1443, %v1445
          %v1447 = vrot.slane %v1433, %v1446
          %v1448 = vcombine.low %v1424, %v1440
          %v1449 = vcombine.high %v1424, %v1440
          %v1450 = vcombine.low %v1431, %v1447
          %v1451 = vcombine.high %v1431, %v1447
          %v1452 = vcombine.low %v1220, %v1227
          %v1454 = vunpack.c.l.s4 1983009808
          %v1455 = vunpack.c.0.s8 %v1454
          %v1456 = vlaneseq
          %v1457 = vshrl.u32 %v1456, 7
          %v1458 = vsub.s32 %v1455, %v1457
          %v1459 = vrot.slane %v1452, %v1458
          %v1460 = vcombine.low %v1244, %v1245
          %v1462 = vunpack.c.l.s4 1983009808
          %v1463 = vunpack.c.0.s8 %v1462
          %v1464 = vlaneseq
          %v1465 = vshrl.u32 %v1464, 7
          %v1466 = vsub.s32 %v1463, %v1465
          %v1467 = vrot.slane %v1460, %v1466
          %v1468 = vcombine.low %v1236, %v1243
          %v1470 = vunpack.c.l.s4 1983009808
          %v1471 = vunpack.c.0.s8 %v1470
          %v1472 = vlaneseq
          %v1473 = vshrl.u32 %v1472, 7
          %v1474 = vsub.s32 %v1471, %v1473
          %v1475 = vrot.slane %v1468, %v1474
          %v1476 = vcombine.low %v1246, %v1247
          %v1478 = vunpack.c.l.s4 1983009808
          %v1479 = vunpack.c.0.s8 %v1478
          %v1480 = vlaneseq
          %v1481 = vshrl.u32 %v1480, 7
          %v1482 = vsub.s32 %v1479, %v1481
          %v1483 = vrot.slane %v1476, %v1482
          %v1484 = vcombine.low %v1459, %v1467
          %v1485 = vcombine.high %v1459, %v1467
          %v1487 = vunpack.c.l.s4 1934713408
          %v1488 = vunpack.c.0.s8 %v1487
          %v1489 = vlaneseq
          %v1490 = vshrl.u32 %v1489, 7
          %v1491 = vsub.s32 %v1488, %v1490
          %v1492 = vrot.slane %v1484, %v1491
          %v1494 = vunpack.c.l.s4 1934713408
          %v1495 = vunpack.c.0.s8 %v1494
          %v1496 = vlaneseq
          %v1497 = vshrl.u32 %v1496, 7
          %v1498 = vsub.s32 %v1495, %v1497
          %v1499 = vrot.slane %v1485, %v1498
          %v1500 = vcombine.low %v1475, %v1483
          %v1501 = vcombine.high %v1475, %v1483
          %v1503 = vunpack.c.l.s4 1934713408
          %v1504 = vunpack.c.0.s8 %v1503
          %v1505 = vlaneseq
          %v1506 = vshrl.u32 %v1505, 7
          %v1507 = vsub.s32 %v1504, %v1506
          %v1508 = vrot.slane %v1500, %v1507
          %v1510 = vunpack.c.l.s4 1934713408
          %v1511 = vunpack.c.0.s8 %v1510
          %v1512 = vlaneseq
          %v1513 = vshrl.u32 %v1512, 7
          %v1514 = vsub.s32 %v1511, %v1513
          %v1515 = vrot.slane %v1501, %v1514
          %v1516 = vcombine.low %v1492, %v1508
          %v1517 = vcombine.high %v1492, %v1508
          %v1518 = vcombine.low %v1499, %v1515
          %v1519 = vcombine.high %v1499, %v1515
          %v1520 = vcombine.low %v1288, %v1295
          %v1522 = vunpack.c.l.s4 1983009808
          %v1523 = vunpack.c.0.s8 %v1522
          %v1524 = vlaneseq
          %v1525 = vshrl.u32 %v1524, 7
          %v1526 = vsub.s32 %v1523, %v1525
          %v1527 = vrot.slane %v1520, %v1526
          %v1528 = vcombine.low %v1312, %v1313
          %v1530 = vunpack.c.l.s4 1983009808
          %v1531 = vunpack.c.0.s8 %v1530
          %v1532 = vlaneseq
          %v1533 = vshrl.u32 %v1532, 7
          %v1534 = vsub.s32 %v1531, %v1533
          %v1535 = vrot.slane %v1528, %v1534
          %v1536 = vcombine.low %v1304, %v1311
          %v1538 = vunpack.c.l.s4 1983009808
          %v1539 = vunpack.c.0.s8 %v1538
          %v1540 = vlaneseq
          %v1541 = vshrl.u32 %v1540, 7
          %v1542 = vsub.s32 %v1539, %v1541
          %v1543 = vrot.slane %v1536, %v1542
          %v1544 = vcombine.low %v1314, %v1315
          %v1546 = vunpack.c.l.s4 1983009808
          %v1547 = vunpack.c.0.s8 %v1546
          %v1548 = vlaneseq
          %v1549 = vshrl.u32 %v1548, 7
          %v1550 = vsub.s32 %v1547, %v1549
          %v1551 = vrot.slane %v1544, %v1550
          %v1552 = vcombine.low %v1527, %v1535
          %v1553 = vcombine.high %v1527, %v1535
          %v1555 = vunpack.c.l.s4 1934713408
          %v1556 = vunpack.c.0.s8 %v1555
          %v1557 = vlaneseq
          %v1558 = vshrl.u32 %v1557, 7
          %v1559 = vsub.s32 %v1556, %v1558
          %v1560 = vrot.slane %v1552, %v1559
          %v1562 = vunpack.c.l.s4 1934713408
          %v1563 = vunpack.c.0.s8 %v1562
          %v1564 = vlaneseq
          %v1565 = vshrl.u32 %v1564, 7
          %v1566 = vsub.s32 %v1563, %v1565
          %v1567 = vrot.slane %v1553, %v1566
          %v1568 = vcombine.low %v1543, %v1551
          %v1569 = vcombine.high %v1543, %v1551
          %v1571 = vunpack.c.l.s4 1934713408
          %v1572 = vunpack.c.0.s8 %v1571
          %v1573 = vlaneseq
          %v1574 = vshrl.u32 %v1573, 7
          %v1575 = vsub.s32 %v1572, %v1574
          %v1576 = vrot.slane %v1568, %v1575
          %v1578 = vunpack.c.l.s4 1934713408
          %v1579 = vunpack.c.0.s8 %v1578
          %v1580 = vlaneseq
          %v1581 = vshrl.u32 %v1580, 7
          %v1582 = vsub.s32 %v1579, %v1581
          %v1583 = vrot.slane %v1569, %v1582
          %v1584 = vcombine.low %v1560, %v1576
          %v1585 = vcombine.high %v1560, %v1576
          %v1586 = vcombine.low %v1567, %v1583
          %v1587 = vcombine.high %v1567, %v1583
          %v1588 = vcombine.low %v1356, %v1363
          %v1590 = vunpack.c.l.s4 1983009808
          %v1591 = vunpack.c.0.s8 %v1590
          %v1592 = vlaneseq
          %v1593 = vshrl.u32 %v1592, 7
          %v1594 = vsub.s32 %v1591, %v1593
          %v1595 = vrot.slane %v1588, %v1594
          %v1596 = vcombine.low %v1380, %v1381
          %v1598 = vunpack.c.l.s4 1983009808
          %v1599 = vunpack.c.0.s8 %v1598
          %v1600 = vlaneseq
          %v1601 = vshrl.u32 %v1600, 7
          %v1602 = vsub.s32 %v1599, %v1601
          %v1603 = vrot.slane %v1596, %v1602
          %v1604 = vcombine.low %v1372, %v1379
          %v1606 = vunpack.c.l.s4 1983009808
          %v1607 = vunpack.c.0.s8 %v1606
          %v1608 = vlaneseq
          %v1609 = vshrl.u32 %v1608, 7
          %v1610 = vsub.s32 %v1607, %v1609
          %v1611 = vrot.slane %v1604, %v1610
          %v1612 = vcombine.low %v1382, %v1383
          %v1614 = vunpack.c.l.s4 1983009808
          %v1615 = vunpack.c.0.s8 %v1614
          %v1616 = vlaneseq
          %v1617 = vshrl.u32 %v1616, 7
          %v1618 = vsub.s32 %v1615, %v1617
          %v1619 = vrot.slane %v1612, %v1618
          %v1620 = vcombine.low %v1595, %v1603
          %v1621 = vcombine.high %v1595, %v1603
          %v1623 = vunpack.c.l.s4 1934713408
          %v1624 = vunpack.c.0.s8 %v1623
          %v1625 = vlaneseq
          %v1626 = vshrl.u32 %v1625, 7
          %v1627 = vsub.s32 %v1624, %v1626
          %v1628 = vrot.slane %v1620, %v1627
          %v1630 = vunpack.c.l.s4 1934713408
          %v1631 = vunpack.c.0.s8 %v1630
          %v1632 = vlaneseq
          %v1633 = vshrl.u32 %v1632, 7
          %v1634 = vsub.s32 %v1631, %v1633
          %v1635 = vrot.slane %v1621, %v1634
          %v1636 = vcombine.low %v1611, %v1619
          %v1637 = vcombine.high %v1611, %v1619
          %v1639 = vunpack.c.l.s4 1934713408
          %v1640 = vunpack.c.0.s8 %v1639
          %v1641 = vlaneseq
          %v1642 = vshrl.u32 %v1641, 7
          %v1643 = vsub.s32 %v1640, %v1642
          %v1644 = vrot.slane %v1636, %v1643
          %v1646 = vunpack.c.l.s4 1934713408
          %v1647 = vunpack.c.0.s8 %v1646
          %v1648 = vlaneseq
          %v1649 = vshrl.u32 %v1648, 7
          %v1650 = vsub.s32 %v1647, %v1649
          %v1651 = vrot.slane %v1637, %v1650
          %v1652 = vcombine.low %v1628, %v1644
          %v1653 = vcombine.high %v1628, %v1644
          %v1654 = vcombine.low %v1635, %v1651
          %v1655 = vcombine.high %v1635, %v1651
          %v1656 = vpack.c.bf16 %v1516, %v1448
          %v1657 = vpack.c.bf16 %v1517, %v1449
          %v1658 = vpack.c.bf16 %v1518, %v1450
          %v1659 = vpack.c.bf16 %v1519, %v1451
          %v1660 = vpack.c.bf16 %v1652, %v1584
          %v1661 = vpack.c.bf16 %v1653, %v1585
          %v1662 = vpack.c.bf16 %v1654, %v1586
          %v1663 = vpack.c.bf16 %v1655, %v1587
          %1664 = vrot.lane.b32.xlu0 %v1054, 64
          %v1665 = vpop.permute.xlu0 %1664
          %1666 = vrot.lane.b32.xlu0 %v1058, 64
          %v1667 = vpop.permute.xlu0 %1666
          %1668 = vrot.lane.b32.xlu0 %v1064, 64
          %v1669 = vpop.permute.xlu0 %1668
          %1670 = vrot.lane.b32.xlu0 %v1068, 64
          %v1671 = vpop.permute.xlu0 %1670
          %1672 = vrot.lane.b32.xlu0 %v1077, 64
          %v1673 = vpop.permute.xlu0 %1672
          %1674 = vrot.lane.b32.xlu0 %v1079, 64
          %v1675 = vpop.permute.xlu0 %1674
          %1676 = vrot.lane.b32.xlu0 %v1081, 64
          %v1677 = vpop.permute.xlu0 %1676
          %1678 = vrot.lane.b32.xlu0 %v1083, 64
          %v1679 = vpop.permute.xlu0 %1678
          %1680 = vrot.lane.b32.xlu0 %v1089, 64
          %v1681 = vpop.permute.xlu0 %1680
          %1682 = vrot.lane.b32.xlu0 %v1091, 64
          %v1683 = vpop.permute.xlu0 %1682
          %1684 = vrot.lane.b32.xlu0 %v1093, 64
          %v1685 = vpop.permute.xlu0 %1684
          %1686 = vrot.lane.b32.xlu0 %v1095, 64
          %v1687 = vpop.permute.xlu0 %1686
          %1688 = vrot.lane.b32.xlu0 %v1101, 64
          %v1689 = vpop.permute.xlu0 %1688
          %1690 = vrot.lane.b32.xlu0 %v1103, 64
          %v1691 = vpop.permute.xlu0 %1690
          %1692 = vrot.lane.b32.xlu0 %v1105, 64
          %v1693 = vpop.permute.xlu0 %1692
          %1694 = vrot.lane.b32.xlu0 %v1107, 64
          %v1695 = vpop.permute.xlu0 %1694
          %v1712 = vcombine.low %v1665, %v1681
          %v1713 = vcombine.high %v1665, %v1681
          %v1715 = vunpack.c.l.s4 1983009808
          %v1716 = vunpack.c.0.s8 %v1715
          %v1717 = vlaneseq
          %v1718 = vshrl.u32 %v1717, 7
          %v1719 = vsub.s32 %v1716, %v1718
          %v1720 = vrot.slane %v1712, %v1719
          %v1722 = vunpack.c.l.s4 1983009808
          %v1723 = vunpack.c.0.s8 %v1722
          %v1724 = vlaneseq
          %v1725 = vshrl.u32 %v1724, 7
          %v1726 = vsub.s32 %v1723, %v1725
          %v1727 = vrot.slane %v1713, %v1726
          %v1728 = vcombine.low %v1673, %v1689
          %v1729 = vcombine.high %v1673, %v1689
          %v1731 = vunpack.c.l.s4 1983009808
          %v1732 = vunpack.c.0.s8 %v1731
          %v1733 = vlaneseq
          %v1734 = vshrl.u32 %v1733, 7
          %v1735 = vsub.s32 %v1732, %v1734
          %v1736 = vrot.slane %v1728, %v1735
          %v1738 = vunpack.c.l.s4 1983009808
          %v1739 = vunpack.c.0.s8 %v1738
          %v1740 = vlaneseq
          %v1741 = vshrl.u32 %v1740, 7
          %v1742 = vsub.s32 %v1739, %v1741
          %v1743 = vrot.slane %v1729, %v1742
          %v1744 = vcombine.low %v1720, %v1736
          %v1745 = vcombine.high %v1720, %v1736
          %v1747 = vunpack.c.l.s4 1934713408
          %v1748 = vunpack.c.0.s8 %v1747
          %v1749 = vlaneseq
          %v1750 = vshrl.u32 %v1749, 7
          %v1751 = vsub.s32 %v1748, %v1750
          %v1752 = vrot.slane %v1744, %v1751
          %v1754 = vunpack.c.l.s4 1934713408
          %v1755 = vunpack.c.0.s8 %v1754
          %v1756 = vlaneseq
          %v1757 = vshrl.u32 %v1756, 7
          %v1758 = vsub.s32 %v1755, %v1757
          %v1759 = vrot.slane %v1745, %v1758
          %v1760 = vcombine.low %v1727, %v1743
          %v1761 = vcombine.high %v1727, %v1743
          %v1763 = vunpack.c.l.s4 1934713408
          %v1764 = vunpack.c.0.s8 %v1763
          %v1765 = vlaneseq
          %v1766 = vshrl.u32 %v1765, 7
          %v1767 = vsub.s32 %v1764, %v1766
          %v1768 = vrot.slane %v1760, %v1767
          %v1770 = vunpack.c.l.s4 1934713408
          %v1771 = vunpack.c.0.s8 %v1770
          %v1772 = vlaneseq
          %v1773 = vshrl.u32 %v1772, 7
          %v1774 = vsub.s32 %v1771, %v1773
          %v1775 = vrot.slane %v1761, %v1774
          %v1776 = vcombine.high %v1752, 0.0
          %v1777 = vcombine.high %v1759, 0.0
          %v1778 = vcombine.high %v1768, 0.0
          %v1779 = vcombine.high %v1775, 0.0
          %v1780 = vcombine.low %v1667, %v1683
          %v1781 = vcombine.high %v1667, %v1683
          %v1783 = vunpack.c.l.s4 1983009808
          %v1784 = vunpack.c.0.s8 %v1783
          %v1785 = vlaneseq
          %v1786 = vshrl.u32 %v1785, 7
          %v1787 = vsub.s32 %v1784, %v1786
          %v1788 = vrot.slane %v1780, %v1787
          %v1790 = vunpack.c.l.s4 1983009808
          %v1791 = vunpack.c.0.s8 %v1790
          %v1792 = vlaneseq
          %v1793 = vshrl.u32 %v1792, 7
          %v1794 = vsub.s32 %v1791, %v1793
          %v1795 = vrot.slane %v1781, %v1794
          %v1796 = vcombine.low %v1675, %v1691
          %v1797 = vcombine.high %v1675, %v1691
          %v1799 = vunpack.c.l.s4 1983009808
          %v1800 = vunpack.c.0.s8 %v1799
          %v1801 = vlaneseq
          %v1802 = vshrl.u32 %v1801, 7
          %v1803 = vsub.s32 %v1800, %v1802
          %v1804 = vrot.slane %v1796, %v1803
          %v1806 = vunpack.c.l.s4 1983009808
          %v1807 = vunpack.c.0.s8 %v1806
          %v1808 = vlaneseq
          %v1809 = vshrl.u32 %v1808, 7
          %v1810 = vsub.s32 %v1807, %v1809
          %v1811 = vrot.slane %v1797, %v1810
          %v1812 = vcombine.low %v1788, %v1804
          %v1813 = vcombine.high %v1788, %v1804
          %v1815 = vunpack.c.l.s4 1934713408
          %v1816 = vunpack.c.0.s8 %v1815
          %v1817 = vlaneseq
          %v1818 = vshrl.u32 %v1817, 7
          %v1819 = vsub.s32 %v1816, %v1818
          %v1820 = vrot.slane %v1812, %v1819
          %v1822 = vunpack.c.l.s4 1934713408
          %v1823 = vunpack.c.0.s8 %v1822
          %v1824 = vlaneseq
          %v1825 = vshrl.u32 %v1824, 7
          %v1826 = vsub.s32 %v1823, %v1825
          %v1827 = vrot.slane %v1813, %v1826
          %v1828 = vcombine.low %v1795, %v1811
          %v1829 = vcombine.high %v1795, %v1811
          %v1831 = vunpack.c.l.s4 1934713408
          %v1832 = vunpack.c.0.s8 %v1831
          %v1833 = vlaneseq
          %v1834 = vshrl.u32 %v1833, 7
          %v1835 = vsub.s32 %v1832, %v1834
          %v1836 = vrot.slane %v1828, %v1835
          %v1838 = vunpack.c.l.s4 1934713408
          %v1839 = vunpack.c.0.s8 %v1838
          %v1840 = vlaneseq
          %v1841 = vshrl.u32 %v1840, 7
          %v1842 = vsub.s32 %v1839, %v1841
          %v1843 = vrot.slane %v1829, %v1842
          %v1844 = vcombine.high %v1820, 0.0
          %v1845 = vcombine.high %v1827, 0.0
          %v1846 = vcombine.high %v1836, 0.0
          %v1847 = vcombine.high %v1843, 0.0
          %v1848 = vcombine.low %v1669, %v1685
          %v1849 = vcombine.high %v1669, %v1685
          %v1851 = vunpack.c.l.s4 1983009808
          %v1852 = vunpack.c.0.s8 %v1851
          %v1853 = vlaneseq
          %v1854 = vshrl.u32 %v1853, 7
          %v1855 = vsub.s32 %v1852, %v1854
          %v1856 = vrot.slane %v1848, %v1855
          %v1858 = vunpack.c.l.s4 1983009808
          %v1859 = vunpack.c.0.s8 %v1858
          %v1860 = vlaneseq
          %v1861 = vshrl.u32 %v1860, 7
          %v1862 = vsub.s32 %v1859, %v1861
          %v1863 = vrot.slane %v1849, %v1862
          %v1864 = vcombine.low %v1677, %v1693
          %v1865 = vcombine.high %v1677, %v1693
          %v1867 = vunpack.c.l.s4 1983009808
          %v1868 = vunpack.c.0.s8 %v1867
          %v1869 = vlaneseq
          %v1870 = vshrl.u32 %v1869, 7
          %v1871 = vsub.s32 %v1868, %v1870
          %v1872 = vrot.slane %v1864, %v1871
          %v1874 = vunpack.c.l.s4 1983009808
          %v1875 = vunpack.c.0.s8 %v1874
          %v1876 = vlaneseq
          %v1877 = vshrl.u32 %v1876, 7
          %v1878 = vsub.s32 %v1875, %v1877
          %v1879 = vrot.slane %v1865, %v1878
          %v1880 = vcombine.low %v1856, %v1872
          %v1881 = vcombine.high %v1856, %v1872
          %v1883 = vunpack.c.l.s4 1934713408
          %v1884 = vunpack.c.0.s8 %v1883
          %v1885 = vlaneseq
          %v1886 = vshrl.u32 %v1885, 7
          %v1887 = vsub.s32 %v1884, %v1886
          %v1888 = vrot.slane %v1880, %v1887
          %v1890 = vunpack.c.l.s4 1934713408
          %v1891 = vunpack.c.0.s8 %v1890
          %v1892 = vlaneseq
          %v1893 = vshrl.u32 %v1892, 7
          %v1894 = vsub.s32 %v1891, %v1893
          %v1895 = vrot.slane %v1881, %v1894
          %v1896 = vcombine.low %v1863, %v1879
          %v1897 = vcombine.high %v1863, %v1879
          %v1899 = vunpack.c.l.s4 1934713408
          %v1900 = vunpack.c.0.s8 %v1899
          %v1901 = vlaneseq
          %v1902 = vshrl.u32 %v1901, 7
          %v1903 = vsub.s32 %v1900, %v1902
          %v1904 = vrot.slane %v1896, %v1903
          %v1906 = vunpack.c.l.s4 1934713408
          %v1907 = vunpack.c.0.s8 %v1906
          %v1908 = vlaneseq
          %v1909 = vshrl.u32 %v1908, 7
          %v1910 = vsub.s32 %v1907, %v1909
          %v1911 = vrot.slane %v1897, %v1910
          %v1912 = vcombine.high %v1888, 0.0
          %v1913 = vcombine.high %v1895, 0.0
          %v1914 = vcombine.high %v1904, 0.0
          %v1915 = vcombine.high %v1911, 0.0
          %v1916 = vcombine.low %v1671, %v1687
          %v1917 = vcombine.high %v1671, %v1687
          %v1919 = vunpack.c.l.s4 1983009808
          %v1920 = vunpack.c.0.s8 %v1919
          %v1921 = vlaneseq
          %v1922 = vshrl.u32 %v1921, 7
          %v1923 = vsub.s32 %v1920, %v1922
          %v1924 = vrot.slane %v1916, %v1923
          %v1926 = vunpack.c.l.s4 1983009808
          %v1927 = vunpack.c.0.s8 %v1926
          %v1928 = vlaneseq
          %v1929 = vshrl.u32 %v1928, 7
          %v1930 = vsub.s32 %v1927, %v1929
          %v1931 = vrot.slane %v1917, %v1930
          %v1932 = vcombine.low %v1679, %v1695
          %v1933 = vcombine.high %v1679, %v1695
          %v1935 = vunpack.c.l.s4 1983009808
          %v1936 = vunpack.c.0.s8 %v1935
          %v1937 = vlaneseq
          %v1938 = vshrl.u32 %v1937, 7
          %v1939 = vsub.s32 %v1936, %v1938
          %v1940 = vrot.slane %v1932, %v1939
          %v1942 = vunpack.c.l.s4 1983009808
          %v1943 = vunpack.c.0.s8 %v1942
          %v1944 = vlaneseq
          %v1945 = vshrl.u32 %v1944, 7
          %v1946 = vsub.s32 %v1943, %v1945
          %v1947 = vrot.slane %v1933, %v1946
          %v1948 = vcombine.low %v1924, %v1940
          %v1949 = vcombine.high %v1924, %v1940
          %v1951 = vunpack.c.l.s4 1934713408
          %v1952 = vunpack.c.0.s8 %v1951
          %v1953 = vlaneseq
          %v1954 = vshrl.u32 %v1953, 7
          %v1955 = vsub.s32 %v1952, %v1954
          %v1956 = vrot.slane %v1948, %v1955
          %v1958 = vunpack.c.l.s4 1934713408
          %v1959 = vunpack.c.0.s8 %v1958
          %v1960 = vlaneseq
          %v1961 = vshrl.u32 %v1960, 7
          %v1962 = vsub.s32 %v1959, %v1961
          %v1963 = vrot.slane %v1949, %v1962
          %v1964 = vcombine.low %v1931, %v1947
          %v1965 = vcombine.high %v1931, %v1947
          %v1967 = vunpack.c.l.s4 1934713408
          %v1968 = vunpack.c.0.s8 %v1967
          %v1969 = vlaneseq
          %v1970 = vshrl.u32 %v1969, 7
          %v1971 = vsub.s32 %v1968, %v1970
          %v1972 = vrot.slane %v1964, %v1971
          %v1974 = vunpack.c.l.s4 1934713408
          %v1975 = vunpack.c.0.s8 %v1974
          %v1976 = vlaneseq
          %v1977 = vshrl.u32 %v1976, 7
          %v1978 = vsub.s32 %v1975, %v1977
          %v1979 = vrot.slane %v1965, %v1978
          %v1980 = vcombine.high %v1956, 0.0
          %v1981 = vcombine.high %v1963, 0.0
          %v1982 = vcombine.high %v1972, 0.0
          %v1983 = vcombine.high %v1979, 0.0
          %v1984 = vcombine.low %v1752, %v1759
          %v1986 = vunpack.c.l.s4 1983009808
          %v1987 = vunpack.c.0.s8 %v1986
          %v1988 = vlaneseq
          %v1989 = vshrl.u32 %v1988, 7
          %v1990 = vsub.s32 %v1987, %v1989
          %v1991 = vrot.slane %v1984, %v1990
          %v1992 = vcombine.low %v1776, %v1777
          %v1994 = vunpack.c.l.s4 1983009808
          %v1995 = vunpack.c.0.s8 %v1994
          %v1996 = vlaneseq
          %v1997 = vshrl.u32 %v1996, 7
          %v1998 = vsub.s32 %v1995, %v1997
          %v1999 = vrot.slane %v1992, %v1998
          %v2000 = vcombine.low %v1768, %v1775
          %v2002 = vunpack.c.l.s4 1983009808
          %v2003 = vunpack.c.0.s8 %v2002
          %v2004 = vlaneseq
          %v2005 = vshrl.u32 %v2004, 7
          %v2006 = vsub.s32 %v2003, %v2005
          %v2007 = vrot.slane %v2000, %v2006
          %v2008 = vcombine.low %v1778, %v1779
          %v2010 = vunpack.c.l.s4 1983009808
          %v2011 = vunpack.c.0.s8 %v2010
          %v2012 = vlaneseq
          %v2013 = vshrl.u32 %v2012, 7
          %v2014 = vsub.s32 %v2011, %v2013
          %v2015 = vrot.slane %v2008, %v2014
          %v2016 = vcombine.low %v1991, %v1999
          %v2017 = vcombine.high %v1991, %v1999
          %v2019 = vunpack.c.l.s4 1934713408
          %v2020 = vunpack.c.0.s8 %v2019
          %v2021 = vlaneseq
          %v2022 = vshrl.u32 %v2021, 7
          %v2023 = vsub.s32 %v2020, %v2022
          %v2024 = vrot.slane %v2016, %v2023
          %v2026 = vunpack.c.l.s4 1934713408
          %v2027 = vunpack.c.0.s8 %v2026
          %v2028 = vlaneseq
          %v2029 = vshrl.u32 %v2028, 7
          %v2030 = vsub.s32 %v2027, %v2029
          %v2031 = vrot.slane %v2017, %v2030
          %v2032 = vcombine.low %v2007, %v2015
          %v2033 = vcombine.high %v2007, %v2015
          %v2035 = vunpack.c.l.s4 1934713408
          %v2036 = vunpack.c.0.s8 %v2035
          %v2037 = vlaneseq
          %v2038 = vshrl.u32 %v2037, 7
          %v2039 = vsub.s32 %v2036, %v2038
          %v2040 = vrot.slane %v2032, %v2039
          %v2042 = vunpack.c.l.s4 1934713408
          %v2043 = vunpack.c.0.s8 %v2042
          %v2044 = vlaneseq
          %v2045 = vshrl.u32 %v2044, 7
          %v2046 = vsub.s32 %v2043, %v2045
          %v2047 = vrot.slane %v2033, %v2046
          %v2048 = vcombine.low %v2024, %v2040
          %v2049 = vcombine.high %v2024, %v2040
          %v2050 = vcombine.low %v2031, %v2047
          %v2051 = vcombine.high %v2031, %v2047
          %v2052 = vcombine.low %v1820, %v1827
          %v2054 = vunpack.c.l.s4 1983009808
          %v2055 = vunpack.c.0.s8 %v2054
          %v2056 = vlaneseq
          %v2057 = vshrl.u32 %v2056, 7
          %v2058 = vsub.s32 %v2055, %v2057
          %v2059 = vrot.slane %v2052, %v2058
          %v2060 = vcombine.low %v1844, %v1845
          %v2062 = vunpack.c.l.s4 1983009808
          %v2063 = vunpack.c.0.s8 %v2062
          %v2064 = vlaneseq
          %v2065 = vshrl.u32 %v2064, 7
          %v2066 = vsub.s32 %v2063, %v2065
          %v2067 = vrot.slane %v2060, %v2066
          %v2068 = vcombine.low %v1836, %v1843
          %v2070 = vunpack.c.l.s4 1983009808
          %v2071 = vunpack.c.0.s8 %v2070
          %v2072 = vlaneseq
          %v2073 = vshrl.u32 %v2072, 7
          %v2074 = vsub.s32 %v2071, %v2073
          %v2075 = vrot.slane %v2068, %v2074
          %v2076 = vcombine.low %v1846, %v1847
          %v2078 = vunpack.c.l.s4 1983009808
          %v2079 = vunpack.c.0.s8 %v2078
          %v2080 = vlaneseq
          %v2081 = vshrl.u32 %v2080, 7
          %v2082 = vsub.s32 %v2079, %v2081
          %v2083 = vrot.slane %v2076, %v2082
          %v2084 = vcombine.low %v2059, %v2067
          %v2085 = vcombine.high %v2059, %v2067
          %v2087 = vunpack.c.l.s4 1934713408
          %v2088 = vunpack.c.0.s8 %v2087
          %v2089 = vlaneseq
          %v2090 = vshrl.u32 %v2089, 7
          %v2091 = vsub.s32 %v2088, %v2090
          %v2092 = vrot.slane %v2084, %v2091
          %v2094 = vunpack.c.l.s4 1934713408
          %v2095 = vunpack.c.0.s8 %v2094
          %v2096 = vlaneseq
          %v2097 = vshrl.u32 %v2096, 7
          %v2098 = vsub.s32 %v2095, %v2097
          %v2099 = vrot.slane %v2085, %v2098
          %v2100 = vcombine.low %v2075, %v2083
          %v2101 = vcombine.high %v2075, %v2083
          %v2103 = vunpack.c.l.s4 1934713408
          %v2104 = vunpack.c.0.s8 %v2103
          %v2105 = vlaneseq
          %v2106 = vshrl.u32 %v2105, 7
          %v2107 = vsub.s32 %v2104, %v2106
          %v2108 = vrot.slane %v2100, %v2107
          %v2110 = vunpack.c.l.s4 1934713408
          %v2111 = vunpack.c.0.s8 %v2110
          %v2112 = vlaneseq
          %v2113 = vshrl.u32 %v2112, 7
          %v2114 = vsub.s32 %v2111, %v2113
          %v2115 = vrot.slane %v2101, %v2114
          %v2116 = vcombine.low %v2092, %v2108
          %v2117 = vcombine.high %v2092, %v2108
          %v2118 = vcombine.low %v2099, %v2115
          %v2119 = vcombine.high %v2099, %v2115
          %v2120 = vcombine.low %v1888, %v1895
          %v2122 = vunpack.c.l.s4 1983009808
          %v2123 = vunpack.c.0.s8 %v2122
          %v2124 = vlaneseq
          %v2125 = vshrl.u32 %v2124, 7
          %v2126 = vsub.s32 %v2123, %v2125
          %v2127 = vrot.slane %v2120, %v2126
          %v2128 = vcombine.low %v1912, %v1913
          %v2130 = vunpack.c.l.s4 1983009808
          %v2131 = vunpack.c.0.s8 %v2130
          %v2132 = vlaneseq
          %v2133 = vshrl.u32 %v2132, 7
          %v2134 = vsub.s32 %v2131, %v2133
          %v2135 = vrot.slane %v2128, %v2134
          %v2136 = vcombine.low %v1904, %v1911
          %v2138 = vunpack.c.l.s4 1983009808
          %v2139 = vunpack.c.0.s8 %v2138
          %v2140 = vlaneseq
          %v2141 = vshrl.u32 %v2140, 7
          %v2142 = vsub.s32 %v2139, %v2141
          %v2143 = vrot.slane %v2136, %v2142
          %v2144 = vcombine.low %v1914, %v1915
          %v2146 = vunpack.c.l.s4 1983009808
          %v2147 = vunpack.c.0.s8 %v2146
          %v2148 = vlaneseq
          %v2149 = vshrl.u32 %v2148, 7
          %v2150 = vsub.s32 %v2147, %v2149
          %v2151 = vrot.slane %v2144, %v2150
          %v2152 = vcombine.low %v2127, %v2135
          %v2153 = vcombine.high %v2127, %v2135
          %v2155 = vunpack.c.l.s4 1934713408
          %v2156 = vunpack.c.0.s8 %v2155
          %v2157 = vlaneseq
          %v2158 = vshrl.u32 %v2157, 7
          %v2159 = vsub.s32 %v2156, %v2158
          %v2160 = vrot.slane %v2152, %v2159
          %v2162 = vunpack.c.l.s4 1934713408
          %v2163 = vunpack.c.0.s8 %v2162
          %v2164 = vlaneseq
          %v2165 = vshrl.u32 %v2164, 7
          %v2166 = vsub.s32 %v2163, %v2165
          %v2167 = vrot.slane %v2153, %v2166
          %v2168 = vcombine.low %v2143, %v2151
          %v2169 = vcombine.high %v2143, %v2151
          %v2171 = vunpack.c.l.s4 1934713408
          %v2172 = vunpack.c.0.s8 %v2171
          %v2173 = vlaneseq
          %v2174 = vshrl.u32 %v2173, 7
          %v2175 = vsub.s32 %v2172, %v2174
          %v2176 = vrot.slane %v2168, %v2175
          %v2178 = vunpack.c.l.s4 1934713408
          %v2179 = vunpack.c.0.s8 %v2178
          %v2180 = vlaneseq
          %v2181 = vshrl.u32 %v2180, 7
          %v2182 = vsub.s32 %v2179, %v2181
          %v2183 = vrot.slane %v2169, %v2182
          %v2184 = vcombine.low %v2160, %v2176
          %v2185 = vcombine.high %v2160, %v2176
          %v2186 = vcombine.low %v2167, %v2183
          %v2187 = vcombine.high %v2167, %v2183
          %v2188 = vcombine.low %v1956, %v1963
          %v2190 = vunpack.c.l.s4 1983009808
          %v2191 = vunpack.c.0.s8 %v2190
          %v2192 = vlaneseq
          %v2193 = vshrl.u32 %v2192, 7
          %v2194 = vsub.s32 %v2191, %v2193
          %v2195 = vrot.slane %v2188, %v2194
          %v2196 = vcombine.low %v1980, %v1981
          %v2198 = vunpack.c.l.s4 1983009808
          %v2199 = vunpack.c.0.s8 %v2198
          %v2200 = vlaneseq
          %v2201 = vshrl.u32 %v2200, 7
          %v2202 = vsub.s32 %v2199, %v2201
          %v2203 = vrot.slane %v2196, %v2202
          %v2204 = vcombine.low %v1972, %v1979
          %v2206 = vunpack.c.l.s4 1983009808
          %v2207 = vunpack.c.0.s8 %v2206
          %v2208 = vlaneseq
          %v2209 = vshrl.u32 %v2208, 7
          %v2210 = vsub.s32 %v2207, %v2209
          %v2211 = vrot.slane %v2204, %v2210
          %v2212 = vcombine.low %v1982, %v1983
          %v2214 = vunpack.c.l.s4 1983009808
          %v2215 = vunpack.c.0.s8 %v2214
          %v2216 = vlaneseq
          %v2217 = vshrl.u32 %v2216, 7
          %v2218 = vsub.s32 %v2215, %v2217
          %v2219 = vrot.slane %v2212, %v2218
          %v2220 = vcombine.low %v2195, %v2203
          %v2221 = vcombine.high %v2195, %v2203
          %v2223 = vunpack.c.l.s4 1934713408
          %v2224 = vunpack.c.0.s8 %v2223
          %v2225 = vlaneseq
          %v2226 = vshrl.u32 %v2225, 7
          %v2227 = vsub.s32 %v2224, %v2226
          %v2228 = vrot.slane %v2220, %v2227
          %v2230 = vunpack.c.l.s4 1934713408
          %v2231 = vunpack.c.0.s8 %v2230
          %v2232 = vlaneseq
          %v2233 = vshrl.u32 %v2232, 7
          %v2234 = vsub.s32 %v2231, %v2233
          %v2235 = vrot.slane %v2221, %v2234
          %v2236 = vcombine.low %v2211, %v2219
          %v2237 = vcombine.high %v2211, %v2219
          %v2239 = vunpack.c.l.s4 1934713408
          %v2240 = vunpack.c.0.s8 %v2239
          %v2241 = vlaneseq
          %v2242 = vshrl.u32 %v2241, 7
          %v2243 = vsub.s32 %v2240, %v2242
          %v2244 = vrot.slane %v2236, %v2243
          %v2246 = vunpack.c.l.s4 1934713408
          %v2247 = vunpack.c.0.s8 %v2246
          %v2248 = vlaneseq
          %v2249 = vshrl.u32 %v2248, 7
          %v2250 = vsub.s32 %v2247, %v2249
          %v2251 = vrot.slane %v2237, %v2250
          %v2252 = vcombine.low %v2228, %v2244
          %v2253 = vcombine.high %v2228, %v2244
          %v2254 = vcombine.low %v2235, %v2251
          %v2255 = vcombine.high %v2235, %v2251
          %v2256 = vpack.c.bf16 %v2116, %v2048
          %v2257 = vpack.c.bf16 %v2117, %v2049
          %v2258 = vpack.c.bf16 %v2118, %v2050
          %v2259 = vpack.c.bf16 %v2119, %v2051
          %v2260 = vpack.c.bf16 %v2252, %v2184
          %v2261 = vpack.c.bf16 %v2253, %v2185
          %v2262 = vpack.c.bf16 %v2254, %v2186
          %v2263 = vpack.c.bf16 %v2255, %v2187
          %2268 = vrot.lane.b32.xlu0 %v1056, 112
          %v2269 = vpop.permute.xlu0 %2268
          %2270 = vrot.lane.b32.xlu0 %v1060, 112
          %v2271 = vpop.permute.xlu0 %2270
          %2272 = vrot.lane.b32.xlu0 %v1066, 112
          %v2273 = vpop.permute.xlu0 %2272
          %2274 = vrot.lane.b32.xlu0 %v1070, 112
          %v2275 = vpop.permute.xlu0 %2274
          %2280 = vrot.lane.b32.xlu0 %v1056, 96
          %v2281 = vpop.permute.xlu0 %2280
          %2282 = vrot.lane.b32.xlu0 %v1060, 96
          %v2283 = vpop.permute.xlu0 %2282
          %2284 = vrot.lane.b32.xlu0 %v1066, 96
          %v2285 = vpop.permute.xlu0 %2284
          %2286 = vrot.lane.b32.xlu0 %v1070, 96
          %v2287 = vpop.permute.xlu0 %2286
          %2292 = vrot.lane.b32.xlu0 %v1056, 80
          %v2293 = vpop.permute.xlu0 %2292
          %2294 = vrot.lane.b32.xlu0 %v1060, 80
          %v2295 = vpop.permute.xlu0 %2294
          %2296 = vrot.lane.b32.xlu0 %v1066, 80
          %v2297 = vpop.permute.xlu0 %2296
          %2298 = vrot.lane.b32.xlu0 %v1070, 80
          %v2299 = vpop.permute.xlu0 %2298
          %v2304 = vcombine.low %v1056, %v2281
          %v2305 = vcombine.high %v1056, %v2281
          %v2307 = vunpack.c.l.s4 1983009808
          %v2308 = vunpack.c.0.s8 %v2307
          %v2309 = vlaneseq
          %v2310 = vshrl.u32 %v2309, 7
          %v2311 = vsub.s32 %v2308, %v2310
          %v2312 = vrot.slane %v2304, %v2311
          %v2314 = vunpack.c.l.s4 1983009808
          %v2315 = vunpack.c.0.s8 %v2314
          %v2316 = vlaneseq
          %v2317 = vshrl.u32 %v2316, 7
          %v2318 = vsub.s32 %v2315, %v2317
          %v2319 = vrot.slane %v2305, %v2318
          %v2320 = vcombine.low %v2269, %v2293
          %v2321 = vcombine.high %v2269, %v2293
          %v2323 = vunpack.c.l.s4 1983009808
          %v2324 = vunpack.c.0.s8 %v2323
          %v2325 = vlaneseq
          %v2326 = vshrl.u32 %v2325, 7
          %v2327 = vsub.s32 %v2324, %v2326
          %v2328 = vrot.slane %v2320, %v2327
          %v2330 = vunpack.c.l.s4 1983009808
          %v2331 = vunpack.c.0.s8 %v2330
          %v2332 = vlaneseq
          %v2333 = vshrl.u32 %v2332, 7
          %v2334 = vsub.s32 %v2331, %v2333
          %v2335 = vrot.slane %v2321, %v2334
          %v2336 = vcombine.low %v2312, %v2328
          %v2337 = vcombine.high %v2312, %v2328
          %v2339 = vunpack.c.l.s4 1934713408
          %v2340 = vunpack.c.0.s8 %v2339
          %v2341 = vlaneseq
          %v2342 = vshrl.u32 %v2341, 7
          %v2343 = vsub.s32 %v2340, %v2342
          %v2344 = vrot.slane %v2336, %v2343
          %v2346 = vunpack.c.l.s4 1934713408
          %v2347 = vunpack.c.0.s8 %v2346
          %v2348 = vlaneseq
          %v2349 = vshrl.u32 %v2348, 7
          %v2350 = vsub.s32 %v2347, %v2349
          %v2351 = vrot.slane %v2337, %v2350
          %v2352 = vcombine.low %v2319, %v2335
          %v2353 = vcombine.high %v2319, %v2335
          %v2355 = vunpack.c.l.s4 1934713408
          %v2356 = vunpack.c.0.s8 %v2355
          %v2357 = vlaneseq
          %v2358 = vshrl.u32 %v2357, 7
          %v2359 = vsub.s32 %v2356, %v2358
          %v2360 = vrot.slane %v2352, %v2359
          %v2362 = vunpack.c.l.s4 1934713408
          %v2363 = vunpack.c.0.s8 %v2362
          %v2364 = vlaneseq
          %v2365 = vshrl.u32 %v2364, 7
          %v2366 = vsub.s32 %v2363, %v2365
          %v2367 = vrot.slane %v2353, %v2366
          %v2368 = vcombine.high %v2344, 0.0
          %v2369 = vcombine.high %v2351, 0.0
          %v2370 = vcombine.high %v2360, 0.0
          %v2371 = vcombine.high %v2367, 0.0
          %v2372 = vcombine.low %v1060, %v2283
          %v2373 = vcombine.high %v1060, %v2283
          %v2375 = vunpack.c.l.s4 1983009808
          %v2376 = vunpack.c.0.s8 %v2375
          %v2377 = vlaneseq
          %v2378 = vshrl.u32 %v2377, 7
          %v2379 = vsub.s32 %v2376, %v2378
          %v2380 = vrot.slane %v2372, %v2379
          %v2382 = vunpack.c.l.s4 1983009808
          %v2383 = vunpack.c.0.s8 %v2382
          %v2384 = vlaneseq
          %v2385 = vshrl.u32 %v2384, 7
          %v2386 = vsub.s32 %v2383, %v2385
          %v2387 = vrot.slane %v2373, %v2386
          %v2388 = vcombine.low %v2271, %v2295
          %v2389 = vcombine.high %v2271, %v2295
          %v2391 = vunpack.c.l.s4 1983009808
          %v2392 = vunpack.c.0.s8 %v2391
          %v2393 = vlaneseq
          %v2394 = vshrl.u32 %v2393, 7
          %v2395 = vsub.s32 %v2392, %v2394
          %v2396 = vrot.slane %v2388, %v2395
          %v2398 = vunpack.c.l.s4 1983009808
          %v2399 = vunpack.c.0.s8 %v2398
          %v2400 = vlaneseq
          %v2401 = vshrl.u32 %v2400, 7
          %v2402 = vsub.s32 %v2399, %v2401
          %v2403 = vrot.slane %v2389, %v2402
          %v2404 = vcombine.low %v2380, %v2396
          %v2405 = vcombine.high %v2380, %v2396
          %v2407 = vunpack.c.l.s4 1934713408
          %v2408 = vunpack.c.0.s8 %v2407
          %v2409 = vlaneseq
          %v2410 = vshrl.u32 %v2409, 7
          %v2411 = vsub.s32 %v2408, %v2410
          %v2412 = vrot.slane %v2404, %v2411
          %v2414 = vunpack.c.l.s4 1934713408
          %v2415 = vunpack.c.0.s8 %v2414
          %v2416 = vlaneseq
          %v2417 = vshrl.u32 %v2416, 7
          %v2418 = vsub.s32 %v2415, %v2417
          %v2419 = vrot.slane %v2405, %v2418
          %v2420 = vcombine.low %v2387, %v2403
          %v2421 = vcombine.high %v2387, %v2403
          %v2423 = vunpack.c.l.s4 1934713408
          %v2424 = vunpack.c.0.s8 %v2423
          %v2425 = vlaneseq
          %v2426 = vshrl.u32 %v2425, 7
          %v2427 = vsub.s32 %v2424, %v2426
          %v2428 = vrot.slane %v2420, %v2427
          %v2430 = vunpack.c.l.s4 1934713408
          %v2431 = vunpack.c.0.s8 %v2430
          %v2432 = vlaneseq
          %v2433 = vshrl.u32 %v2432, 7
          %v2434 = vsub.s32 %v2431, %v2433
          %v2435 = vrot.slane %v2421, %v2434
          %v2436 = vcombine.high %v2412, 0.0
          %v2437 = vcombine.high %v2419, 0.0
          %v2438 = vcombine.high %v2428, 0.0
          %v2439 = vcombine.high %v2435, 0.0
          %v2440 = vcombine.low %v1066, %v2285
          %v2441 = vcombine.high %v1066, %v2285
          %v2443 = vunpack.c.l.s4 1983009808
          %v2444 = vunpack.c.0.s8 %v2443
          %v2445 = vlaneseq
          %v2446 = vshrl.u32 %v2445, 7
          %v2447 = vsub.s32 %v2444, %v2446
          %v2448 = vrot.slane %v2440, %v2447
          %v2450 = vunpack.c.l.s4 1983009808
          %v2451 = vunpack.c.0.s8 %v2450
          %v2452 = vlaneseq
          %v2453 = vshrl.u32 %v2452, 7
          %v2454 = vsub.s32 %v2451, %v2453
          %v2455 = vrot.slane %v2441, %v2454
          %v2456 = vcombine.low %v2273, %v2297
          %v2457 = vcombine.high %v2273, %v2297
          %v2459 = vunpack.c.l.s4 1983009808
          %v2460 = vunpack.c.0.s8 %v2459
          %v2461 = vlaneseq
          %v2462 = vshrl.u32 %v2461, 7
          %v2463 = vsub.s32 %v2460, %v2462
          %v2464 = vrot.slane %v2456, %v2463
          %v2466 = vunpack.c.l.s4 1983009808
          %v2467 = vunpack.c.0.s8 %v2466
          %v2468 = vlaneseq
          %v2469 = vshrl.u32 %v2468, 7
          %v2470 = vsub.s32 %v2467, %v2469
          %v2471 = vrot.slane %v2457, %v2470
          %v2472 = vcombine.low %v2448, %v2464
          %v2473 = vcombine.high %v2448, %v2464
          %v2475 = vunpack.c.l.s4 1934713408
          %v2476 = vunpack.c.0.s8 %v2475
          %v2477 = vlaneseq
          %v2478 = vshrl.u32 %v2477, 7
          %v2479 = vsub.s32 %v2476, %v2478
          %v2480 = vrot.slane %v2472, %v2479
          %v2482 = vunpack.c.l.s4 1934713408
          %v2483 = vunpack.c.0.s8 %v2482
          %v2484 = vlaneseq
          %v2485 = vshrl.u32 %v2484, 7
          %v2486 = vsub.s32 %v2483, %v2485
          %v2487 = vrot.slane %v2473, %v2486
          %v2488 = vcombine.low %v2455, %v2471
          %v2489 = vcombine.high %v2455, %v2471
          %v2491 = vunpack.c.l.s4 1934713408
          %v2492 = vunpack.c.0.s8 %v2491
          %v2493 = vlaneseq
          %v2494 = vshrl.u32 %v2493, 7
          %v2495 = vsub.s32 %v2492, %v2494
          %v2496 = vrot.slane %v2488, %v2495
          %v2498 = vunpack.c.l.s4 1934713408
          %v2499 = vunpack.c.0.s8 %v2498
          %v2500 = vlaneseq
          %v2501 = vshrl.u32 %v2500, 7
          %v2502 = vsub.s32 %v2499, %v2501
          %v2503 = vrot.slane %v2489, %v2502
          %v2504 = vcombine.high %v2480, 0.0
          %v2505 = vcombine.high %v2487, 0.0
          %v2506 = vcombine.high %v2496, 0.0
          %v2507 = vcombine.high %v2503, 0.0
          %v2508 = vcombine.low %v1070, %v2287
          %v2509 = vcombine.high %v1070, %v2287
          %v2511 = vunpack.c.l.s4 1983009808
          %v2512 = vunpack.c.0.s8 %v2511
          %v2513 = vlaneseq
          %v2514 = vshrl.u32 %v2513, 7
          %v2515 = vsub.s32 %v2512, %v2514
          %v2516 = vrot.slane %v2508, %v2515
          %v2518 = vunpack.c.l.s4 1983009808
          %v2519 = vunpack.c.0.s8 %v2518
          %v2520 = vlaneseq
          %v2521 = vshrl.u32 %v2520, 7
          %v2522 = vsub.s32 %v2519, %v2521
          %v2523 = vrot.slane %v2509, %v2522
          %v2524 = vcombine.low %v2275, %v2299
          %v2525 = vcombine.high %v2275, %v2299
          %v2527 = vunpack.c.l.s4 1983009808
          %v2528 = vunpack.c.0.s8 %v2527
          %v2529 = vlaneseq
          %v2530 = vshrl.u32 %v2529, 7
          %v2531 = vsub.s32 %v2528, %v2530
          %v2532 = vrot.slane %v2524, %v2531
          %v2534 = vunpack.c.l.s4 1983009808
          %v2535 = vunpack.c.0.s8 %v2534
          %v2536 = vlaneseq
          %v2537 = vshrl.u32 %v2536, 7
          %v2538 = vsub.s32 %v2535, %v2537
          %v2539 = vrot.slane %v2525, %v2538
          %v2540 = vcombine.low %v2516, %v2532
          %v2541 = vcombine.high %v2516, %v2532
          %v2543 = vunpack.c.l.s4 1934713408
          %v2544 = vunpack.c.0.s8 %v2543
          %v2545 = vlaneseq
          %v2546 = vshrl.u32 %v2545, 7
          %v2547 = vsub.s32 %v2544, %v2546
          %v2548 = vrot.slane %v2540, %v2547
          %v2550 = vunpack.c.l.s4 1934713408
          %v2551 = vunpack.c.0.s8 %v2550
          %v2552 = vlaneseq
          %v2553 = vshrl.u32 %v2552, 7
          %v2554 = vsub.s32 %v2551, %v2553
          %v2555 = vrot.slane %v2541, %v2554
          %v2556 = vcombine.low %v2523, %v2539
          %v2557 = vcombine.high %v2523, %v2539
          %v2559 = vunpack.c.l.s4 1934713408
          %v2560 = vunpack.c.0.s8 %v2559
          %v2561 = vlaneseq
          %v2562 = vshrl.u32 %v2561, 7
          %v2563 = vsub.s32 %v2560, %v2562
          %v2564 = vrot.slane %v2556, %v2563
          %v2566 = vunpack.c.l.s4 1934713408
          %v2567 = vunpack.c.0.s8 %v2566
          %v2568 = vlaneseq
          %v2569 = vshrl.u32 %v2568, 7
          %v2570 = vsub.s32 %v2567, %v2569
          %v2571 = vrot.slane %v2557, %v2570
          %v2572 = vcombine.high %v2548, 0.0
          %v2573 = vcombine.high %v2555, 0.0
          %v2574 = vcombine.high %v2564, 0.0
          %v2575 = vcombine.high %v2571, 0.0
          %v2576 = vcombine.low %v2344, %v2351
          %v2578 = vunpack.c.l.s4 1983009808
          %v2579 = vunpack.c.0.s8 %v2578
          %v2580 = vlaneseq
          %v2581 = vshrl.u32 %v2580, 7
          %v2582 = vsub.s32 %v2579, %v2581
          %v2583 = vrot.slane %v2576, %v2582
          %v2584 = vcombine.low %v2368, %v2369
          %v2586 = vunpack.c.l.s4 1983009808
          %v2587 = vunpack.c.0.s8 %v2586
          %v2588 = vlaneseq
          %v2589 = vshrl.u32 %v2588, 7
          %v2590 = vsub.s32 %v2587, %v2589
          %v2591 = vrot.slane %v2584, %v2590
          %v2592 = vcombine.low %v2360, %v2367
          %v2594 = vunpack.c.l.s4 1983009808
          %v2595 = vunpack.c.0.s8 %v2594
          %v2596 = vlaneseq
          %v2597 = vshrl.u32 %v2596, 7
          %v2598 = vsub.s32 %v2595, %v2597
          %v2599 = vrot.slane %v2592, %v2598
          %v2600 = vcombine.low %v2370, %v2371
          %v2602 = vunpack.c.l.s4 1983009808
          %v2603 = vunpack.c.0.s8 %v2602
          %v2604 = vlaneseq
          %v2605 = vshrl.u32 %v2604, 7
          %v2606 = vsub.s32 %v2603, %v2605
          %v2607 = vrot.slane %v2600, %v2606
          %v2608 = vcombine.low %v2583, %v2591
          %v2609 = vcombine.high %v2583, %v2591
          %v2611 = vunpack.c.l.s4 1934713408
          %v2612 = vunpack.c.0.s8 %v2611
          %v2613 = vlaneseq
          %v2614 = vshrl.u32 %v2613, 7
          %v2615 = vsub.s32 %v2612, %v2614
          %v2616 = vrot.slane %v2608, %v2615
          %v2618 = vunpack.c.l.s4 1934713408
          %v2619 = vunpack.c.0.s8 %v2618
          %v2620 = vlaneseq
          %v2621 = vshrl.u32 %v2620, 7
          %v2622 = vsub.s32 %v2619, %v2621
          %v2623 = vrot.slane %v2609, %v2622
          %v2624 = vcombine.low %v2599, %v2607
          %v2625 = vcombine.high %v2599, %v2607
          %v2627 = vunpack.c.l.s4 1934713408
          %v2628 = vunpack.c.0.s8 %v2627
          %v2629 = vlaneseq
          %v2630 = vshrl.u32 %v2629, 7
          %v2631 = vsub.s32 %v2628, %v2630
          %v2632 = vrot.slane %v2624, %v2631
          %v2634 = vunpack.c.l.s4 1934713408
          %v2635 = vunpack.c.0.s8 %v2634
          %v2636 = vlaneseq
          %v2637 = vshrl.u32 %v2636, 7
          %v2638 = vsub.s32 %v2635, %v2637
          %v2639 = vrot.slane %v2625, %v2638
          %v2640 = vcombine.low %v2616, %v2632
          %v2641 = vcombine.high %v2616, %v2632
          %v2642 = vcombine.low %v2623, %v2639
          %v2643 = vcombine.high %v2623, %v2639
          %v2644 = vcombine.low %v2412, %v2419
          %v2646 = vunpack.c.l.s4 1983009808
          %v2647 = vunpack.c.0.s8 %v2646
          %v2648 = vlaneseq
          %v2649 = vshrl.u32 %v2648, 7
          %v2650 = vsub.s32 %v2647, %v2649
          %v2651 = vrot.slane %v2644, %v2650
          %v2652 = vcombine.low %v2436, %v2437
          %v2654 = vunpack.c.l.s4 1983009808
          %v2655 = vunpack.c.0.s8 %v2654
          %v2656 = vlaneseq
          %v2657 = vshrl.u32 %v2656, 7
          %v2658 = vsub.s32 %v2655, %v2657
          %v2659 = vrot.slane %v2652, %v2658
          %v2660 = vcombine.low %v2428, %v2435
          %v2662 = vunpack.c.l.s4 1983009808
          %v2663 = vunpack.c.0.s8 %v2662
          %v2664 = vlaneseq
          %v2665 = vshrl.u32 %v2664, 7
          %v2666 = vsub.s32 %v2663, %v2665
          %v2667 = vrot.slane %v2660, %v2666
          %v2668 = vcombine.low %v2438, %v2439
          %v2670 = vunpack.c.l.s4 1983009808
          %v2671 = vunpack.c.0.s8 %v2670
          %v2672 = vlaneseq
          %v2673 = vshrl.u32 %v2672, 7
          %v2674 = vsub.s32 %v2671, %v2673
          %v2675 = vrot.slane %v2668, %v2674
          %v2676 = vcombine.low %v2651, %v2659
          %v2677 = vcombine.high %v2651, %v2659
          %v2679 = vunpack.c.l.s4 1934713408
          %v2680 = vunpack.c.0.s8 %v2679
          %v2681 = vlaneseq
          %v2682 = vshrl.u32 %v2681, 7
          %v2683 = vsub.s32 %v2680, %v2682
          %v2684 = vrot.slane %v2676, %v2683
          %v2686 = vunpack.c.l.s4 1934713408
          %v2687 = vunpack.c.0.s8 %v2686
          %v2688 = vlaneseq
          %v2689 = vshrl.u32 %v2688, 7
          %v2690 = vsub.s32 %v2687, %v2689
          %v2691 = vrot.slane %v2677, %v2690
          %v2692 = vcombine.low %v2667, %v2675
          %v2693 = vcombine.high %v2667, %v2675
          %v2695 = vunpack.c.l.s4 1934713408
          %v2696 = vunpack.c.0.s8 %v2695
          %v2697 = vlaneseq
          %v2698 = vshrl.u32 %v2697, 7
          %v2699 = vsub.s32 %v2696, %v2698
          %v2700 = vrot.slane %v2692, %v2699
          %v2702 = vunpack.c.l.s4 1934713408
          %v2703 = vunpack.c.0.s8 %v2702
          %v2704 = vlaneseq
          %v2705 = vshrl.u32 %v2704, 7
          %v2706 = vsub.s32 %v2703, %v2705
          %v2707 = vrot.slane %v2693, %v2706
          %v2708 = vcombine.low %v2684, %v2700
          %v2709 = vcombine.high %v2684, %v2700
          %v2710 = vcombine.low %v2691, %v2707
          %v2711 = vcombine.high %v2691, %v2707
          %v2712 = vcombine.low %v2480, %v2487
          %v2714 = vunpack.c.l.s4 1983009808
          %v2715 = vunpack.c.0.s8 %v2714
          %v2716 = vlaneseq
          %v2717 = vshrl.u32 %v2716, 7
          %v2718 = vsub.s32 %v2715, %v2717
          %v2719 = vrot.slane %v2712, %v2718
          %v2720 = vcombine.low %v2504, %v2505
          %v2722 = vunpack.c.l.s4 1983009808
          %v2723 = vunpack.c.0.s8 %v2722
          %v2724 = vlaneseq
          %v2725 = vshrl.u32 %v2724, 7
          %v2726 = vsub.s32 %v2723, %v2725
          %v2727 = vrot.slane %v2720, %v2726
          %v2728 = vcombine.low %v2496, %v2503
          %v2730 = vunpack.c.l.s4 1983009808
          %v2731 = vunpack.c.0.s8 %v2730
          %v2732 = vlaneseq
          %v2733 = vshrl.u32 %v2732, 7
          %v2734 = vsub.s32 %v2731, %v2733
          %v2735 = vrot.slane %v2728, %v2734
          %v2736 = vcombine.low %v2506, %v2507
          %v2738 = vunpack.c.l.s4 1983009808
          %v2739 = vunpack.c.0.s8 %v2738
          %v2740 = vlaneseq
          %v2741 = vshrl.u32 %v2740, 7
          %v2742 = vsub.s32 %v2739, %v2741
          %v2743 = vrot.slane %v2736, %v2742
          %v2744 = vcombine.low %v2719, %v2727
          %v2745 = vcombine.high %v2719, %v2727
          %v2747 = vunpack.c.l.s4 1934713408
          %v2748 = vunpack.c.0.s8 %v2747
          %v2749 = vlaneseq
          %v2750 = vshrl.u32 %v2749, 7
          %v2751 = vsub.s32 %v2748, %v2750
          %v2752 = vrot.slane %v2744, %v2751
          %v2754 = vunpack.c.l.s4 1934713408
          %v2755 = vunpack.c.0.s8 %v2754
          %v2756 = vlaneseq
          %v2757 = vshrl.u32 %v2756, 7
          %v2758 = vsub.s32 %v2755, %v2757
          %v2759 = vrot.slane %v2745, %v2758
          %v2760 = vcombine.low %v2735, %v2743
          %v2761 = vcombine.high %v2735, %v2743
          %v2763 = vunpack.c.l.s4 1934713408
          %v2764 = vunpack.c.0.s8 %v2763
          %v2765 = vlaneseq
          %v2766 = vshrl.u32 %v2765, 7
          %v2767 = vsub.s32 %v2764, %v2766
          %v2768 = vrot.slane %v2760, %v2767
          %v2770 = vunpack.c.l.s4 1934713408
          %v2771 = vunpack.c.0.s8 %v2770
          %v2772 = vlaneseq
          %v2773 = vshrl.u32 %v2772, 7
          %v2774 = vsub.s32 %v2771, %v2773
          %v2775 = vrot.slane %v2761, %v2774
          %v2776 = vcombine.low %v2752, %v2768
          %v2777 = vcombine.high %v2752, %v2768
          %v2778 = vcombine.low %v2759, %v2775
          %v2779 = vcombine.high %v2759, %v2775
          %v2780 = vcombine.low %v2548, %v2555
          %v2782 = vunpack.c.l.s4 1983009808
          %v2783 = vunpack.c.0.s8 %v2782
          %v2784 = vlaneseq
          %v2785 = vshrl.u32 %v2784, 7
          %v2786 = vsub.s32 %v2783, %v2785
          %v2787 = vrot.slane %v2780, %v2786
          %v2788 = vcombine.low %v2572, %v2573
          %v2790 = vunpack.c.l.s4 1983009808
          %v2791 = vunpack.c.0.s8 %v2790
          %v2792 = vlaneseq
          %v2793 = vshrl.u32 %v2792, 7
          %v2794 = vsub.s32 %v2791, %v2793
          %v2795 = vrot.slane %v2788, %v2794
          %v2796 = vcombine.low %v2564, %v2571
          %v2798 = vunpack.c.l.s4 1983009808
          %v2799 = vunpack.c.0.s8 %v2798
          %v2800 = vlaneseq
          %v2801 = vshrl.u32 %v2800, 7
          %v2802 = vsub.s32 %v2799, %v2801
          %v2803 = vrot.slane %v2796, %v2802
          %v2804 = vcombine.low %v2574, %v2575
          %v2806 = vunpack.c.l.s4 1983009808
          %v2807 = vunpack.c.0.s8 %v2806
          %v2808 = vlaneseq
          %v2809 = vshrl.u32 %v2808, 7
          %v2810 = vsub.s32 %v2807, %v2809
          %v2811 = vrot.slane %v2804, %v2810
          %v2812 = vcombine.low %v2787, %v2795
          %v2813 = vcombine.high %v2787, %v2795
          %v2815 = vunpack.c.l.s4 1934713408
          %v2816 = vunpack.c.0.s8 %v2815
          %v2817 = vlaneseq
          %v2818 = vshrl.u32 %v2817, 7
          %v2819 = vsub.s32 %v2816, %v2818
          %v2820 = vrot.slane %v2812, %v2819
          %v2822 = vunpack.c.l.s4 1934713408
          %v2823 = vunpack.c.0.s8 %v2822
          %v2824 = vlaneseq
          %v2825 = vshrl.u32 %v2824, 7
          %v2826 = vsub.s32 %v2823, %v2825
          %v2827 = vrot.slane %v2813, %v2826
          %v2828 = vcombine.low %v2803, %v2811
          %v2829 = vcombine.high %v2803, %v2811
          %v2831 = vunpack.c.l.s4 1934713408
          %v2832 = vunpack.c.0.s8 %v2831
          %v2833 = vlaneseq
          %v2834 = vshrl.u32 %v2833, 7
          %v2835 = vsub.s32 %v2832, %v2834
          %v2836 = vrot.slane %v2828, %v2835
          %v2838 = vunpack.c.l.s4 1934713408
          %v2839 = vunpack.c.0.s8 %v2838
          %v2840 = vlaneseq
          %v2841 = vshrl.u32 %v2840, 7
          %v2842 = vsub.s32 %v2839, %v2841
          %v2843 = vrot.slane %v2829, %v2842
          %v2844 = vcombine.low %v2820, %v2836
          %v2845 = vcombine.high %v2820, %v2836
          %v2846 = vcombine.low %v2827, %v2843
          %v2847 = vcombine.high %v2827, %v2843
          %v2848 = vpack.c.bf16 %v2708, %v2640
          %v2849 = vpack.c.bf16 %v2709, %v2641
          %v2850 = vpack.c.bf16 %v2710, %v2642
          %v2851 = vpack.c.bf16 %v2711, %v2643
          %v2852 = vpack.c.bf16 %v2844, %v2776
          %v2853 = vpack.c.bf16 %v2845, %v2777
          %v2854 = vpack.c.bf16 %v2846, %v2778
          %v2855 = vpack.c.bf16 %v2847, %v2779
          %vm2856 = vcmask 130048
          %v2858 = vsel %vm2856, %v1656, 0
          %v2861 = vsel %vm2856, %v2256, 0
          %2863 = vmatprep.subr.bf16.mxu0 0
          %2864 = vmatpush1.bf16.xpose.msra.mxu0 %v2861
          %2865 = vmatprep.subr.bf16.mxu0 0
          %2866 = vmatpush1.bf16.xpose.msra.mxu0 0
          %2867 = vmatprep.subr.bf16.mxu0 0
          %2868 = vmatpush1.bf16.xpose.msra.mxu0 0
          %2869 = vmatprep.subr.bf16.mxu0 0
          %2870 = vmatpush1.bf16.xpose.msra.mxu0 0
          %2871 = vmatprep.subr.bf16.mxu0 0
          %2872 = vmatpush1.bf16.xpose.msra.mxu0 0
          %2873 = vmatprep.subr.bf16.mxu0 0
          %2874 = vmatpush1.bf16.xpose.msra.mxu0 0
          %2875 = vmatprep.subr.bf16.mxu0 0
          %2876 = vmatpush1.bf16.xpose.msra.mxu0 0
          %2877 = vmatprep.subr.bf16.mxu0 0
          %2878 = vmatpush1.bf16.xpose.msra.mxu0 0
          %2879 = vmatprep.subr.bf16.mxu0 0
          %2880 = vmatpush1.bf16.xpose.msra.mxu0 0
          %2881 = vmatprep.subr.bf16.mxu0 0
          %2882 = vmatpush1.bf16.xpose.msra.mxu0 0
          %2883 = vmatprep.subr.bf16.mxu0 0
          %2884 = vmatpush1.bf16.xpose.msra.mxu0 0
          %2885 = vmatprep.subr.bf16.mxu0 0
          %2886 = vmatpush1.bf16.xpose.msra.mxu0 0
          %2887 = vmatprep.subr.bf16.mxu0 0
          %2888 = vmatpush1.bf16.xpose.msra.mxu0 0
          %2889 = vmatprep.subr.bf16.mxu0 0
          %2890 = vmatpush1.bf16.xpose.msra.mxu0 0
          %2891 = vmatprep.subr.bf16.mxu0 0
          %2892 = vmatpush1.bf16.xpose.msra.mxu0 0
          %2893 = vmatprep.subr.bf16.mxu0 0
          %2894 = vmatpush1.bf16.xpose.msra.mxu0 0
          %2895 = vmatprep.mubr.bf16.mxu0 0
          %2896 = vmatmul.mubr.bf16.gmra.mrb[0].mxu0 %v2858
          %v2897 = vpop.f32.mrb[0].mxu0
          %v2898 = vadd.f32 0.0, %v2897
          %v2899 = vpop.f32.mrb[0].mxu0
          %v2900 = vpop.f32.mrb[0].mxu0
          %v2901 = vadd.f32 0.0, %v2900
          %v2902 = vpop.f32.mrb[0].mxu0
          %2903 = vdwg.mxu0
          %v2905 = vsel %vm2856, %v1657, 0
          %v2908 = vsel %vm2856, %v2257, 0
          %2910 = vmatprep.subr.bf16.mxu0 0
          %2911 = vmatpush1.bf16.xpose.msra.mxu0 %v2908
          %2912 = vmatprep.subr.bf16.mxu0 0
          %2913 = vmatpush1.bf16.xpose.msra.mxu0 0
          %2914 = vmatprep.subr.bf16.mxu0 0
          %2915 = vmatpush1.bf16.xpose.msra.mxu0 0
          %2916 = vmatprep.subr.bf16.mxu0 0
          %2917 = vmatpush1.bf16.xpose.msra.mxu0 0
          %2918 = vmatprep.subr.bf16.mxu0 0
          %2919 = vmatpush1.bf16.xpose.msra.mxu0 0
          %2920 = vmatprep.subr.bf16.mxu0 0
          %2921 = vmatpush1.bf16.xpose.msra.mxu0 0
          %2922 = vmatprep.subr.bf16.mxu0 0
          %2923 = vmatpush1.bf16.xpose.msra.mxu0 0
          %2924 = vmatprep.subr.bf16.mxu0 0
          %2925 = vmatpush1.bf16.xpose.msra.mxu0 0
          %2926 = vmatprep.subr.bf16.mxu0 0
          %2927 = vmatpush1.bf16.xpose.msra.mxu0 0
          %2928 = vmatprep.subr.bf16.mxu0 0
          %2929 = vmatpush1.bf16.xpose.msra.mxu0 0
          %2930 = vmatprep.subr.bf16.mxu0 0
          %2931 = vmatpush1.bf16.xpose.msra.mxu0 0
          %2932 = vmatprep.subr.bf16.mxu0 0
          %2933 = vmatpush1.bf16.xpose.msra.mxu0 0
          %2934 = vmatprep.subr.bf16.mxu0 0
          %2935 = vmatpush1.bf16.xpose.msra.mxu0 0
          %2936 = vmatprep.subr.bf16.mxu0 0
          %2937 = vmatpush1.bf16.xpose.msra.mxu0 0
          %2938 = vmatprep.subr.bf16.mxu0 0
          %2939 = vmatpush1.bf16.xpose.msra.mxu0 0
          %2940 = vmatprep.subr.bf16.mxu0 0
          %2941 = vmatpush1.bf16.xpose.msra.mxu0 0
          %2942 = vmatprep.mubr.bf16.mxu0 0
          %2943 = vmatmul.mubr.bf16.gmra.mrb[0].mxu0 %v2905
          %v2944 = vpop.f32.mrb[0].mxu0
          %v2945 = vadd.f32 0.0, %v2944
          %v2946 = vpop.f32.mrb[0].mxu0
          %v2947 = vpop.f32.mrb[0].mxu0
          %v2948 = vadd.f32 0.0, %v2947
          %v2949 = vpop.f32.mrb[0].mxu0
          %2950 = vdwg.mxu0
          %v2952 = vsel %vm2856, %v1658, 0
          %v2955 = vsel %vm2856, %v2258, 0
          %2957 = vmatprep.subr.bf16.mxu0 0
          %2958 = vmatpush1.bf16.xpose.msra.mxu0 %v2955
          %2959 = vmatprep.subr.bf16.mxu0 0
          %2960 = vmatpush1.bf16.xpose.msra.mxu0 0
          %2961 = vmatprep.subr.bf16.mxu0 0
          %2962 = vmatpush1.bf16.xpose.msra.mxu0 0
          %2963 = vmatprep.subr.bf16.mxu0 0
          %2964 = vmatpush1.bf16.xpose.msra.mxu0 0
          %2965 = vmatprep.subr.bf16.mxu0 0
          %2966 = vmatpush1.bf16.xpose.msra.mxu0 0
          %2967 = vmatprep.subr.bf16.mxu0 0
          %2968 = vmatpush1.bf16.xpose.msra.mxu0 0
          %2969 = vmatprep.subr.bf16.mxu0 0
          %2970 = vmatpush1.bf16.xpose.msra.mxu0 0
          %2971 = vmatprep.subr.bf16.mxu0 0
          %2972 = vmatpush1.bf16.xpose.msra.mxu0 0
          %2973 = vmatprep.subr.bf16.mxu0 0
          %2974 = vmatpush1.bf16.xpose.msra.mxu0 0
          %2975 = vmatprep.subr.bf16.mxu0 0
          %2976 = vmatpush1.bf16.xpose.msra.mxu0 0
          %2977 = vmatprep.subr.bf16.mxu0 0
          %2978 = vmatpush1.bf16.xpose.msra.mxu0 0
          %2979 = vmatprep.subr.bf16.mxu0 0
          %2980 = vmatpush1.bf16.xpose.msra.mxu0 0
          %2981 = vmatprep.subr.bf16.mxu0 0
          %2982 = vmatpush1.bf16.xpose.msra.mxu0 0
          %2983 = vmatprep.subr.bf16.mxu0 0
          %2984 = vmatpush1.bf16.xpose.msra.mxu0 0
          %2985 = vmatprep.subr.bf16.mxu0 0
          %2986 = vmatpush1.bf16.xpose.msra.mxu0 0
          %2987 = vmatprep.subr.bf16.mxu0 0
          %2988 = vmatpush1.bf16.xpose.msra.mxu0 0
          %2989 = vmatprep.mubr.bf16.mxu0 0
          %2990 = vmatmul.mubr.bf16.gmra.mrb[0].mxu0 %v2952
          %v2991 = vpop.f32.mrb[0].mxu0
          %v2992 = vadd.f32 0.0, %v2991
          %v2993 = vpop.f32.mrb[0].mxu0
          %v2994 = vpop.f32.mrb[0].mxu0
          %v2995 = vadd.f32 0.0, %v2994
          %v2996 = vpop.f32.mrb[0].mxu0
          %2997 = vdwg.mxu0
          %v2999 = vsel %vm2856, %v1659, 0
          %v3002 = vsel %vm2856, %v2259, 0
          %3004 = vmatprep.subr.bf16.mxu0 0
          %3005 = vmatpush1.bf16.xpose.msra.mxu0 %v3002
          %3006 = vmatprep.subr.bf16.mxu0 0
          %3007 = vmatpush1.bf16.xpose.msra.mxu0 0
          %3008 = vmatprep.subr.bf16.mxu0 0
          %3009 = vmatpush1.bf16.xpose.msra.mxu0 0
          %3010 = vmatprep.subr.bf16.mxu0 0
          %3011 = vmatpush1.bf16.xpose.msra.mxu0 0
          %3012 = vmatprep.subr.bf16.mxu0 0
          %3013 = vmatpush1.bf16.xpose.msra.mxu0 0
          %3014 = vmatprep.subr.bf16.mxu0 0
          %3015 = vmatpush1.bf16.xpose.msra.mxu0 0
          %3016 = vmatprep.subr.bf16.mxu0 0
          %3017 = vmatpush1.bf16.xpose.msra.mxu0 0
          %3018 = vmatprep.subr.bf16.mxu0 0
          %3019 = vmatpush1.bf16.xpose.msra.mxu0 0
          %3020 = vmatprep.subr.bf16.mxu0 0
          %3021 = vmatpush1.bf16.xpose.msra.mxu0 0
          %3022 = vmatprep.subr.bf16.mxu0 0
          %3023 = vmatpush1.bf16.xpose.msra.mxu0 0
          %3024 = vmatprep.subr.bf16.mxu0 0
          %3025 = vmatpush1.bf16.xpose.msra.mxu0 0
          %3026 = vmatprep.subr.bf16.mxu0 0
          %3027 = vmatpush1.bf16.xpose.msra.mxu0 0
          %3028 = vmatprep.subr.bf16.mxu0 0
          %3029 = vmatpush1.bf16.xpose.msra.mxu0 0
          %3030 = vmatprep.subr.bf16.mxu0 0
          %3031 = vmatpush1.bf16.xpose.msra.mxu0 0
          %3032 = vmatprep.subr.bf16.mxu0 0
          %3033 = vmatpush1.bf16.xpose.msra.mxu0 0
          %3034 = vmatprep.subr.bf16.mxu0 0
          %3035 = vmatpush1.bf16.xpose.msra.mxu0 0
          %3036 = vmatprep.mubr.bf16.mxu0 0
          %3037 = vmatmul.mubr.bf16.gmra.mrb[0].mxu0 %v2999
          %v3038 = vpop.f32.mrb[0].mxu0
          %v3039 = vadd.f32 0.0, %v3038
          %v3040 = vpop.f32.mrb[0].mxu0
          %v3041 = vpop.f32.mrb[0].mxu0
          %v3042 = vadd.f32 0.0, %v3041
          %v3043 = vpop.f32.mrb[0].mxu0
          %3044 = vdwg.mxu0
          %v3046 = vsel %vm2856, %v1660, 0
          %v3049 = vsel %vm2856, %v2260, 0
          %3051 = vmatprep.subr.bf16.mxu0 0
          %3052 = vmatpush1.bf16.xpose.msra.mxu0 %v3049
          %3053 = vmatprep.subr.bf16.mxu0 0
          %3054 = vmatpush1.bf16.xpose.msra.mxu0 0
          %3055 = vmatprep.subr.bf16.mxu0 0
          %3056 = vmatpush1.bf16.xpose.msra.mxu0 0
          %3057 = vmatprep.subr.bf16.mxu0 0
          %3058 = vmatpush1.bf16.xpose.msra.mxu0 0
          %3059 = vmatprep.subr.bf16.mxu0 0
          %3060 = vmatpush1.bf16.xpose.msra.mxu0 0
          %3061 = vmatprep.subr.bf16.mxu0 0
          %3062 = vmatpush1.bf16.xpose.msra.mxu0 0
          %3063 = vmatprep.subr.bf16.mxu0 0
          %3064 = vmatpush1.bf16.xpose.msra.mxu0 0
          %3065 = vmatprep.subr.bf16.mxu0 0
          %3066 = vmatpush1.bf16.xpose.msra.mxu0 0
          %3067 = vmatprep.subr.bf16.mxu0 0
          %3068 = vmatpush1.bf16.xpose.msra.mxu0 0
          %3069 = vmatprep.subr.bf16.mxu0 0
          %3070 = vmatpush1.bf16.xpose.msra.mxu0 0
          %3071 = vmatprep.subr.bf16.mxu0 0
          %3072 = vmatpush1.bf16.xpose.msra.mxu0 0
          %3073 = vmatprep.subr.bf16.mxu0 0
          %3074 = vmatpush1.bf16.xpose.msra.mxu0 0
          %3075 = vmatprep.subr.bf16.mxu0 0
          %3076 = vmatpush1.bf16.xpose.msra.mxu0 0
          %3077 = vmatprep.subr.bf16.mxu0 0
          %3078 = vmatpush1.bf16.xpose.msra.mxu0 0
          %3079 = vmatprep.subr.bf16.mxu0 0
          %3080 = vmatpush1.bf16.xpose.msra.mxu0 0
          %3081 = vmatprep.subr.bf16.mxu0 0
          %3082 = vmatpush1.bf16.xpose.msra.mxu0 0
          %3083 = vmatprep.mubr.bf16.mxu0 0
          %3084 = vmatmul.mubr.bf16.gmra.mrb[0].mxu0 %v3046
          %v3085 = vpop.f32.mrb[0].mxu0
          %v3086 = vadd.f32 0.0, %v3085
          %v3087 = vpop.f32.mrb[0].mxu0
          %v3088 = vpop.f32.mrb[0].mxu0
          %v3089 = vadd.f32 0.0, %v3088
          %v3090 = vpop.f32.mrb[0].mxu0
          %3091 = vdwg.mxu0
          %v3093 = vsel %vm2856, %v1661, 0
          %v3096 = vsel %vm2856, %v2261, 0
          %3098 = vmatprep.subr.bf16.mxu0 0
          %3099 = vmatpush1.bf16.xpose.msra.mxu0 %v3096
          %3100 = vmatprep.subr.bf16.mxu0 0
          %3101 = vmatpush1.bf16.xpose.msra.mxu0 0
          %3102 = vmatprep.subr.bf16.mxu0 0
          %3103 = vmatpush1.bf16.xpose.msra.mxu0 0
          %3104 = vmatprep.subr.bf16.mxu0 0
          %3105 = vmatpush1.bf16.xpose.msra.mxu0 0
          %3106 = vmatprep.subr.bf16.mxu0 0
          %3107 = vmatpush1.bf16.xpose.msra.mxu0 0
          %3108 = vmatprep.subr.bf16.mxu0 0
          %3109 = vmatpush1.bf16.xpose.msra.mxu0 0
          %3110 = vmatprep.subr.bf16.mxu0 0
          %3111 = vmatpush1.bf16.xpose.msra.mxu0 0
          %3112 = vmatprep.subr.bf16.mxu0 0
          %3113 = vmatpush1.bf16.xpose.msra.mxu0 0
          %3114 = vmatprep.subr.bf16.mxu0 0
          %3115 = vmatpush1.bf16.xpose.msra.mxu0 0
          %3116 = vmatprep.subr.bf16.mxu0 0
          %3117 = vmatpush1.bf16.xpose.msra.mxu0 0
          %3118 = vmatprep.subr.bf16.mxu0 0
          %3119 = vmatpush1.bf16.xpose.msra.mxu0 0
          %3120 = vmatprep.subr.bf16.mxu0 0
          %3121 = vmatpush1.bf16.xpose.msra.mxu0 0
          %3122 = vmatprep.subr.bf16.mxu0 0
          %3123 = vmatpush1.bf16.xpose.msra.mxu0 0
          %3124 = vmatprep.subr.bf16.mxu0 0
          %3125 = vmatpush1.bf16.xpose.msra.mxu0 0
          %3126 = vmatprep.subr.bf16.mxu0 0
          %3127 = vmatpush1.bf16.xpose.msra.mxu0 0
          %3128 = vmatprep.subr.bf16.mxu0 0
          %3129 = vmatpush1.bf16.xpose.msra.mxu0 0
          %3130 = vmatprep.mubr.bf16.mxu0 0
          %3131 = vmatmul.mubr.bf16.gmra.mrb[0].mxu0 %v3093
          %v3132 = vpop.f32.mrb[0].mxu0
          %v3133 = vadd.f32 0.0, %v3132
          %v3134 = vpop.f32.mrb[0].mxu0
          %v3135 = vpop.f32.mrb[0].mxu0
          %v3136 = vadd.f32 0.0, %v3135
          %v3137 = vpop.f32.mrb[0].mxu0
          %3138 = vdwg.mxu0
          %v3140 = vsel %vm2856, %v1662, 0
          %v3143 = vsel %vm2856, %v2262, 0
          %3145 = vmatprep.subr.bf16.mxu0 0
          %3146 = vmatpush1.bf16.xpose.msra.mxu0 %v3143
          %3147 = vmatprep.subr.bf16.mxu0 0
          %3148 = vmatpush1.bf16.xpose.msra.mxu0 0
          %3149 = vmatprep.subr.bf16.mxu0 0
          %3150 = vmatpush1.bf16.xpose.msra.mxu0 0
          %3151 = vmatprep.subr.bf16.mxu0 0
          %3152 = vmatpush1.bf16.xpose.msra.mxu0 0
          %3153 = vmatprep.subr.bf16.mxu0 0
          %3154 = vmatpush1.bf16.xpose.msra.mxu0 0
          %3155 = vmatprep.subr.bf16.mxu0 0
          %3156 = vmatpush1.bf16.xpose.msra.mxu0 0
          %3157 = vmatprep.subr.bf16.mxu0 0
          %3158 = vmatpush1.bf16.xpose.msra.mxu0 0
          %3159 = vmatprep.subr.bf16.mxu0 0
          %3160 = vmatpush1.bf16.xpose.msra.mxu0 0
          %3161 = vmatprep.subr.bf16.mxu0 0
          %3162 = vmatpush1.bf16.xpose.msra.mxu0 0
          %3163 = vmatprep.subr.bf16.mxu0 0
          %3164 = vmatpush1.bf16.xpose.msra.mxu0 0
          %3165 = vmatprep.subr.bf16.mxu0 0
          %3166 = vmatpush1.bf16.xpose.msra.mxu0 0
          %3167 = vmatprep.subr.bf16.mxu0 0
          %3168 = vmatpush1.bf16.xpose.msra.mxu0 0
          %3169 = vmatprep.subr.bf16.mxu0 0
          %3170 = vmatpush1.bf16.xpose.msra.mxu0 0
          %3171 = vmatprep.subr.bf16.mxu0 0
          %3172 = vmatpush1.bf16.xpose.msra.mxu0 0
          %3173 = vmatprep.subr.bf16.mxu0 0
          %3174 = vmatpush1.bf16.xpose.msra.mxu0 0
          %3175 = vmatprep.subr.bf16.mxu0 0
          %3176 = vmatpush1.bf16.xpose.msra.mxu0 0
          %3177 = vmatprep.mubr.bf16.mxu0 0
          %3178 = vmatmul.mubr.bf16.gmra.mrb[0].mxu0 %v3140
          %v3179 = vpop.f32.mrb[0].mxu0
          %v3180 = vadd.f32 0.0, %v3179
          %v3181 = vpop.f32.mrb[0].mxu0
          %v3182 = vpop.f32.mrb[0].mxu0
          %v3183 = vadd.f32 0.0, %v3182
          %v3184 = vpop.f32.mrb[0].mxu0
          %3185 = vdwg.mxu0
          %v3187 = vsel %vm2856, %v1663, 0
          %v3190 = vsel %vm2856, %v2263, 0
          %3192 = vmatprep.subr.bf16.mxu0 0
          %3193 = vmatpush1.bf16.xpose.msra.mxu0 %v3190
          %3194 = vmatprep.subr.bf16.mxu0 0
          %3195 = vmatpush1.bf16.xpose.msra.mxu0 0
          %3196 = vmatprep.subr.bf16.mxu0 0
          %3197 = vmatpush1.bf16.xpose.msra.mxu0 0
          %3198 = vmatprep.subr.bf16.mxu0 0
          %3199 = vmatpush1.bf16.xpose.msra.mxu0 0
          %3200 = vmatprep.subr.bf16.mxu0 0
          %3201 = vmatpush1.bf16.xpose.msra.mxu0 0
          %3202 = vmatprep.subr.bf16.mxu0 0
          %3203 = vmatpush1.bf16.xpose.msra.mxu0 0
          %3204 = vmatprep.subr.bf16.mxu0 0
          %3205 = vmatpush1.bf16.xpose.msra.mxu0 0
          %3206 = vmatprep.subr.bf16.mxu0 0
          %3207 = vmatpush1.bf16.xpose.msra.mxu0 0
          %3208 = vmatprep.subr.bf16.mxu0 0
          %3209 = vmatpush1.bf16.xpose.msra.mxu0 0
          %3210 = vmatprep.subr.bf16.mxu0 0
          %3211 = vmatpush1.bf16.xpose.msra.mxu0 0
          %3212 = vmatprep.subr.bf16.mxu0 0
          %3213 = vmatpush1.bf16.xpose.msra.mxu0 0
          %3214 = vmatprep.subr.bf16.mxu0 0
          %3215 = vmatpush1.bf16.xpose.msra.mxu0 0
          %3216 = vmatprep.subr.bf16.mxu0 0
          %3217 = vmatpush1.bf16.xpose.msra.mxu0 0
          %3218 = vmatprep.subr.bf16.mxu0 0
          %3219 = vmatpush1.bf16.xpose.msra.mxu0 0
          %3220 = vmatprep.subr.bf16.mxu0 0
          %3221 = vmatpush1.bf16.xpose.msra.mxu0 0
          %3222 = vmatprep.subr.bf16.mxu0 0
          %3223 = vmatpush1.bf16.xpose.msra.mxu0 0
          %3224 = vmatprep.mubr.bf16.mxu0 0
          %3225 = vmatmul.mubr.bf16.gmra.mrb[0].mxu0 %v3187
          %v3226 = vpop.f32.mrb[0].mxu0
          %v3227 = vadd.f32 0.0, %v3226
          %v3228 = vpop.f32.mrb[0].mxu0
          %v3229 = vpop.f32.mrb[0].mxu0
          %v3230 = vadd.f32 0.0, %v3229
          %v3231 = vpop.f32.mrb[0].mxu0
          %3232 = vdwg.mxu0
          %v3233 = vsel %vm2856, %v2898, -inf
          %3234 = vmax.xlane.f32.xlu0 %v3233
          %v3235 = vpop.xlane.xlu0 %3234
          %v3236 = vsel %vm2856, %v2901, -inf
          %3237 = vmax.xlane.f32.xlu0 %v3236
          %v3238 = vpop.xlane.xlu0 %3237
          %v3239 = vsel %vm2856, %v2945, -inf
          %3240 = vmax.xlane.f32.xlu0 %v3239
          %v3241 = vpop.xlane.xlu0 %3240
          %v3242 = vsel %vm2856, %v2948, -inf
          %3243 = vmax.xlane.f32.xlu0 %v3242
          %v3244 = vpop.xlane.xlu0 %3243
          %v3245 = vsel %vm2856, %v2992, -inf
          %3246 = vmax.xlane.f32.xlu0 %v3245
          %v3247 = vpop.xlane.xlu0 %3246
          %v3248 = vsel %vm2856, %v2995, -inf
          %3249 = vmax.xlane.f32.xlu0 %v3248
          %v3250 = vpop.xlane.xlu0 %3249
          %v3251 = vsel %vm2856, %v3039, -inf
          %3252 = vmax.xlane.f32.xlu0 %v3251
          %v3253 = vpop.xlane.xlu0 %3252
          %v3254 = vsel %vm2856, %v3042, -inf
          %3255 = vmax.xlane.f32.xlu0 %v3254
          %v3256 = vpop.xlane.xlu0 %3255
          %v3257 = vsel %vm2856, %v3086, -inf
          %3258 = vmax.xlane.f32.xlu0 %v3257
          %v3259 = vpop.xlane.xlu0 %3258
          %v3260 = vsel %vm2856, %v3089, -inf
          %3261 = vmax.xlane.f32.xlu0 %v3260
          %v3262 = vpop.xlane.xlu0 %3261
          %v3263 = vsel %vm2856, %v3133, -inf
          %3264 = vmax.xlane.f32.xlu0 %v3263
          %v3265 = vpop.xlane.xlu0 %3264
          %v3266 = vsel %vm2856, %v3136, -inf
          %3267 = vmax.xlane.f32.xlu0 %v3266
          %v3268 = vpop.xlane.xlu0 %3267
          %v3269 = vsel %vm2856, %v3180, -inf
          %3270 = vmax.xlane.f32.xlu0 %v3269
          %v3271 = vpop.xlane.xlu0 %3270
          %v3272 = vsel %vm2856, %v3183, -inf
          %3273 = vmax.xlane.f32.xlu0 %v3272
          %v3274 = vpop.xlane.xlu0 %3273
          %v3275 = vsel %vm2856, %v3227, -inf
          %3276 = vmax.xlane.f32.xlu0 %v3275
          %v3277 = vpop.xlane.xlu0 %3276
          %v3278 = vsel %vm2856, %v3230, -inf
          %3279 = vmax.xlane.f32.xlu0 %v3278
          %v3280 = vpop.xlane.xlu0 %3279
          %v3281 = vsub.f32 %v2898, %v3235
          %v3282 = vsub.f32 %v2901, %v3238
          %v3283 = vsub.f32 %v2945, %v3241
          %v3284 = vsub.f32 %v2948, %v3244
          %v3285 = vsub.f32 %v2992, %v3247
          %v3286 = vsub.f32 %v2995, %v3250
          %v3287 = vsub.f32 %v3039, %v3253
          %v3288 = vsub.f32 %v3042, %v3256
          %v3289 = vsub.f32 %v3086, %v3259
          %v3290 = vsub.f32 %v3089, %v3262
          %v3291 = vsub.f32 %v3133, %v3265
          %v3292 = vsub.f32 %v3136, %v3268
          %v3293 = vsub.f32 %v3180, %v3271
          %v3294 = vsub.f32 %v3183, %v3274
          %v3295 = vsub.f32 %v3227, %v3277
          %v3296 = vsub.f32 %v3230, %v3280
          %v3297 = vmul.f32 %v3281, 1.442695
          %v3298 = vpow.pop %v3297
          %v3299 = vmul.f32 %v3282, 1.442695
          %v3300 = vpow.pop %v3299
          %v3301 = vmul.f32 %v3283, 1.442695
          %v3302 = vpow.pop %v3301
          %v3303 = vmul.f32 %v3284, 1.442695
          %v3304 = vpow.pop %v3303
          %v3305 = vmul.f32 %v3285, 1.442695
          %v3306 = vpow.pop %v3305
          %v3307 = vmul.f32 %v3286, 1.442695
          %v3308 = vpow.pop %v3307
          %v3309 = vmul.f32 %v3287, 1.442695
          %v3310 = vpow.pop %v3309
          %v3311 = vmul.f32 %v3288, 1.442695
          %v3312 = vpow.pop %v3311
          %v3313 = vmul.f32 %v3289, 1.442695
          %v3314 = vpow.pop %v3313
          %v3315 = vmul.f32 %v3290, 1.442695
          %v3316 = vpow.pop %v3315
          %v3317 = vmul.f32 %v3291, 1.442695
          %v3318 = vpow.pop %v3317
          %v3319 = vmul.f32 %v3292, 1.442695
          %v3320 = vpow.pop %v3319
          %v3321 = vmul.f32 %v3293, 1.442695
          %v3322 = vpow.pop %v3321
          %v3323 = vmul.f32 %v3294, 1.442695
          %v3324 = vpow.pop %v3323
          %v3325 = vmul.f32 %v3295, 1.442695
          %v3326 = vpow.pop %v3325
          %v3327 = vmul.f32 %v3296, 1.442695
          %v3328 = vpow.pop %v3327
          %v3329 = vsel %vm2856, %v3298, 0.0
          %3330 = vadd.xlane.f32.xlu0 %v3329
          %v3331 = vpop.xlane.xlu0 %3330
          %v3332 = vsel %vm2856, %v3300, 0.0
          %3333 = vadd.xlane.f32.xlu0 %v3332
          %v3334 = vpop.xlane.xlu0 %3333
          %v3335 = vsel %vm2856, %v3302, 0.0
          %3336 = vadd.xlane.f32.xlu0 %v3335
          %v3337 = vpop.xlane.xlu0 %3336
          %v3338 = vsel %vm2856, %v3304, 0.0
          %3339 = vadd.xlane.f32.xlu0 %v3338
          %v3340 = vpop.xlane.xlu0 %3339
          %v3341 = vsel %vm2856, %v3306, 0.0
          %3342 = vadd.xlane.f32.xlu0 %v3341
          %v3343 = vpop.xlane.xlu0 %3342
          %v3344 = vsel %vm2856, %v3308, 0.0
          %3345 = vadd.xlane.f32.xlu0 %v3344
          %v3346 = vpop.xlane.xlu0 %3345
          %v3347 = vsel %vm2856, %v3310, 0.0
          %3348 = vadd.xlane.f32.xlu0 %v3347
          %v3349 = vpop.xlane.xlu0 %3348
          %v3350 = vsel %vm2856, %v3312, 0.0
          %3351 = vadd.xlane.f32.xlu0 %v3350
          %v3352 = vpop.xlane.xlu0 %3351
          %v3353 = vsel %vm2856, %v3314, 0.0
          %3354 = vadd.xlane.f32.xlu0 %v3353
          %v3355 = vpop.xlane.xlu0 %3354
          %v3356 = vsel %vm2856, %v3316, 0.0
          %3357 = vadd.xlane.f32.xlu0 %v3356
          %v3358 = vpop.xlane.xlu0 %3357
          %v3359 = vsel %vm2856, %v3318, 0.0
          %3360 = vadd.xlane.f32.xlu0 %v3359
          %v3361 = vpop.xlane.xlu0 %3360
          %v3362 = vsel %vm2856, %v3320, 0.0
          %3363 = vadd.xlane.f32.xlu0 %v3362
          %v3364 = vpop.xlane.xlu0 %3363
          %v3365 = vsel %vm2856, %v3322, 0.0
          %3366 = vadd.xlane.f32.xlu0 %v3365
          %v3367 = vpop.xlane.xlu0 %3366
          %v3368 = vsel %vm2856, %v3324, 0.0
          %3369 = vadd.xlane.f32.xlu0 %v3368
          %v3370 = vpop.xlane.xlu0 %3369
          %v3371 = vsel %vm2856, %v3326, 0.0
          %3372 = vadd.xlane.f32.xlu0 %v3371
          %v3373 = vpop.xlane.xlu0 %3372
          %v3374 = vsel %vm2856, %v3328, 0.0
          %3375 = vadd.xlane.f32.xlu0 %v3374
          %v3376 = vpop.xlane.xlu0 %3375
          %v3377 = vrcp.pop %v3331
          %v3378 = vmul.f32 1.0, %v3377
          %v3379 = vrcp.pop %v3334
          %v3380 = vmul.f32 1.0, %v3379
          %v3381 = vrcp.pop %v3337
          %v3382 = vmul.f32 1.0, %v3381
          %v3383 = vrcp.pop %v3340
          %v3384 = vmul.f32 1.0, %v3383
          %v3385 = vrcp.pop %v3343
          %v3386 = vmul.f32 1.0, %v3385
          %v3387 = vrcp.pop %v3346
          %v3388 = vmul.f32 1.0, %v3387
          %v3389 = vrcp.pop %v3349
          %v3390 = vmul.f32 1.0, %v3389
          %v3391 = vrcp.pop %v3352
          %v3392 = vmul.f32 1.0, %v3391
          %v3393 = vrcp.pop %v3355
          %v3394 = vmul.f32 1.0, %v3393
          %v3395 = vrcp.pop %v3358
          %v3396 = vmul.f32 1.0, %v3395
          %v3397 = vrcp.pop %v3361
          %v3398 = vmul.f32 1.0, %v3397
          %v3399 = vrcp.pop %v3364
          %v3400 = vmul.f32 1.0, %v3399
          %v3401 = vrcp.pop %v3367
          %v3402 = vmul.f32 1.0, %v3401
          %v3403 = vrcp.pop %v3370
          %v3404 = vmul.f32 1.0, %v3403
          %v3405 = vrcp.pop %v3373
          %v3406 = vmul.f32 1.0, %v3405
          %v3407 = vrcp.pop %v3376
          %v3408 = vmul.f32 1.0, %v3407
          %v3409 = vmul.f32 %v3298, %v3378
          %v3410 = vmul.f32 %v3300, %v3380
          %v3411 = vmul.f32 %v3302, %v3382
          %v3412 = vmul.f32 %v3304, %v3384
          %v3413 = vmul.f32 %v3306, %v3386
          %v3414 = vmul.f32 %v3308, %v3388
          %v3415 = vmul.f32 %v3310, %v3390
          %v3416 = vmul.f32 %v3312, %v3392
          %v3417 = vmul.f32 %v3314, %v3394
          %v3418 = vmul.f32 %v3316, %v3396
          %v3419 = vmul.f32 %v3318, %v3398
          %v3420 = vmul.f32 %v3320, %v3400
          %v3421 = vmul.f32 %v3322, %v3402
          %v3422 = vmul.f32 %v3324, %v3404
          %v3423 = vmul.f32 %v3326, %v3406
          %v3424 = vmul.f32 %v3328, %v3408
          %v3425 = vadd.f32 %v3409, %v3411
          %v3426 = vadd.f32 %v3410, %v3412
          %v3427 = vadd.f32 %v3417, %v3419
          %v3428 = vadd.f32 %v3418, %v3420
          %v3429 = vadd.f32 %v3425, %v3413
          %v3430 = vadd.f32 %v3426, %v3414
          %v3431 = vadd.f32 %v3427, %v3421
          %v3432 = vadd.f32 %v3428, %v3422
          %v3433 = vadd.f32 %v3429, %v3415
          %v3434 = vadd.f32 %v3430, %v3416
          %v3435 = vadd.f32 %v3431, %v3423
          %v3436 = vadd.f32 %v3432, %v3424
          %v3437 = vmul.f32 %v3433, 0.25
          %v3438 = vmul.f32 %v3434, 0.25
          %v3439 = vmul.f32 %v3435, 0.25
          %v3440 = vmul.f32 %v3436, 0.25
          %3441 = vst.msk [vmem:[%s784] sm:$0xff] %vm2856, %v3437
          %3442 = vst.msk [vmem:[%s784 + $0x8] sm:$0xff] %vm2856, %v3438
          %3443 = vst.msk [vmem:[%s784 + $0x10] sm:$0xff] %vm2856, %v3439
          %3444 = vst.msk [vmem:[%s784 + $0x18] sm:$0xff] %vm2856, %v3440
          %v3445 = vpack.c.bf16 %v3410, %v3409
          %v3446 = vpack.c.bf16 %v3412, %v3411
          %v3447 = vpack.c.bf16 %v3414, %v3413
          %v3448 = vpack.c.bf16 %v3416, %v3415
          %v3449 = vpack.c.bf16 %v3418, %v3417
          %v3450 = vpack.c.bf16 %v3420, %v3419
          %v3451 = vpack.c.bf16 %v3422, %v3421
          %v3452 = vpack.c.bf16 %v3424, %v3423
          %v3454 = vsel %vm2856, %v3445, 0
          %3456 = vmatprep.subr.bf16.mxu0 0
          %3457 = vmatpush1.bf16.msra.mxu0 %v2848
          %3458 = vmatprep.subr.bf16.mxu0 0
          %3459 = vmatpush1.bf16.msra.mxu0 0
          %3460 = vmatprep.subr.bf16.mxu0 0
          %3461 = vmatpush1.bf16.msra.mxu0 0
          %3462 = vmatprep.subr.bf16.mxu0 0
          %3463 = vmatpush1.bf16.msra.mxu0 0
          %3464 = vmatprep.subr.bf16.mxu0 0
          %3465 = vmatpush1.bf16.msra.mxu0 0
          %3466 = vmatprep.subr.bf16.mxu0 0
          %3467 = vmatpush1.bf16.msra.mxu0 0
          %3468 = vmatprep.subr.bf16.mxu0 0
          %3469 = vmatpush1.bf16.msra.mxu0 0
          %3470 = vmatprep.subr.bf16.mxu0 0
          %3471 = vmatpush1.bf16.msra.mxu0 0
          %3472 = vmatprep.subr.bf16.mxu0 0
          %3473 = vmatpush1.bf16.msra.mxu0 0
          %3474 = vmatprep.subr.bf16.mxu0 0
          %3475 = vmatpush1.bf16.msra.mxu0 0
          %3476 = vmatprep.subr.bf16.mxu0 0
          %3477 = vmatpush1.bf16.msra.mxu0 0
          %3478 = vmatprep.subr.bf16.mxu0 0
          %3479 = vmatpush1.bf16.msra.mxu0 0
          %3480 = vmatprep.subr.bf16.mxu0 0
          %3481 = vmatpush1.bf16.msra.mxu0 0
          %3482 = vmatprep.subr.bf16.mxu0 0
          %3483 = vmatpush1.bf16.msra.mxu0 0
          %3484 = vmatprep.subr.bf16.mxu0 0
          %3485 = vmatpush1.bf16.msra.mxu0 0
          %3486 = vmatprep.subr.bf16.mxu0 0
          %3487 = vmatpush1.bf16.msra.mxu0 0
          %3488 = vmatprep.mubr.bf16.mxu0 0
          %3489 = vmatmul.mubr.bf16.gmra.mrb[0].mxu0 %v3454
          %v3490 = vpop.f32.mrb[0].mxu0
          %v3491 = vadd.f32 0.0, %v3490
          %v3492 = vpop.f32.mrb[0].mxu0
          %v3493 = vpop.f32.mrb[0].mxu0
          %v3494 = vadd.f32 0.0, %v3493
          %v3495 = vpop.f32.mrb[0].mxu0
          %3496 = vdwg.mxu0
          %v3498 = vsel %vm2856, %v3446, 0
          %3500 = vmatprep.subr.bf16.mxu0 0
          %3501 = vmatpush1.bf16.msra.mxu0 %v2849
          %3502 = vmatprep.subr.bf16.mxu0 0
          %3503 = vmatpush1.bf16.msra.mxu0 0
          %3504 = vmatprep.subr.bf16.mxu0 0
          %3505 = vmatpush1.bf16.msra.mxu0 0
          %3506 = vmatprep.subr.bf16.mxu0 0
          %3507 = vmatpush1.bf16.msra.mxu0 0
          %3508 = vmatprep.subr.bf16.mxu0 0
          %3509 = vmatpush1.bf16.msra.mxu0 0
          %3510 = vmatprep.subr.bf16.mxu0 0
          %3511 = vmatpush1.bf16.msra.mxu0 0
          %3512 = vmatprep.subr.bf16.mxu0 0
          %3513 = vmatpush1.bf16.msra.mxu0 0
          %3514 = vmatprep.subr.bf16.mxu0 0
          %3515 = vmatpush1.bf16.msra.mxu0 0
          %3516 = vmatprep.subr.bf16.mxu0 0
          %3517 = vmatpush1.bf16.msra.mxu0 0
          %3518 = vmatprep.subr.bf16.mxu0 0
          %3519 = vmatpush1.bf16.msra.mxu0 0
          %3520 = vmatprep.subr.bf16.mxu0 0
          %3521 = vmatpush1.bf16.msra.mxu0 0
          %3522 = vmatprep.subr.bf16.mxu0 0
          %3523 = vmatpush1.bf16.msra.mxu0 0
          %3524 = vmatprep.subr.bf16.mxu0 0
          %3525 = vmatpush1.bf16.msra.mxu0 0
          %3526 = vmatprep.subr.bf16.mxu0 0
          %3527 = vmatpush1.bf16.msra.mxu0 0
          %3528 = vmatprep.subr.bf16.mxu0 0
          %3529 = vmatpush1.bf16.msra.mxu0 0
          %3530 = vmatprep.subr.bf16.mxu0 0
          %3531 = vmatpush1.bf16.msra.mxu0 0
          %3532 = vmatprep.mubr.bf16.mxu0 0
          %3533 = vmatmul.mubr.bf16.gmra.mrb[0].mxu0 %v3498
          %v3534 = vpop.f32.mrb[0].mxu0
          %v3535 = vadd.f32 0.0, %v3534
          %v3536 = vpop.f32.mrb[0].mxu0
          %v3537 = vpop.f32.mrb[0].mxu0
          %v3538 = vadd.f32 0.0, %v3537
          %v3539 = vpop.f32.mrb[0].mxu0
          %3540 = vdwg.mxu0
          %v3542 = vsel %vm2856, %v3447, 0
          %3544 = vmatprep.subr.bf16.mxu0 0
          %3545 = vmatpush1.bf16.msra.mxu0 %v2850
          %3546 = vmatprep.subr.bf16.mxu0 0
          %3547 = vmatpush1.bf16.msra.mxu0 0
          %3548 = vmatprep.subr.bf16.mxu0 0
          %3549 = vmatpush1.bf16.msra.mxu0 0
          %3550 = vmatprep.subr.bf16.mxu0 0
          %3551 = vmatpush1.bf16.msra.mxu0 0
          %3552 = vmatprep.subr.bf16.mxu0 0
          %3553 = vmatpush1.bf16.msra.mxu0 0
          %3554 = vmatprep.subr.bf16.mxu0 0
          %3555 = vmatpush1.bf16.msra.mxu0 0
          %3556 = vmatprep.subr.bf16.mxu0 0
          %3557 = vmatpush1.bf16.msra.mxu0 0
          %3558 = vmatprep.subr.bf16.mxu0 0
          %3559 = vmatpush1.bf16.msra.mxu0 0
          %3560 = vmatprep.subr.bf16.mxu0 0
          %3561 = vmatpush1.bf16.msra.mxu0 0
          %3562 = vmatprep.subr.bf16.mxu0 0
          %3563 = vmatpush1.bf16.msra.mxu0 0
          %3564 = vmatprep.subr.bf16.mxu0 0
          %3565 = vmatpush1.bf16.msra.mxu0 0
          %3566 = vmatprep.subr.bf16.mxu0 0
          %3567 = vmatpush1.bf16.msra.mxu0 0
          %3568 = vmatprep.subr.bf16.mxu0 0
          %3569 = vmatpush1.bf16.msra.mxu0 0
          %3570 = vmatprep.subr.bf16.mxu0 0
          %3571 = vmatpush1.bf16.msra.mxu0 0
          %3572 = vmatprep.subr.bf16.mxu0 0
          %3573 = vmatpush1.bf16.msra.mxu0 0
          %3574 = vmatprep.subr.bf16.mxu0 0
          %3575 = vmatpush1.bf16.msra.mxu0 0
          %3576 = vmatprep.mubr.bf16.mxu0 0
          %3577 = vmatmul.mubr.bf16.gmra.mrb[0].mxu0 %v3542
          %v3578 = vpop.f32.mrb[0].mxu0
          %v3579 = vadd.f32 0.0, %v3578
          %v3580 = vpop.f32.mrb[0].mxu0
          %v3581 = vpop.f32.mrb[0].mxu0
          %v3582 = vadd.f32 0.0, %v3581
          %v3583 = vpop.f32.mrb[0].mxu0
          %3584 = vdwg.mxu0
          %v3586 = vsel %vm2856, %v3448, 0
          %3588 = vmatprep.subr.bf16.mxu0 0
          %3589 = vmatpush1.bf16.msra.mxu0 %v2851
          %3590 = vmatprep.subr.bf16.mxu0 0
          %3591 = vmatpush1.bf16.msra.mxu0 0
          %3592 = vmatprep.subr.bf16.mxu0 0
          %3593 = vmatpush1.bf16.msra.mxu0 0
          %3594 = vmatprep.subr.bf16.mxu0 0
          %3595 = vmatpush1.bf16.msra.mxu0 0
          %3596 = vmatprep.subr.bf16.mxu0 0
          %3597 = vmatpush1.bf16.msra.mxu0 0
          %3598 = vmatprep.subr.bf16.mxu0 0
          %3599 = vmatpush1.bf16.msra.mxu0 0
          %3600 = vmatprep.subr.bf16.mxu0 0
          %3601 = vmatpush1.bf16.msra.mxu0 0
          %3602 = vmatprep.subr.bf16.mxu0 0
          %3603 = vmatpush1.bf16.msra.mxu0 0
          %3604 = vmatprep.subr.bf16.mxu0 0
          %3605 = vmatpush1.bf16.msra.mxu0 0
          %3606 = vmatprep.subr.bf16.mxu0 0
          %3607 = vmatpush1.bf16.msra.mxu0 0
          %3608 = vmatprep.subr.bf16.mxu0 0
          %3609 = vmatpush1.bf16.msra.mxu0 0
          %3610 = vmatprep.subr.bf16.mxu0 0
          %3611 = vmatpush1.bf16.msra.mxu0 0
          %3612 = vmatprep.subr.bf16.mxu0 0
          %3613 = vmatpush1.bf16.msra.mxu0 0
          %3614 = vmatprep.subr.bf16.mxu0 0
          %3615 = vmatpush1.bf16.msra.mxu0 0
          %3616 = vmatprep.subr.bf16.mxu0 0
          %3617 = vmatpush1.bf16.msra.mxu0 0
          %3618 = vmatprep.subr.bf16.mxu0 0
          %3619 = vmatpush1.bf16.msra.mxu0 0
          %3620 = vmatprep.mubr.bf16.mxu0 0
          %3621 = vmatmul.mubr.bf16.gmra.mrb[0].mxu0 %v3586
          %v3622 = vpop.f32.mrb[0].mxu0
          %v3623 = vadd.f32 0.0, %v3622
          %v3624 = vpop.f32.mrb[0].mxu0
          %v3625 = vpop.f32.mrb[0].mxu0
          %v3626 = vadd.f32 0.0, %v3625
          %v3627 = vpop.f32.mrb[0].mxu0
          %3628 = vdwg.mxu0
          %v3630 = vsel %vm2856, %v3449, 0
          %3632 = vmatprep.subr.bf16.mxu0 0
          %3633 = vmatpush1.bf16.msra.mxu0 %v2852
          %3634 = vmatprep.subr.bf16.mxu0 0
          %3635 = vmatpush1.bf16.msra.mxu0 0
          %3636 = vmatprep.subr.bf16.mxu0 0
          %3637 = vmatpush1.bf16.msra.mxu0 0
          %3638 = vmatprep.subr.bf16.mxu0 0
          %3639 = vmatpush1.bf16.msra.mxu0 0
          %3640 = vmatprep.subr.bf16.mxu0 0
          %3641 = vmatpush1.bf16.msra.mxu0 0
          %3642 = vmatprep.subr.bf16.mxu0 0
          %3643 = vmatpush1.bf16.msra.mxu0 0
          %3644 = vmatprep.subr.bf16.mxu0 0
          %3645 = vmatpush1.bf16.msra.mxu0 0
          %3646 = vmatprep.subr.bf16.mxu0 0
          %3647 = vmatpush1.bf16.msra.mxu0 0
          %3648 = vmatprep.subr.bf16.mxu0 0
          %3649 = vmatpush1.bf16.msra.mxu0 0
          %3650 = vmatprep.subr.bf16.mxu0 0
          %3651 = vmatpush1.bf16.msra.mxu0 0
          %3652 = vmatprep.subr.bf16.mxu0 0
          %3653 = vmatpush1.bf16.msra.mxu0 0
          %3654 = vmatprep.subr.bf16.mxu0 0
          %3655 = vmatpush1.bf16.msra.mxu0 0
          %3656 = vmatprep.subr.bf16.mxu0 0
          %3657 = vmatpush1.bf16.msra.mxu0 0
          %3658 = vmatprep.subr.bf16.mxu0 0
          %3659 = vmatpush1.bf16.msra.mxu0 0
          %3660 = vmatprep.subr.bf16.mxu0 0
          %3661 = vmatpush1.bf16.msra.mxu0 0
          %3662 = vmatprep.subr.bf16.mxu0 0
          %3663 = vmatpush1.bf16.msra.mxu0 0
          %3664 = vmatprep.mubr.bf16.mxu0 0
          %3665 = vmatmul.mubr.bf16.gmra.mrb[0].mxu0 %v3630
          %v3666 = vpop.f32.mrb[0].mxu0
          %v3667 = vadd.f32 0.0, %v3666
          %v3668 = vpop.f32.mrb[0].mxu0
          %v3669 = vpop.f32.mrb[0].mxu0
          %v3670 = vadd.f32 0.0, %v3669
          %v3671 = vpop.f32.mrb[0].mxu0
          %3672 = vdwg.mxu0
          %v3674 = vsel %vm2856, %v3450, 0
          %3676 = vmatprep.subr.bf16.mxu0 0
          %3677 = vmatpush1.bf16.msra.mxu0 %v2853
          %3678 = vmatprep.subr.bf16.mxu0 0
          %3679 = vmatpush1.bf16.msra.mxu0 0
          %3680 = vmatprep.subr.bf16.mxu0 0
          %3681 = vmatpush1.bf16.msra.mxu0 0
          %3682 = vmatprep.subr.bf16.mxu0 0
          %3683 = vmatpush1.bf16.msra.mxu0 0
          %3684 = vmatprep.subr.bf16.mxu0 0
          %3685 = vmatpush1.bf16.msra.mxu0 0
          %3686 = vmatprep.subr.bf16.mxu0 0
          %3687 = vmatpush1.bf16.msra.mxu0 0
          %3688 = vmatprep.subr.bf16.mxu0 0
          %3689 = vmatpush1.bf16.msra.mxu0 0
          %3690 = vmatprep.subr.bf16.mxu0 0
          %3691 = vmatpush1.bf16.msra.mxu0 0
          %3692 = vmatprep.subr.bf16.mxu0 0
          %3693 = vmatpush1.bf16.msra.mxu0 0
          %3694 = vmatprep.subr.bf16.mxu0 0
          %3695 = vmatpush1.bf16.msra.mxu0 0
          %3696 = vmatprep.subr.bf16.mxu0 0
          %3697 = vmatpush1.bf16.msra.mxu0 0
          %3698 = vmatprep.subr.bf16.mxu0 0
          %3699 = vmatpush1.bf16.msra.mxu0 0
          %3700 = vmatprep.subr.bf16.mxu0 0
          %3701 = vmatpush1.bf16.msra.mxu0 0
          %3702 = vmatprep.subr.bf16.mxu0 0
          %3703 = vmatpush1.bf16.msra.mxu0 0
          %3704 = vmatprep.subr.bf16.mxu0 0
          %3705 = vmatpush1.bf16.msra.mxu0 0
          %3706 = vmatprep.subr.bf16.mxu0 0
          %3707 = vmatpush1.bf16.msra.mxu0 0
          %3708 = vmatprep.mubr.bf16.mxu0 0
          %3709 = vmatmul.mubr.bf16.gmra.mrb[0].mxu0 %v3674
          %v3710 = vpop.f32.mrb[0].mxu0
          %v3711 = vadd.f32 0.0, %v3710
          %v3712 = vpop.f32.mrb[0].mxu0
          %v3713 = vpop.f32.mrb[0].mxu0
          %v3714 = vadd.f32 0.0, %v3713
          %v3715 = vpop.f32.mrb[0].mxu0
          %3716 = vdwg.mxu0
          %v3718 = vsel %vm2856, %v3451, 0
          %3720 = vmatprep.subr.bf16.mxu0 0
          %3721 = vmatpush1.bf16.msra.mxu0 %v2854
          %3722 = vmatprep.subr.bf16.mxu0 0
          %3723 = vmatpush1.bf16.msra.mxu0 0
          %3724 = vmatprep.subr.bf16.mxu0 0
          %3725 = vmatpush1.bf16.msra.mxu0 0
          %3726 = vmatprep.subr.bf16.mxu0 0
          %3727 = vmatpush1.bf16.msra.mxu0 0
          %3728 = vmatprep.subr.bf16.mxu0 0
          %3729 = vmatpush1.bf16.msra.mxu0 0
          %3730 = vmatprep.subr.bf16.mxu0 0
          %3731 = vmatpush1.bf16.msra.mxu0 0
          %3732 = vmatprep.subr.bf16.mxu0 0
          %3733 = vmatpush1.bf16.msra.mxu0 0
          %3734 = vmatprep.subr.bf16.mxu0 0
          %3735 = vmatpush1.bf16.msra.mxu0 0
          %3736 = vmatprep.subr.bf16.mxu0 0
          %3737 = vmatpush1.bf16.msra.mxu0 0
          %3738 = vmatprep.subr.bf16.mxu0 0
          %3739 = vmatpush1.bf16.msra.mxu0 0
          %3740 = vmatprep.subr.bf16.mxu0 0
          %3741 = vmatpush1.bf16.msra.mxu0 0
          %3742 = vmatprep.subr.bf16.mxu0 0
          %3743 = vmatpush1.bf16.msra.mxu0 0
          %3744 = vmatprep.subr.bf16.mxu0 0
          %3745 = vmatpush1.bf16.msra.mxu0 0
          %3746 = vmatprep.subr.bf16.mxu0 0
          %3747 = vmatpush1.bf16.msra.mxu0 0
          %3748 = vmatprep.subr.bf16.mxu0 0
          %3749 = vmatpush1.bf16.msra.mxu0 0
          %3750 = vmatprep.subr.bf16.mxu0 0
          %3751 = vmatpush1.bf16.msra.mxu0 0
          %3752 = vmatprep.mubr.bf16.mxu0 0
          %3753 = vmatmul.mubr.bf16.gmra.mrb[0].mxu0 %v3718
          %v3754 = vpop.f32.mrb[0].mxu0
          %v3755 = vadd.f32 0.0, %v3754
          %v3756 = vpop.f32.mrb[0].mxu0
          %v3757 = vpop.f32.mrb[0].mxu0
          %v3758 = vadd.f32 0.0, %v3757
          %v3759 = vpop.f32.mrb[0].mxu0
          %3760 = vdwg.mxu0
          %v3762 = vsel %vm2856, %v3452, 0
          %3764 = vmatprep.subr.bf16.mxu0 0
          %3765 = vmatpush1.bf16.msra.mxu0 %v2855
          %3766 = vmatprep.subr.bf16.mxu0 0
          %3767 = vmatpush1.bf16.msra.mxu0 0
          %3768 = vmatprep.subr.bf16.mxu0 0
          %3769 = vmatpush1.bf16.msra.mxu0 0
          %3770 = vmatprep.subr.bf16.mxu0 0
          %3771 = vmatpush1.bf16.msra.mxu0 0
          %3772 = vmatprep.subr.bf16.mxu0 0
          %3773 = vmatpush1.bf16.msra.mxu0 0
          %3774 = vmatprep.subr.bf16.mxu0 0
          %3775 = vmatpush1.bf16.msra.mxu0 0
          %3776 = vmatprep.subr.bf16.mxu0 0
          %3777 = vmatpush1.bf16.msra.mxu0 0
          %3778 = vmatprep.subr.bf16.mxu0 0
          %3779 = vmatpush1.bf16.msra.mxu0 0
          %3780 = vmatprep.subr.bf16.mxu0 0
          %3781 = vmatpush1.bf16.msra.mxu0 0
          %3782 = vmatprep.subr.bf16.mxu0 0
          %3783 = vmatpush1.bf16.msra.mxu0 0
          %3784 = vmatprep.subr.bf16.mxu0 0
          %3785 = vmatpush1.bf16.msra.mxu0 0
          %3786 = vmatprep.subr.bf16.mxu0 0
          %3787 = vmatpush1.bf16.msra.mxu0 0
          %3788 = vmatprep.subr.bf16.mxu0 0
          %3789 = vmatpush1.bf16.msra.mxu0 0
          %3790 = vmatprep.subr.bf16.mxu0 0
          %3791 = vmatpush1.bf16.msra.mxu0 0
          %3792 = vmatprep.subr.bf16.mxu0 0
          %3793 = vmatpush1.bf16.msra.mxu0 0
          %3794 = vmatprep.subr.bf16.mxu0 0
          %3795 = vmatpush1.bf16.msra.mxu0 0
          %3796 = vmatprep.mubr.bf16.mxu0 0
          %3797 = vmatmul.mubr.bf16.gmra.mrb[0].mxu0 %v3762
          %v3798 = vpop.f32.mrb[0].mxu0
          %v3799 = vadd.f32 0.0, %v3798
          %v3800 = vpop.f32.mrb[0].mxu0
          %v3801 = vpop.f32.mrb[0].mxu0
          %v3802 = vadd.f32 0.0, %v3801
          %v3803 = vpop.f32.mrb[0].mxu0
          %3804 = vdwg.mxu0
          %v3805 = vcombine.low %v3491, %v3579
          %v3806 = vcombine.high %v3491, %v3579
          %v3808 = vunpack.c.l.s4 1983009808
          %v3809 = vunpack.c.0.s8 %v3808
          %v3810 = vlaneseq
          %v3811 = vshrl.u32 %v3810, 7
          %v3812 = vsub.s32 %v3809, %v3811
          %v3813 = vrot.slane %v3805, %v3812
          %v3815 = vunpack.c.l.s4 1983009808
          %v3816 = vunpack.c.0.s8 %v3815
          %v3817 = vlaneseq
          %v3818 = vshrl.u32 %v3817, 7
          %v3819 = vsub.s32 %v3816, %v3818
          %v3820 = vrot.slane %v3806, %v3819
          %v3821 = vcombine.low %v3535, %v3623
          %v3822 = vcombine.high %v3535, %v3623
          %v3824 = vunpack.c.l.s4 1983009808
          %v3825 = vunpack.c.0.s8 %v3824
          %v3826 = vlaneseq
          %v3827 = vshrl.u32 %v3826, 7
          %v3828 = vsub.s32 %v3825, %v3827
          %v3829 = vrot.slane %v3821, %v3828
          %v3831 = vunpack.c.l.s4 1983009808
          %v3832 = vunpack.c.0.s8 %v3831
          %v3833 = vlaneseq
          %v3834 = vshrl.u32 %v3833, 7
          %v3835 = vsub.s32 %v3832, %v3834
          %v3836 = vrot.slane %v3822, %v3835
          %v3837 = vcombine.low %v3813, %v3829
          %v3838 = vcombine.high %v3813, %v3829
          %v3840 = vunpack.c.l.s4 1934713408
          %v3841 = vunpack.c.0.s8 %v3840
          %v3842 = vlaneseq
          %v3843 = vshrl.u32 %v3842, 7
          %v3844 = vsub.s32 %v3841, %v3843
          %v3845 = vrot.slane %v3837, %v3844
          %v3847 = vunpack.c.l.s4 1934713408
          %v3848 = vunpack.c.0.s8 %v3847
          %v3849 = vlaneseq
          %v3850 = vshrl.u32 %v3849, 7
          %v3851 = vsub.s32 %v3848, %v3850
          %v3852 = vrot.slane %v3838, %v3851
          %v3853 = vcombine.low %v3820, %v3836
          %v3854 = vcombine.high %v3820, %v3836
          %v3856 = vunpack.c.l.s4 1934713408
          %v3857 = vunpack.c.0.s8 %v3856
          %v3858 = vlaneseq
          %v3859 = vshrl.u32 %v3858, 7
          %v3860 = vsub.s32 %v3857, %v3859
          %v3861 = vrot.slane %v3853, %v3860
          %v3863 = vunpack.c.l.s4 1934713408
          %v3864 = vunpack.c.0.s8 %v3863
          %v3865 = vlaneseq
          %v3866 = vshrl.u32 %v3865, 7
          %v3867 = vsub.s32 %v3864, %v3866
          %v3868 = vrot.slane %v3854, %v3867
          %v3869 = vcombine.high %v3845, 0.0
          %v3870 = vcombine.high %v3852, 0.0
          %v3871 = vcombine.high %v3861, 0.0
          %v3872 = vcombine.high %v3868, 0.0
          %v3873 = vcombine.low %v3494, %v3582
          %v3874 = vcombine.high %v3494, %v3582
          %v3876 = vunpack.c.l.s4 1983009808
          %v3877 = vunpack.c.0.s8 %v3876
          %v3878 = vlaneseq
          %v3879 = vshrl.u32 %v3878, 7
          %v3880 = vsub.s32 %v3877, %v3879
          %v3881 = vrot.slane %v3873, %v3880
          %v3883 = vunpack.c.l.s4 1983009808
          %v3884 = vunpack.c.0.s8 %v3883
          %v3885 = vlaneseq
          %v3886 = vshrl.u32 %v3885, 7
          %v3887 = vsub.s32 %v3884, %v3886
          %v3888 = vrot.slane %v3874, %v3887
          %v3889 = vcombine.low %v3538, %v3626
          %v3890 = vcombine.high %v3538, %v3626
          %v3892 = vunpack.c.l.s4 1983009808
          %v3893 = vunpack.c.0.s8 %v3892
          %v3894 = vlaneseq
          %v3895 = vshrl.u32 %v3894, 7
          %v3896 = vsub.s32 %v3893, %v3895
          %v3897 = vrot.slane %v3889, %v3896
          %v3899 = vunpack.c.l.s4 1983009808
          %v3900 = vunpack.c.0.s8 %v3899
          %v3901 = vlaneseq
          %v3902 = vshrl.u32 %v3901, 7
          %v3903 = vsub.s32 %v3900, %v3902
          %v3904 = vrot.slane %v3890, %v3903
          %v3905 = vcombine.low %v3881, %v3897
          %v3906 = vcombine.high %v3881, %v3897
          %v3908 = vunpack.c.l.s4 1934713408
          %v3909 = vunpack.c.0.s8 %v3908
          %v3910 = vlaneseq
          %v3911 = vshrl.u32 %v3910, 7
          %v3912 = vsub.s32 %v3909, %v3911
          %v3913 = vrot.slane %v3905, %v3912
          %v3915 = vunpack.c.l.s4 1934713408
          %v3916 = vunpack.c.0.s8 %v3915
          %v3917 = vlaneseq
          %v3918 = vshrl.u32 %v3917, 7
          %v3919 = vsub.s32 %v3916, %v3918
          %v3920 = vrot.slane %v3906, %v3919
          %v3921 = vcombine.low %v3888, %v3904
          %v3922 = vcombine.high %v3888, %v3904
          %v3924 = vunpack.c.l.s4 1934713408
          %v3925 = vunpack.c.0.s8 %v3924
          %v3926 = vlaneseq
          %v3927 = vshrl.u32 %v3926, 7
          %v3928 = vsub.s32 %v3925, %v3927
          %v3929 = vrot.slane %v3921, %v3928
          %v3931 = vunpack.c.l.s4 1934713408
          %v3932 = vunpack.c.0.s8 %v3931
          %v3933 = vlaneseq
          %v3934 = vshrl.u32 %v3933, 7
          %v3935 = vsub.s32 %v3932, %v3934
          %v3936 = vrot.slane %v3922, %v3935
          %v3937 = vcombine.high %v3913, 0.0
          %v3938 = vcombine.high %v3920, 0.0
          %v3939 = vcombine.high %v3929, 0.0
          %v3940 = vcombine.high %v3936, 0.0
          %v3941 = vcombine.low %v3667, %v3755
          %v3942 = vcombine.high %v3667, %v3755
          %v3944 = vunpack.c.l.s4 1983009808
          %v3945 = vunpack.c.0.s8 %v3944
          %v3946 = vlaneseq
          %v3947 = vshrl.u32 %v3946, 7
          %v3948 = vsub.s32 %v3945, %v3947
          %v3949 = vrot.slane %v3941, %v3948
          %v3951 = vunpack.c.l.s4 1983009808
          %v3952 = vunpack.c.0.s8 %v3951
          %v3953 = vlaneseq
          %v3954 = vshrl.u32 %v3953, 7
          %v3955 = vsub.s32 %v3952, %v3954
          %v3956 = vrot.slane %v3942, %v3955
          %v3957 = vcombine.low %v3711, %v3799
          %v3958 = vcombine.high %v3711, %v3799
          %v3960 = vunpack.c.l.s4 1983009808
          %v3961 = vunpack.c.0.s8 %v3960
          %v3962 = vlaneseq
          %v3963 = vshrl.u32 %v3962, 7
          %v3964 = vsub.s32 %v3961, %v3963
          %v3965 = vrot.slane %v3957, %v3964
          %v3967 = vunpack.c.l.s4 1983009808
          %v3968 = vunpack.c.0.s8 %v3967
          %v3969 = vlaneseq
          %v3970 = vshrl.u32 %v3969, 7
          %v3971 = vsub.s32 %v3968, %v3970
          %v3972 = vrot.slane %v3958, %v3971
          %v3973 = vcombine.low %v3949, %v3965
          %v3974 = vcombine.high %v3949, %v3965
          %v3976 = vunpack.c.l.s4 1934713408
          %v3977 = vunpack.c.0.s8 %v3976
          %v3978 = vlaneseq
          %v3979 = vshrl.u32 %v3978, 7
          %v3980 = vsub.s32 %v3977, %v3979
          %v3981 = vrot.slane %v3973, %v3980
          %v3983 = vunpack.c.l.s4 1934713408
          %v3984 = vunpack.c.0.s8 %v3983
          %v3985 = vlaneseq
          %v3986 = vshrl.u32 %v3985, 7
          %v3987 = vsub.s32 %v3984, %v3986
          %v3988 = vrot.slane %v3974, %v3987
          %v3989 = vcombine.low %v3956, %v3972
          %v3990 = vcombine.high %v3956, %v3972
          %v3992 = vunpack.c.l.s4 1934713408
          %v3993 = vunpack.c.0.s8 %v3992
          %v3994 = vlaneseq
          %v3995 = vshrl.u32 %v3994, 7
          %v3996 = vsub.s32 %v3993, %v3995
          %v3997 = vrot.slane %v3989, %v3996
          %v3999 = vunpack.c.l.s4 1934713408
          %v4000 = vunpack.c.0.s8 %v3999
          %v4001 = vlaneseq
          %v4002 = vshrl.u32 %v4001, 7
          %v4003 = vsub.s32 %v4000, %v4002
          %v4004 = vrot.slane %v3990, %v4003
          %v4005 = vcombine.high %v3981, 0.0
          %v4006 = vcombine.high %v3988, 0.0
          %v4007 = vcombine.high %v3997, 0.0
          %v4008 = vcombine.high %v4004, 0.0
          %v4009 = vcombine.low %v3670, %v3758
          %v4010 = vcombine.high %v3670, %v3758
          %v4012 = vunpack.c.l.s4 1983009808
          %v4013 = vunpack.c.0.s8 %v4012
          %v4014 = vlaneseq
          %v4015 = vshrl.u32 %v4014, 7
          %v4016 = vsub.s32 %v4013, %v4015
          %v4017 = vrot.slane %v4009, %v4016
          %v4019 = vunpack.c.l.s4 1983009808
          %v4020 = vunpack.c.0.s8 %v4019
          %v4021 = vlaneseq
          %v4022 = vshrl.u32 %v4021, 7
          %v4023 = vsub.s32 %v4020, %v4022
          %v4024 = vrot.slane %v4010, %v4023
          %v4025 = vcombine.low %v3714, %v3802
          %v4026 = vcombine.high %v3714, %v3802
          %v4028 = vunpack.c.l.s4 1983009808
          %v4029 = vunpack.c.0.s8 %v4028
          %v4030 = vlaneseq
          %v4031 = vshrl.u32 %v4030, 7
          %v4032 = vsub.s32 %v4029, %v4031
          %v4033 = vrot.slane %v4025, %v4032
          %v4035 = vunpack.c.l.s4 1983009808
          %v4036 = vunpack.c.0.s8 %v4035
          %v4037 = vlaneseq
          %v4038 = vshrl.u32 %v4037, 7
          %v4039 = vsub.s32 %v4036, %v4038
          %v4040 = vrot.slane %v4026, %v4039
          %v4041 = vcombine.low %v4017, %v4033
          %v4042 = vcombine.high %v4017, %v4033
          %v4044 = vunpack.c.l.s4 1934713408
          %v4045 = vunpack.c.0.s8 %v4044
          %v4046 = vlaneseq
          %v4047 = vshrl.u32 %v4046, 7
          %v4048 = vsub.s32 %v4045, %v4047
          %v4049 = vrot.slane %v4041, %v4048
          %v4051 = vunpack.c.l.s4 1934713408
          %v4052 = vunpack.c.0.s8 %v4051
          %v4053 = vlaneseq
          %v4054 = vshrl.u32 %v4053, 7
          %v4055 = vsub.s32 %v4052, %v4054
          %v4056 = vrot.slane %v4042, %v4055
          %v4057 = vcombine.low %v4024, %v4040
          %v4058 = vcombine.high %v4024, %v4040
          %v4060 = vunpack.c.l.s4 1934713408
          %v4061 = vunpack.c.0.s8 %v4060
          %v4062 = vlaneseq
          %v4063 = vshrl.u32 %v4062, 7
          %v4064 = vsub.s32 %v4061, %v4063
          %v4065 = vrot.slane %v4057, %v4064
          %v4067 = vunpack.c.l.s4 1934713408
          %v4068 = vunpack.c.0.s8 %v4067
          %v4069 = vlaneseq
          %v4070 = vshrl.u32 %v4069, 7
          %v4071 = vsub.s32 %v4068, %v4070
          %v4072 = vrot.slane %v4058, %v4071
          %v4073 = vcombine.high %v4049, 0.0
          %v4074 = vcombine.high %v4056, 0.0
          %v4075 = vcombine.high %v4065, 0.0
          %v4076 = vcombine.high %v4072, 0.0
          %v4077 = vcombine.low %v3845, %v3852
          %v4079 = vunpack.c.l.s4 1983009808
          %v4080 = vunpack.c.0.s8 %v4079
          %v4081 = vlaneseq
          %v4082 = vshrl.u32 %v4081, 7
          %v4083 = vsub.s32 %v4080, %v4082
          %v4084 = vrot.slane %v4077, %v4083
          %v4085 = vcombine.low %v3869, %v3870
          %v4087 = vunpack.c.l.s4 1983009808
          %v4088 = vunpack.c.0.s8 %v4087
          %v4089 = vlaneseq
          %v4090 = vshrl.u32 %v4089, 7
          %v4091 = vsub.s32 %v4088, %v4090
          %v4092 = vrot.slane %v4085, %v4091
          %v4093 = vcombine.low %v3861, %v3868
          %v4095 = vunpack.c.l.s4 1983009808
          %v4096 = vunpack.c.0.s8 %v4095
          %v4097 = vlaneseq
          %v4098 = vshrl.u32 %v4097, 7
          %v4099 = vsub.s32 %v4096, %v4098
          %v4100 = vrot.slane %v4093, %v4099
          %v4101 = vcombine.low %v3871, %v3872
          %v4103 = vunpack.c.l.s4 1983009808
          %v4104 = vunpack.c.0.s8 %v4103
          %v4105 = vlaneseq
          %v4106 = vshrl.u32 %v4105, 7
          %v4107 = vsub.s32 %v4104, %v4106
          %v4108 = vrot.slane %v4101, %v4107
          %v4109 = vcombine.low %v4084, %v4092
          %v4110 = vcombine.high %v4084, %v4092
          %v4112 = vunpack.c.l.s4 1934713408
          %v4113 = vunpack.c.0.s8 %v4112
          %v4114 = vlaneseq
          %v4115 = vshrl.u32 %v4114, 7
          %v4116 = vsub.s32 %v4113, %v4115
          %v4117 = vrot.slane %v4109, %v4116
          %v4119 = vunpack.c.l.s4 1934713408
          %v4120 = vunpack.c.0.s8 %v4119
          %v4121 = vlaneseq
          %v4122 = vshrl.u32 %v4121, 7
          %v4123 = vsub.s32 %v4120, %v4122
          %v4124 = vrot.slane %v4110, %v4123
          %v4125 = vcombine.low %v4100, %v4108
          %v4126 = vcombine.high %v4100, %v4108
          %v4128 = vunpack.c.l.s4 1934713408
          %v4129 = vunpack.c.0.s8 %v4128
          %v4130 = vlaneseq
          %v4131 = vshrl.u32 %v4130, 7
          %v4132 = vsub.s32 %v4129, %v4131
          %v4133 = vrot.slane %v4125, %v4132
          %v4135 = vunpack.c.l.s4 1934713408
          %v4136 = vunpack.c.0.s8 %v4135
          %v4137 = vlaneseq
          %v4138 = vshrl.u32 %v4137, 7
          %v4139 = vsub.s32 %v4136, %v4138
          %v4140 = vrot.slane %v4126, %v4139
          %v4141 = vcombine.low %v4117, %v4133
          %v4142 = vcombine.high %v4117, %v4133
          %v4143 = vcombine.low %v4124, %v4140
          %v4144 = vcombine.high %v4124, %v4140
          %v4145 = vcombine.low %v3913, %v3920
          %v4147 = vunpack.c.l.s4 1983009808
          %v4148 = vunpack.c.0.s8 %v4147
          %v4149 = vlaneseq
          %v4150 = vshrl.u32 %v4149, 7
          %v4151 = vsub.s32 %v4148, %v4150
          %v4152 = vrot.slane %v4145, %v4151
          %v4153 = vcombine.low %v3937, %v3938
          %v4155 = vunpack.c.l.s4 1983009808
          %v4156 = vunpack.c.0.s8 %v4155
          %v4157 = vlaneseq
          %v4158 = vshrl.u32 %v4157, 7
          %v4159 = vsub.s32 %v4156, %v4158
          %v4160 = vrot.slane %v4153, %v4159
          %v4161 = vcombine.low %v3929, %v3936
          %v4163 = vunpack.c.l.s4 1983009808
          %v4164 = vunpack.c.0.s8 %v4163
          %v4165 = vlaneseq
          %v4166 = vshrl.u32 %v4165, 7
          %v4167 = vsub.s32 %v4164, %v4166
          %v4168 = vrot.slane %v4161, %v4167
          %v4169 = vcombine.low %v3939, %v3940
          %v4171 = vunpack.c.l.s4 1983009808
          %v4172 = vunpack.c.0.s8 %v4171
          %v4173 = vlaneseq
          %v4174 = vshrl.u32 %v4173, 7
          %v4175 = vsub.s32 %v4172, %v4174
          %v4176 = vrot.slane %v4169, %v4175
          %v4177 = vcombine.low %v4152, %v4160
          %v4178 = vcombine.high %v4152, %v4160
          %v4180 = vunpack.c.l.s4 1934713408
          %v4181 = vunpack.c.0.s8 %v4180
          %v4182 = vlaneseq
          %v4183 = vshrl.u32 %v4182, 7
          %v4184 = vsub.s32 %v4181, %v4183
          %v4185 = vrot.slane %v4177, %v4184
          %v4187 = vunpack.c.l.s4 1934713408
          %v4188 = vunpack.c.0.s8 %v4187
          %v4189 = vlaneseq
          %v4190 = vshrl.u32 %v4189, 7
          %v4191 = vsub.s32 %v4188, %v4190
          %v4192 = vrot.slane %v4178, %v4191
          %v4193 = vcombine.low %v4168, %v4176
          %v4194 = vcombine.high %v4168, %v4176
          %v4196 = vunpack.c.l.s4 1934713408
          %v4197 = vunpack.c.0.s8 %v4196
          %v4198 = vlaneseq
          %v4199 = vshrl.u32 %v4198, 7
          %v4200 = vsub.s32 %v4197, %v4199
          %v4201 = vrot.slane %v4193, %v4200
          %v4203 = vunpack.c.l.s4 1934713408
          %v4204 = vunpack.c.0.s8 %v4203
          %v4205 = vlaneseq
          %v4206 = vshrl.u32 %v4205, 7
          %v4207 = vsub.s32 %v4204, %v4206
          %v4208 = vrot.slane %v4194, %v4207
          %v4209 = vcombine.low %v4185, %v4201
          %v4210 = vcombine.high %v4185, %v4201
          %v4211 = vcombine.low %v4192, %v4208
          %v4212 = vcombine.high %v4192, %v4208
          %v4213 = vcombine.low %v3981, %v3988
          %v4215 = vunpack.c.l.s4 1983009808
          %v4216 = vunpack.c.0.s8 %v4215
          %v4217 = vlaneseq
          %v4218 = vshrl.u32 %v4217, 7
          %v4219 = vsub.s32 %v4216, %v4218
          %v4220 = vrot.slane %v4213, %v4219
          %v4221 = vcombine.low %v4005, %v4006
          %v4223 = vunpack.c.l.s4 1983009808
          %v4224 = vunpack.c.0.s8 %v4223
          %v4225 = vlaneseq
          %v4226 = vshrl.u32 %v4225, 7
          %v4227 = vsub.s32 %v4224, %v4226
          %v4228 = vrot.slane %v4221, %v4227
          %v4229 = vcombine.low %v3997, %v4004
          %v4231 = vunpack.c.l.s4 1983009808
          %v4232 = vunpack.c.0.s8 %v4231
          %v4233 = vlaneseq
          %v4234 = vshrl.u32 %v4233, 7
          %v4235 = vsub.s32 %v4232, %v4234
          %v4236 = vrot.slane %v4229, %v4235
          %v4237 = vcombine.low %v4007, %v4008
          %v4239 = vunpack.c.l.s4 1983009808
          %v4240 = vunpack.c.0.s8 %v4239
          %v4241 = vlaneseq
          %v4242 = vshrl.u32 %v4241, 7
          %v4243 = vsub.s32 %v4240, %v4242
          %v4244 = vrot.slane %v4237, %v4243
          %v4245 = vcombine.low %v4220, %v4228
          %v4246 = vcombine.high %v4220, %v4228
          %v4248 = vunpack.c.l.s4 1934713408
          %v4249 = vunpack.c.0.s8 %v4248
          %v4250 = vlaneseq
          %v4251 = vshrl.u32 %v4250, 7
          %v4252 = vsub.s32 %v4249, %v4251
          %v4253 = vrot.slane %v4245, %v4252
          %v4255 = vunpack.c.l.s4 1934713408
          %v4256 = vunpack.c.0.s8 %v4255
          %v4257 = vlaneseq
          %v4258 = vshrl.u32 %v4257, 7
          %v4259 = vsub.s32 %v4256, %v4258
          %v4260 = vrot.slane %v4246, %v4259
          %v4261 = vcombine.low %v4236, %v4244
          %v4262 = vcombine.high %v4236, %v4244
          %v4264 = vunpack.c.l.s4 1934713408
          %v4265 = vunpack.c.0.s8 %v4264
          %v4266 = vlaneseq
          %v4267 = vshrl.u32 %v4266, 7
          %v4268 = vsub.s32 %v4265, %v4267
          %v4269 = vrot.slane %v4261, %v4268
          %v4271 = vunpack.c.l.s4 1934713408
          %v4272 = vunpack.c.0.s8 %v4271
          %v4273 = vlaneseq
          %v4274 = vshrl.u32 %v4273, 7
          %v4275 = vsub.s32 %v4272, %v4274
          %v4276 = vrot.slane %v4262, %v4275
          %v4277 = vcombine.low %v4253, %v4269
          %v4278 = vcombine.high %v4253, %v4269
          %v4279 = vcombine.low %v4260, %v4276
          %v4280 = vcombine.high %v4260, %v4276
          %v4281 = vcombine.low %v4049, %v4056
          %v4283 = vunpack.c.l.s4 1983009808
          %v4284 = vunpack.c.0.s8 %v4283
          %v4285 = vlaneseq
          %v4286 = vshrl.u32 %v4285, 7
          %v4287 = vsub.s32 %v4284, %v4286
          %v4288 = vrot.slane %v4281, %v4287
          %v4289 = vcombine.low %v4073, %v4074
          %v4291 = vunpack.c.l.s4 1983009808
          %v4292 = vunpack.c.0.s8 %v4291
          %v4293 = vlaneseq
          %v4294 = vshrl.u32 %v4293, 7
          %v4295 = vsub.s32 %v4292, %v4294
          %v4296 = vrot.slane %v4289, %v4295
          %v4297 = vcombine.low %v4065, %v4072
          %v4299 = vunpack.c.l.s4 1983009808
          %v4300 = vunpack.c.0.s8 %v4299
          %v4301 = vlaneseq
          %v4302 = vshrl.u32 %v4301, 7
          %v4303 = vsub.s32 %v4300, %v4302
          %v4304 = vrot.slane %v4297, %v4303
          %v4305 = vcombine.low %v4075, %v4076
          %v4307 = vunpack.c.l.s4 1983009808
          %v4308 = vunpack.c.0.s8 %v4307
          %v4309 = vlaneseq
          %v4310 = vshrl.u32 %v4309, 7
          %v4311 = vsub.s32 %v4308, %v4310
          %v4312 = vrot.slane %v4305, %v4311
          %v4313 = vcombine.low %v4288, %v4296
          %v4314 = vcombine.high %v4288, %v4296
          %v4316 = vunpack.c.l.s4 1934713408
          %v4317 = vunpack.c.0.s8 %v4316
          %v4318 = vlaneseq
          %v4319 = vshrl.u32 %v4318, 7
          %v4320 = vsub.s32 %v4317, %v4319
          %v4321 = vrot.slane %v4313, %v4320
          %v4323 = vunpack.c.l.s4 1934713408
          %v4324 = vunpack.c.0.s8 %v4323
          %v4325 = vlaneseq
          %v4326 = vshrl.u32 %v4325, 7
          %v4327 = vsub.s32 %v4324, %v4326
          %v4328 = vrot.slane %v4314, %v4327
          %v4329 = vcombine.low %v4304, %v4312
          %v4330 = vcombine.high %v4304, %v4312
          %v4332 = vunpack.c.l.s4 1934713408
          %v4333 = vunpack.c.0.s8 %v4332
          %v4334 = vlaneseq
          %v4335 = vshrl.u32 %v4334, 7
          %v4336 = vsub.s32 %v4333, %v4335
          %v4337 = vrot.slane %v4329, %v4336
          %v4339 = vunpack.c.l.s4 1934713408
          %v4340 = vunpack.c.0.s8 %v4339
          %v4341 = vlaneseq
          %v4342 = vshrl.u32 %v4341, 7
          %v4343 = vsub.s32 %v4340, %v4342
          %v4344 = vrot.slane %v4330, %v4343
          %v4345 = vcombine.low %v4321, %v4337
          %v4346 = vcombine.high %v4321, %v4337
          %v4347 = vcombine.low %v4328, %v4344
          %v4348 = vcombine.high %v4328, %v4344
          %4353 = vrot.lane.b32.xlu0 %v4142, 16
          %v4354 = vpop.permute.xlu0 %4353
          %4355 = vrot.lane.b32.xlu0 %v4210, 16
          %v4356 = vpop.permute.xlu0 %4355
          %4357 = vrot.lane.b32.xlu0 %v4278, 16
          %v4358 = vpop.permute.xlu0 %4357
          %4359 = vrot.lane.b32.xlu0 %v4346, 16
          %v4360 = vpop.permute.xlu0 %4359
          %4369 = vrot.lane.b32.xlu0 %v4143, 32
          %v4370 = vpop.permute.xlu0 %4369
          %4371 = vrot.lane.b32.xlu0 %v4211, 32
          %v4372 = vpop.permute.xlu0 %4371
          %4373 = vrot.lane.b32.xlu0 %v4279, 32
          %v4374 = vpop.permute.xlu0 %4373
          %4375 = vrot.lane.b32.xlu0 %v4347, 32
          %v4376 = vpop.permute.xlu0 %4375
          %4385 = vrot.lane.b32.xlu0 %v4144, 48
          %v4386 = vpop.permute.xlu0 %4385
          %4387 = vrot.lane.b32.xlu0 %v4212, 48
          %v4388 = vpop.permute.xlu0 %4387
          %4389 = vrot.lane.b32.xlu0 %v4280, 48
          %v4390 = vpop.permute.xlu0 %4389
          %4391 = vrot.lane.b32.xlu0 %v4348, 48
          %v4392 = vpop.permute.xlu0 %4391
          %v4397 = vsel %vm2856, %v4141, %v4354
          %v4398 = vsel %vm2856, %v4209, %v4356
          %v4399 = vsel %vm2856, %v4277, %v4358
          %v4400 = vsel %vm2856, %v4345, %v4360
          %vm4401 = vcmask 261120
          %v4402 = vsel %vm4401, %v4397, %v4370
          %v4403 = vsel %vm4401, %v4398, %v4372
          %v4404 = vsel %vm4401, %v4399, %v4374
          %v4405 = vsel %vm4401, %v4400, %v4376
          %vm4406 = vcmask 392192
          %v4407 = vsel %vm4406, %v4402, %v4386
          %v4408 = vsel %vm4406, %v4403, %v4388
          %v4409 = vsel %vm4406, %v4404, %v4390
          %v4410 = vsel %vm4406, %v4405, %v4392
          %v4411 = vpack.c.bf16 %v4408, %v4407
          %v4412 = vpack.c.bf16 %v4410, %v4409
          %v4413 = vld [vmem:[%s815] sm:$0xf]
          %v4414 = vld [vmem:[%s815 + $0x4] sm:$0xf]
          %v4415 = vld [vmem:[%s815 + $0x8] sm:$0xf]
          %v4416 = vld [vmem:[%s815 + $0xc] sm:$0xf]
          %v4417 = vld [vmem:[%s815 + $0x10] sm:$0xf]
          %v4418 = vld [vmem:[%s815 + $0x14] sm:$0xf]
          %v4419 = vld [vmem:[%s815 + $0x18] sm:$0xf]
          %v4420 = vld [vmem:[%s815 + $0x1c] sm:$0xf]
          %v4429 = vunpack.c.l.b16 %v4413
          %v4430 = vunpack.c.l.b16 %v4414
          %v4431 = vunpack.c.l.b16 %v4415
          %v4432 = vunpack.c.l.b16 %v4416
          %v4433 = vunpack.c.l.b16 %v4417
          %v4434 = vunpack.c.l.b16 %v4418
          %v4435 = vunpack.c.l.b16 %v4419
          %v4436 = vunpack.c.l.b16 %v4420
          %v4437 = vpack.c.b16 %v4430, %v4429
          %v4438 = vpack.c.b16 %v4432, %v4431
          %v4439 = vpack.c.b16 %v4434, %v4433
          %v4440 = vpack.c.b16 %v4436, %v4435
          %v4446 = vsel %vm877, %v4411, 0
          %v4449 = vsel %vm877, %v4412, 0
          %4451 = vmatprep.subr.bf16.mxu0 0
          %4452 = vmatpush1.bf16.msra.mxu0 %v4437
          %4453 = vmatprep.subr.bf16.mxu0 0
          %4454 = vmatpush1.bf16.msra.mxu0 %v4438
          %4455 = vmatprep.subr.bf16.mxu0 0
          %4456 = vmatpush1.bf16.msra.mxu0 %v4439
          %4457 = vmatprep.subr.bf16.mxu0 0
          %4458 = vmatpush1.bf16.msra.mxu0 %v4440
          %4459 = vmatprep.subr.bf16.mxu0 0
          %4460 = vmatpush1.bf16.msra.mxu0 0
          %4461 = vmatprep.subr.bf16.mxu0 0
          %4462 = vmatpush1.bf16.msra.mxu0 0
          %4463 = vmatprep.subr.bf16.mxu0 0
          %4464 = vmatpush1.bf16.msra.mxu0 0
          %4465 = vmatprep.subr.bf16.mxu0 0
          %4466 = vmatpush1.bf16.msra.mxu0 0
          %4467 = vmatprep.subr.bf16.mxu0 0
          %4468 = vmatpush1.bf16.msra.mxu0 0
          %4469 = vmatprep.subr.bf16.mxu0 0
          %4470 = vmatpush1.bf16.msra.mxu0 0
          %4471 = vmatprep.subr.bf16.mxu0 0
          %4472 = vmatpush1.bf16.msra.mxu0 0
          %4473 = vmatprep.subr.bf16.mxu0 0
          %4474 = vmatpush1.bf16.msra.mxu0 0
          %4475 = vmatprep.subr.bf16.mxu0 0
          %4476 = vmatpush1.bf16.msra.mxu0 0
          %4477 = vmatprep.subr.bf16.mxu0 0
          %4478 = vmatpush1.bf16.msra.mxu0 0
          %4479 = vmatprep.subr.bf16.mxu0 0
          %4480 = vmatpush1.bf16.msra.mxu0 0
          %4481 = vmatprep.subr.bf16.mxu0 0
          %4482 = vmatpush1.bf16.msra.mxu0 0
          %4483 = vmatprep.mubr.bf16.mxu0 0
          %4484 = vmatmul.mubr.bf16.gmra.mrb[0].mxu0 %v4446
          %v4485 = vpop.f32.mrb[0].mxu0
          %v4486 = vadd.f32 0.0, %v4485
          %v4487 = vpop.f32.mrb[0].mxu0
          %v4488 = vpop.f32.mrb[0].mxu0
          %v4489 = vadd.f32 0.0, %v4488
          %v4490 = vpop.f32.mrb[0].mxu0
          %4491 = vmatprep.mubr.bf16.mxu0 0
          %4492 = vmatmul.mubr.bf16.gmra.mrb[0].mxu0 %v4449
          %v4493 = vpop.f32.mrb[0].mxu0
          %v4494 = vadd.f32 0.0, %v4493
          %v4495 = vpop.f32.mrb[0].mxu0
          %v4496 = vpop.f32.mrb[0].mxu0
          %v4497 = vadd.f32 0.0, %v4496
          %v4498 = vpop.f32.mrb[0].mxu0
          %4499 = vdwg.mxu0
          %v4500 = vadd.f32 %v871, %v4486
          %v4501 = vadd.f32 %v872, %v4489
          %v4502 = vadd.f32 %v873, %v4494
          %v4503 = vadd.f32 %v874, %v4497
          %v4504 = vld [vmem:[%s818] sm:$0x1]
          %v4506 = vlaneseq
          %v4507 = vshrl.u32 %v4506, 7
          %v4508 = vsub.s32 0, %v4507
          %v4509 = vrot.slane %v4504, %v4508
          %v4511 = vadd.f32 %v4500, %v4509
          %v4512 = vadd.f32 %v4501, %v4509
          %v4513 = vadd.f32 %v4502, %v4509
          %v4514 = vadd.f32 %v4503, %v4509
          %4515 = vst.msk [vmem:[#allocation2] sm:$0xff] %vm877, %v4511
          %4516 = vst.msk [vmem:[#allocation2 + $0x8] sm:$0xff] %vm877, %v4512
          %4517 = vst.msk [vmem:[#allocation2 + $0x10] sm:$0xff] %vm877, %v4513
          %4518 = vst.msk [vmem:[#allocation2 + $0x18] sm:$0xff] %vm877, %v4514
          %v4519 = vld [vmem:[%s821] sm:$0x1]
          %v4520 = vld [vmem:[%s824] sm:$0x1]
          %v4521 = vsel %vm877, %v4511, 0.0
          %4522 = vadd.xlane.f32.xlu0 %v4521
          %v4523 = vpop.xlane.xlu0 %4522
          %v4524 = vsel %vm877, %v4512, 0.0
          %4525 = vadd.xlane.f32.xlu0 %v4524
          %v4526 = vpop.xlane.xlu0 %4525
          %v4527 = vsel %vm877, %v4513, 0.0
          %4528 = vadd.xlane.f32.xlu0 %v4527
          %v4529 = vpop.xlane.xlu0 %4528
          %v4530 = vsel %vm877, %v4514, 0.0
          %4531 = vadd.xlane.f32.xlu0 %v4530
          %v4532 = vpop.xlane.xlu0 %4531
          %v4533 = vmul.f32 %v4523, %v890
          %v4534 = vmul.f32 %v4526, %v890
          %v4535 = vmul.f32 %v4529, %v890
          %v4536 = vmul.f32 %v4532, %v890
          %v4537 = vsub.f32 %v4511, %v4533
          %v4538 = vsub.f32 %v4512, %v4534
          %v4539 = vsub.f32 %v4513, %v4535
          %v4540 = vsub.f32 %v4514, %v4536
          %v4541 = vmul.f32 %v4537, %v4537
          %v4542 = vmul.f32 %v4538, %v4538
          %v4543 = vmul.f32 %v4539, %v4539
          %v4544 = vmul.f32 %v4540, %v4540
          %v4545 = vsel %vm877, %v4541, 0.0
          %4546 = vadd.xlane.f32.xlu0 %v4545
          %v4547 = vpop.xlane.xlu0 %4546
          %v4548 = vsel %vm877, %v4542, 0.0
          %4549 = vadd.xlane.f32.xlu0 %v4548
          %v4550 = vpop.xlane.xlu0 %4549
          %v4551 = vsel %vm877, %v4543, 0.0
          %4552 = vadd.xlane.f32.xlu0 %v4551
          %v4553 = vpop.xlane.xlu0 %4552
          %v4554 = vsel %vm877, %v4544, 0.0
          %4555 = vadd.xlane.f32.xlu0 %v4554
          %v4556 = vpop.xlane.xlu0 %4555
          %v4557 = vmul.f32 %v4547, %v890
          %v4558 = vmul.f32 %v4550, %v890
          %v4559 = vmul.f32 %v4553, %v890
          %v4560 = vmul.f32 %v4556, %v890
          %v4561 = vadd.f32 %v4557, 1e-05
          %v4562 = vadd.f32 %v4558, 1e-05
          %v4563 = vadd.f32 %v4559, 1e-05
          %v4564 = vadd.f32 %v4560, 1e-05
          %v4565 = vrsqrt.pop %v4561
          %v4566 = vrsqrt.pop %v4562
          %v4567 = vrsqrt.pop %v4563
          %v4568 = vrsqrt.pop %v4564
          %v4569 = vmul.f32 %v4537, %v4565
          %v4570 = vmul.f32 %v4538, %v4566
          %v4571 = vmul.f32 %v4539, %v4567
          %v4572 = vmul.f32 %v4540, %v4568
          %v4574 = vlaneseq
          %v4575 = vshrl.u32 %v4574, 7
          %v4576 = vsub.s32 0, %v4575
          %v4577 = vrot.slane %v4519, %v4576
          %v4579 = vmul.f32 %v4569, %v4577
          %v4580 = vmul.f32 %v4570, %v4577
          %v4581 = vmul.f32 %v4571, %v4577
          %v4582 = vmul.f32 %v4572, %v4577
          %v4584 = vlaneseq
          %v4585 = vshrl.u32 %v4584, 7
          %v4586 = vsub.s32 0, %v4585
          %v4587 = vrot.slane %v4520, %v4586
          %v4589 = vadd.f32 %v4579, %v4587
          %v4590 = vadd.f32 %v4580, %v4587
          %v4591 = vadd.f32 %v4581, %v4587
          %v4592 = vadd.f32 %v4582, %v4587
          %v4593 = vpack.c.bf16 %v4590, %v4589
          %v4594 = vpack.c.bf16 %v4592, %v4591
          %4595 = vst.msk [vmem:[#allocation3] sm:$0xff] %vm877, %v4593
          %4596 = vst.msk [vmem:[#allocation3 + $0x8] sm:$0xff] %vm877, %v4594
        $region125: #{tpu_custom_call.1} parent=112 // pred_fallthru
          _
        %v4597 = vld [vmem:[#allocation3] sm:$0xff]
        %v4598 = vld [vmem:[#allocation3 + $0x8] sm:$0xff]
        %v4599 = vld [vmem:[%s677] sm:$0xf]
        %v4600 = vld [vmem:[%s677 + $0x4] sm:$0xf]
        %v4601 = vld [vmem:[%s677 + $0x8] sm:$0xf]
        %v4602 = vld [vmem:[%s677 + $0xc] sm:$0xf]
        %v4603 = vld [vmem:[%s677 + $0x10] sm:$0xf]
        %v4604 = vld [vmem:[%s677 + $0x14] sm:$0xf]
        %v4605 = vld [vmem:[%s677 + $0x18] sm:$0xf]
        %v4606 = vld [vmem:[%s677 + $0x1c] sm:$0xf]
        %v4607 = vld [vmem:[%s831] sm:$0x1]
        %v4609 = vlaneseq
        %v4610 = vshrl.u32 %v4609, 7
        %v4611 = vsub.s32 0, %v4610
        %v4612 = vrot.slane %v4607, %v4611
        %v4622 = vunpack.c.l.b16 %v4599
        %v4623 = vunpack.c.l.b16 %v4600
        %v4624 = vunpack.c.l.b16 %v4601
        %v4625 = vunpack.c.l.b16 %v4602
        %v4626 = vunpack.c.l.b16 %v4603
        %v4627 = vunpack.c.l.b16 %v4604
        %v4628 = vunpack.c.l.b16 %v4605
        %v4629 = vunpack.c.l.b16 %v4606
        %v4630 = vpack.c.b16 %v4623, %v4622
        %v4631 = vpack.c.b16 %v4625, %v4624
        %v4632 = vpack.c.b16 %v4627, %v4626
        %v4633 = vpack.c.b16 %v4629, %v4628
        %vm4638 = vcmask 523264
        %v4640 = vsel %vm4638, %v4597, 0
        %v4643 = vsel %vm4638, %v4598, 0
        %4645 = vmatprep.subr.bf16.mxu0 0
        %4646 = vmatpush1.bf16.msra.mxu0 %v4630
        %4647 = vmatprep.subr.bf16.mxu0 0
        %4648 = vmatpush1.bf16.msra.mxu0 %v4631
        %4649 = vmatprep.subr.bf16.mxu0 0
        %4650 = vmatpush1.bf16.msra.mxu0 %v4632
        %4651 = vmatprep.subr.bf16.mxu0 0
        %4652 = vmatpush1.bf16.msra.mxu0 %v4633
        %4653 = vmatprep.subr.bf16.mxu0 0
        %4654 = vmatpush1.bf16.msra.mxu0 0
        %4655 = vmatprep.subr.bf16.mxu0 0
        %4656 = vmatpush1.bf16.msra.mxu0 0
        %4657 = vmatprep.subr.bf16.mxu0 0
        %4658 = vmatpush1.bf16.msra.mxu0 0
        %4659 = vmatprep.subr.bf16.mxu0 0
        %4660 = vmatpush1.bf16.msra.mxu0 0
        %4661 = vmatprep.subr.bf16.mxu0 0
        %4662 = vmatpush1.bf16.msra.mxu0 0
        %4663 = vmatprep.subr.bf16.mxu0 0
        %4664 = vmatpush1.bf16.msra.mxu0 0
        %4665 = vmatprep.subr.bf16.mxu0 0
        %4666 = vmatpush1.bf16.msra.mxu0 0
        %4667 = vmatprep.subr.bf16.mxu0 0
        %4668 = vmatpush1.bf16.msra.mxu0 0
        %4669 = vmatprep.subr.bf16.mxu0 0
        %4670 = vmatpush1.bf16.msra.mxu0 0
        %4671 = vmatprep.subr.bf16.mxu0 0
        %4672 = vmatpush1.bf16.msra.mxu0 0
        %4673 = vmatprep.subr.bf16.mxu0 0
        %4674 = vmatpush1.bf16.msra.mxu0 0
        %4675 = vmatprep.subr.bf16.mxu0 0
        %4676 = vmatpush1.bf16.msra.mxu0 0
        %4677 = vmatprep.mubr.bf16.mxu0 0
        %4678 = vmatmul.mubr.bf16.gmra.mrb[0].mxu0 %v4640
        %v4679 = vpop.f32.mrb[0].mxu0
        %v4680 = vadd.f32 %v4612, %v4679
        %v4681 = vpop.f32.mrb[0].mxu0
        %v4682 = vpop.f32.mrb[0].mxu0
        %v4683 = vadd.f32 %v4612, %v4682
        %v4684 = vpop.f32.mrb[0].mxu0
        %4685 = vmatprep.mubr.bf16.mxu0 0
        %4686 = vmatmul.mubr.bf16.gmra.mrb[0].mxu0 %v4643
        %v4687 = vpop.f32.mrb[0].mxu0
        %v4688 = vadd.f32 %v4612, %v4687
        %v4689 = vpop.f32.mrb[0].mxu0
        %v4690 = vpop.f32.mrb[0].mxu0
        %v4691 = vadd.f32 %v4612, %v4690
        %v4692 = vpop.f32.mrb[0].mxu0
        %4693 = vdwg.mxu0
        %v4694 = vmul.f32 %v4680, 1.702
        %v4695 = vmul.f32 %v4683, 1.702
        %v4696 = vmul.f32 %v4688, 1.702
        %v4697 = vmul.f32 %v4691, 1.702
        %v4698 = vxor.u32 %v4694, 2147483648
        %v4699 = vxor.u32 %v4695, 2147483648
        %v4700 = vxor.u32 %v4696, 2147483648
        %v4701 = vxor.u32 %v4697, 2147483648
        %v4702 = vmul.f32 %v4698, 1.442695
        %v4703 = vpow.pop %v4702
        %v4704 = vmul.f32 %v4699, 1.442695
        %v4705 = vpow.pop %v4704
        %v4706 = vmul.f32 %v4700, 1.442695
        %v4707 = vpow.pop %v4706
        %v4708 = vmul.f32 %v4701, 1.442695
        %v4709 = vpow.pop %v4708
        %v4710 = vadd.f32 %v4703, 1.0
        %v4711 = vadd.f32 %v4705, 1.0
        %v4712 = vadd.f32 %v4707, 1.0
        %v4713 = vadd.f32 %v4709, 1.0
        %v4714 = vrcp.pop %v4710
        %v4715 = vmul.f32 1.0, %v4714
        %v4716 = vrcp.pop %v4711
        %v4717 = vmul.f32 1.0, %v4716
        %v4718 = vrcp.pop %v4712
        %v4719 = vmul.f32 1.0, %v4718
        %v4720 = vrcp.pop %v4713
        %v4721 = vmul.f32 1.0, %v4720
        %v4722 = vmul.f32 %v4680, %v4715
        %v4723 = vmul.f32 %v4683, %v4717
        %v4724 = vmul.f32 %v4688, %v4719
        %v4725 = vmul.f32 %v4691, %v4721
        %v4726 = vpack.c.bf16 %v4723, %v4722
        %v4727 = vpack.c.bf16 %v4725, %v4724
        %v4728 = vld [vmem:[%s840] sm:$0xf]
        %v4729 = vld [vmem:[%s840 + $0x4] sm:$0xf]
        %v4730 = vld [vmem:[%s840 + $0x8] sm:$0xf]
        %v4731 = vld [vmem:[%s840 + $0xc] sm:$0xf]
        %v4732 = vld [vmem:[%s840 + $0x10] sm:$0xf]
        %v4733 = vld [vmem:[%s840 + $0x14] sm:$0xf]
        %v4734 = vld [vmem:[%s840 + $0x18] sm:$0xf]
        %v4735 = vld [vmem:[%s840 + $0x1c] sm:$0xf]
        %v4736 = vld [vmem:[%s840 + $0x20] sm:$0xf]
        %v4737 = vld [vmem:[%s840 + $0x24] sm:$0xf]
        %v4738 = vld [vmem:[%s840 + $0x28] sm:$0xf]
        %v4739 = vld [vmem:[%s840 + $0x2c] sm:$0xf]
        %v4740 = vld [vmem:[%s840 + $0x30] sm:$0xf]
        %v4741 = vld [vmem:[%s840 + $0x34] sm:$0xf]
        %v4742 = vld [vmem:[%s840 + $0x38] sm:$0xf]
        %v4743 = vld [vmem:[%s840 + $0x3c] sm:$0xf]
        %v4760 = vunpack.c.l.b16 %v4728
        %v4761 = vunpack.c.l.b16 %v4729
        %v4762 = vunpack.c.l.b16 %v4730
        %v4763 = vunpack.c.l.b16 %v4731
        %v4764 = vunpack.c.l.b16 %v4732
        %v4765 = vunpack.c.l.b16 %v4733
        %v4766 = vunpack.c.l.b16 %v4734
        %v4767 = vunpack.c.l.b16 %v4735
        %v4768 = vunpack.c.l.b16 %v4736
        %v4769 = vunpack.c.l.b16 %v4737
        %v4770 = vunpack.c.l.b16 %v4738
        %v4771 = vunpack.c.l.b16 %v4739
        %v4772 = vunpack.c.l.b16 %v4740
        %v4773 = vunpack.c.l.b16 %v4741
        %v4774 = vunpack.c.l.b16 %v4742
        %v4775 = vunpack.c.l.b16 %v4743
        %v4776 = vpack.c.b16 %v4761, %v4760
        %v4777 = vpack.c.b16 %v4763, %v4762
        %v4778 = vpack.c.b16 %v4765, %v4764
        %v4779 = vpack.c.b16 %v4767, %v4766
        %v4780 = vpack.c.b16 %v4769, %v4768
        %v4781 = vpack.c.b16 %v4771, %v4770
        %v4782 = vpack.c.b16 %v4773, %v4772
        %v4783 = vpack.c.b16 %v4775, %v4774
        %4792 = vmatprep.subr.bf16.mxu0 0
        %4793 = vmatpush1.bf16.msra.mxu0 %v4776
        %4794 = vmatprep.subr.bf16.mxu0 0
        %4795 = vmatpush1.bf16.msra.mxu0 %v4777
        %4796 = vmatprep.subr.bf16.mxu0 0
        %4797 = vmatpush1.bf16.msra.mxu0 %v4778
        %4798 = vmatprep.subr.bf16.mxu0 0
        %4799 = vmatpush1.bf16.msra.mxu0 %v4779
        %4800 = vmatprep.subr.bf16.mxu0 0
        %4801 = vmatpush1.bf16.msra.mxu0 %v4780
        %4802 = vmatprep.subr.bf16.mxu0 0
        %4803 = vmatpush1.bf16.msra.mxu0 %v4781
        %4804 = vmatprep.subr.bf16.mxu0 0
        %4805 = vmatpush1.bf16.msra.mxu0 %v4782
        %4806 = vmatprep.subr.bf16.mxu0 0
        %4807 = vmatpush1.bf16.msra.mxu0 %v4783
        %4808 = vmatprep.subr.bf16.mxu0 0
        %4809 = vmatpush1.bf16.msra.mxu0 0
        %4810 = vmatprep.subr.bf16.mxu0 0
        %4811 = vmatpush1.bf16.msra.mxu0 0
        %4812 = vmatprep.subr.bf16.mxu0 0
        %4813 = vmatpush1.bf16.msra.mxu0 0
        %4814 = vmatprep.subr.bf16.mxu0 0
        %4815 = vmatpush1.bf16.msra.mxu0 0
        %4816 = vmatprep.subr.bf16.mxu0 0
        %4817 = vmatpush1.bf16.msra.mxu0 0
        %4818 = vmatprep.subr.bf16.mxu0 0
        %4819 = vmatpush1.bf16.msra.mxu0 0
        %4820 = vmatprep.subr.bf16.mxu0 0
        %4821 = vmatpush1.bf16.msra.mxu0 0
        %4822 = vmatprep.subr.bf16.mxu0 0
        %4823 = vmatpush1.bf16.msra.mxu0 0
        %4824 = vmatprep.mubr.bf16.mxu0 0
        %4825 = vmatmul.mubr.bf16.gmra.mrb[0].mxu0 %v4726
        %v4826 = vpop.f32.mrb[0].mxu0
        %v4827 = vadd.f32 0.0, %v4826
        %v4828 = vpop.f32.mrb[0].mxu0
        %v4829 = vpop.f32.mrb[0].mxu0
        %v4830 = vadd.f32 0.0, %v4829
        %v4831 = vpop.f32.mrb[0].mxu0
        %4832 = vmatprep.mubr.bf16.mxu0 0
        %4833 = vmatmul.mubr.bf16.gmra.mrb[0].mxu0 %v4727
        %v4834 = vpop.f32.mrb[0].mxu0
        %v4835 = vadd.f32 0.0, %v4834
        %v4836 = vpop.f32.mrb[0].mxu0
        %v4837 = vpop.f32.mrb[0].mxu0
        %v4838 = vadd.f32 0.0, %v4837
        %v4839 = vpop.f32.mrb[0].mxu0
        %4840 = vdwg.mxu0
        %v4841 = vld [vmem:[#allocation2] sm:$0xff]
        %v4842 = vld [vmem:[#allocation2 + $0x8] sm:$0xff]
        %v4843 = vld [vmem:[#allocation2 + $0x10] sm:$0xff]
        %v4844 = vld [vmem:[#allocation2 + $0x18] sm:$0xff]
        %v4845 = vadd.f32 %v4841, %v4827
        %v4846 = vadd.f32 %v4842, %v4830
        %v4847 = vadd.f32 %v4843, %v4835
        %v4848 = vadd.f32 %v4844, %v4838
        %4849 = vst.msk [vmem:[#allocation2] sm:$0xff] %vm4638, %v4845
        %4850 = vst.msk [vmem:[#allocation2 + $0x8] sm:$0xff] %vm4638, %v4846
        %4851 = vst.msk [vmem:[#allocation2 + $0x10] sm:$0xff] %vm4638, %v4847
        %4852 = vst.msk [vmem:[#allocation2 + $0x18] sm:$0xff] %vm4638, %v4848
        %p4853 = scmp.eq.s32.totalorder %s40, 1
        // Predicated region
        $region126: #{tpu_custom_call.1} parent=112 // pred_check
          %p4854 = pneg %p4853
        $region127: #{tpu_custom_call.1} parent=112 // pred_check_branch
          %4856 = sbr.rel (%p4854) target = $region129
        $region128: #{tpu_custom_call.1} parent=112 // pred_region
          %v4857 = vld [vmem:[#allocation2] sm:$0xff]
          %v4858 = vld [vmem:[#allocation2 + $0x8] sm:$0xff]
          %v4859 = vld [vmem:[#allocation2 + $0x10] sm:$0xff]
          %v4860 = vld [vmem:[#allocation2 + $0x18] sm:$0xff]
          %v4861 = vld [vmem:[%s844] sm:$0x1]
          %v4863 = vlaneseq
          %v4864 = vshrl.u32 %v4863, 7
          %v4865 = vsub.s32 0, %v4864
          %v4866 = vrot.slane %v4861, %v4865
          %v4868 = vadd.f32 %v4857, %v4866
          %v4869 = vadd.f32 %v4858, %v4866
          %v4870 = vadd.f32 %v4859, %v4866
          %v4871 = vadd.f32 %v4860, %v4866
          %4872 = vst.msk [vmem:[#allocation2] sm:$0xff] %vm4638, %v4868
          %4873 = vst.msk [vmem:[#allocation2 + $0x8] sm:$0xff] %vm4638, %v4869
          %4874 = vst.msk [vmem:[#allocation2 + $0x10] sm:$0xff] %vm4638, %v4870
          %4875 = vst.msk [vmem:[#allocation2 + $0x18] sm:$0xff] %vm4638, %v4871
        $region129: #{tpu_custom_call.1} parent=112 // pred_fallthru
          _
        %p4876 = scmp.eq.s32.totalorder %s39, 2
        %p4877 = pnand %p4853, %p4876
        %p4878 = pneg %p4877
        // Predicated region
        $region130: #{tpu_custom_call.1} parent=112 // pred_check
          _
        $region131: #{tpu_custom_call.1} parent=112 // pred_check_branch
          %4880 = sbr.rel (%p4877) target = $region133
        $region132: #{tpu_custom_call.1} parent=112 // pred_region
          %v4881 = vld [vmem:[#allocation2] sm:$0xff]
          %v4882 = vld [vmem:[#allocation2 + $0x8] sm:$0xff]
          %v4883 = vld [vmem:[#allocation2 + $0x10] sm:$0xff]
          %v4884 = vld [vmem:[#allocation2 + $0x18] sm:$0xff]
          %4885 = vst.msk [vmem:[%s777] sm:$0xff] %vm4638, %v4881
          %4886 = vst.msk [vmem:[%s777 + $0x8] sm:$0xff] %vm4638, %v4882
          %4887 = vst.msk [vmem:[%s777 + $0x10] sm:$0xff] %vm4638, %v4883
          %4888 = vst.msk [vmem:[%s777 + $0x18] sm:$0xff] %vm4638, %v4884
        $region133: #{tpu_custom_call.1} parent=112 // pred_fallthru
          _
        %s4889 = sand.u32 %s430, 1
        %s4890 = scalar_lea.sflag [#allocation6], %s4889
        %s4891 = sand.u32 %s430, 1
        %s4892 = smul.addr %s4891, 32
        %s4893 = scalar_lea.vmem [#allocation5], %s4892
        %s4894 = sand.u32 %s458, 1
        %s4895 = scalar_lea.sflag [#allocation8], %s4894
        %s4896 = sand.u32 %s458, 1
        %s4897 = smul.addr %s4896, 32
        %s4898 = scalar_lea.vmem [#allocation7], %s4897
        // Predicated region
        $region134: #{tpu_custom_call.1} parent=112 // pred_check
          %p4899 = pneg %p440
        $region135: #{tpu_custom_call.1} parent=112 // pred_check_branch
          %4901 = sbr.rel (%p4899) target = $region137
        $region136: #{tpu_custom_call.1} parent=112 // pred_region
          %s4902 = smul.u32 2, %s38
          %s4904 = ssub.s32 512, 512
          %4905 = vsyncadd %s4890, %s4904
          %s4906 = smul.addr %s4902, 2
          %s4907 = smul.addr %s4906, 128
          %s4908 = scalar_lea.hbm %s14, %s4907
          %s4909 = sshll.u32 %s4893, 4
          %s4910 = int_to_ptr.vmem [resolvable:$true] %s4909
          %4915 = dma.vmem_to_hbm [thread:$0]  %s4910, 512, %s4908, %s4890, 128, 128, 8
        $region137: #{tpu_custom_call.1} parent=112 // pred_fallthru
          _
        // Predicated region
        $region138: #{tpu_custom_call.1} parent=112 // pred_check
          %p4916 = pneg %p468
        $region139: #{tpu_custom_call.1} parent=112 // pred_check_branch
          %4918 = sbr.rel (%p4916) target = $region141
        $region140: #{tpu_custom_call.1} parent=112 // pred_region
          %s4919 = smul.u32 2, %s38
          %s4921 = ssub.s32 512, 512
          %4922 = vsyncadd %s4895, %s4921
          %s4923 = smul.addr %s4919, 2
          %s4924 = smul.addr %s39, 8
          %s4925 = sadd.s32 %s4923, %s4924
          %s4926 = smul.addr %s4925, 128
          %s4927 = scalar_lea.hbm %s15, %s4926
          %s4928 = sshll.u32 %s4898, 4
          %s4929 = int_to_ptr.vmem [resolvable:$true] %s4928
          %4934 = dma.vmem_to_hbm [thread:$0]  %s4929, 512, %s4927, %s4895, 128, 128, 8
        $region141: #{tpu_custom_call.1} parent=112 // pred_fallthru
          _
      $region113: #{tpu_custom_call.1} parent=5 // pred_fallthru
        _
      %p4935 = scmp.le.s32.totalorder 2, %s28
      // Predicated region
      $region142: #{tpu_custom_call.1} parent=5 // pred_check
        %p4936 = pneg %p4935
      $region143: #{tpu_custom_call.1} parent=5 // pred_check_branch
        %4938 = sbr.rel (%p4936) target = $region145
      $region144: #{tpu_custom_call.1} parent=5 // pred_region
        %s4939 = ssub.s32 %s28, 2
        // Predicated region
        $region146: #{tpu_custom_call.1} parent=144 // pred_check
          %p4940 = pneg %p446
        $region147: #{tpu_custom_call.1} parent=144 // pred_check_branch
          %4942 = sbr.rel (%p4940) target = $region149
        $region148: #{tpu_custom_call.1} parent=144 // pred_region
          %s4943 = sand.u32 %s431, 1
          %s4944 = scalar_lea.sflag [#allocation6], %s4943
          %s4945 = sand.u32 %s431, 1
          %s4946 = smul.addr %s4945, 32
          %s4947 = scalar_lea.vmem [#allocation5], %s4946
          %4948 = dma.done %s4944, 512
        $region149: #{tpu_custom_call.1} parent=144 // pred_fallthru
          _
        // Predicated region
        $region150: #{tpu_custom_call.1} parent=144 // pred_check
          %p4949 = pneg %p474
        $region151: #{tpu_custom_call.1} parent=144 // pred_check_branch
          %4951 = sbr.rel (%p4949) target = $region153
        $region152: #{tpu_custom_call.1} parent=144 // pred_region
          %s4952 = sand.u32 %s459, 1
          %s4953 = scalar_lea.sflag [#allocation8], %s4952
          %s4954 = sand.u32 %s459, 1
          %s4955 = smul.addr %s4954, 32
          %s4956 = scalar_lea.vmem [#allocation7], %s4955
          %4957 = dma.done %s4953, 512
        $region153: #{tpu_custom_call.1} parent=144 // pred_fallthru
          _
      $region145: #{tpu_custom_call.1} parent=5 // pred_fallthru
        _
    $region6: #{tpu_custom_call.1} parent=1 // loop_footer
      %s32 = sadd.s32 1, %s28
    $region7: #{tpu_custom_call.1} parent=1 // loop_footer_branch
      %27 = sbr.rel target = $region3
    $region8: #{tpu_custom_call.1} parent=1 // loop_exit
      _
    %4958 = vsyncpa [#allocation6], 1
    %s4959 = scalar_lea.sflag [#allocation6], 1
    %4960 = vsyncpa %s4959, 1
    %4961 = vsyncpa [#allocation8], 1
    %s4962 = scalar_lea.sflag [#allocation8], 1
    %4963 = vsyncpa %s4962, 1

</llo_original>
